<compile_context>
chip_gen: v5e
topology: v5e:2x2
jax: 0.10.0
libtpu: 0.0.40
codegen_flags: <defaults>
</compile_context>

<pallas_src>
import functools

import jax
import jax.numpy as jnp
from jax.experimental import pallas as pl
from jax.experimental.pallas import tpu as pltpu

LEAKY_SLOPE = 0.2
BN_EPS = 1e-5
KW = 4        # kernel size
PADW = 1      # padding
VMEM_LIMIT = 32 * 1024 * 1024   # safe on all generations; raises v5e's 16 MiB default


def _round_up(x, m):
    return (x + m - 1) // m * m


def _pick_tile(total, candidates):
    for c in candidates:
        if total % c == 0:
            return c
    return candidates[-1]


def _conv_tiles(M, K, N):
    """Padded shapes + tile sizes for the im2col matmul."""
    Np = _round_up(N, 128)
    Kp = _round_up(K, 128)
    Mp8 = _round_up(M, 8)
    if Mp8 <= 512:
        # small-M tail layers: one full-height tile, only sublane-pad to 8
        TM, Mp = Mp8, Mp8
    else:
        TM = 512
        Mp = _round_up(M, TM)
    TK = _pick_tile(Kp, (512, 256, 128))
    return Mp, Kp, Np, TM, TK


# --------------------------------------------------------------------------
# Pallas kernels
# --------------------------------------------------------------------------
def _conv_bias_kernel(p_ref, w_ref, b_ref, o_ref, acc_ref, *, tk, apply_leaky):
    """(M-tile, K-tile) matmul step; weight is VMEM-resident, sliced by k.

    Finalize: + bias, optional LeakyReLU, cast to output dtype."""
    k = pl.program_id(1)

    @pl.when(k == 0)
    def _():
        acc_ref[...] = jnp.zeros_like(acc_ref)

    koff = pl.multiple_of(k * tk, tk)
    acc_ref[...] += jnp.dot(p_ref[...], w_ref[pl.ds(koff, tk), :],
                            preferred_element_type=jnp.float32)

    @pl.when(k == pl.num_programs(1) - 1)
    def _():
        acc = acc_ref[...] + b_ref[...]            # (TM, Np) + (1, Np)
        if apply_leaky:
            acc = jnp.where(acc >= 0, acc, LEAKY_SLOPE * acc)
        o_ref[...] = acc.astype(o_ref.dtype)


def _conv_bn_stats_kernel(p_ref, w_ref, o_ref, sum_ref, ssq_ref, acc_ref, *, tk):
    """No-bias conv matmul step with BN sum/sumsq fused into the finalize.

    Per-M-tile partial sum / sumsq rows are computed from the f32 accumulator
    (padded rows are exact zeros, so they don't perturb the statistics) and
    written broadcast over an 8-row block to stay (8,128)-tile friendly."""
    k = pl.program_id(1)

    @pl.when(k == 0)
    def _():
        acc_ref[...] = jnp.zeros_like(acc_ref)

    koff = pl.multiple_of(k * tk, tk)
    acc_ref[...] += jnp.dot(p_ref[...], w_ref[pl.ds(koff, tk), :],
                            preferred_element_type=jnp.float32)

    @pl.when(k == pl.num_programs(1) - 1)
    def _():
        acc = acc_ref[...]
        o_ref[...] = acc.astype(o_ref.dtype)
        rsum = jnp.sum(acc, axis=0, keepdims=True)
        rssq = jnp.sum(acc * acc, axis=0, keepdims=True)
        sum_ref[...] = jnp.broadcast_to(rsum, sum_ref.shape)
        ssq_ref[...] = jnp.broadcast_to(rssq, ssq_ref.shape)


def _bn_apply_kernel(x_ref, scale_ref, shift_ref, o_ref):
    """y = x * scale + shift (scale/shift pre-folded from mean/rstd/gamma/beta),
    then LeakyReLU(0.2), emitted in bf16."""
    y = x_ref[...].astype(jnp.float32) * scale_ref[...] + shift_ref[...]
    o_ref[...] = jnp.where(y >= 0, y, LEAKY_SLOPE * y).astype(o_ref.dtype)


# --------------------------------------------------------------------------
# Wrappers around pallas_call
# --------------------------------------------------------------------------
def conv_bias_leaky(patches, w, b, apply_leaky, out_dtype):
    """patches: (M, K) bf16, w: (K, N) f32, b: (N,) f32.  Returns padded (Mp, Np)."""
    M, K = patches.shape
    N = w.shape[1]
    Mp, Kp, Np, TM, TK = _conv_tiles(M, K, N)

    p_pad = jnp.pad(patches, ((0, Mp - M), (0, Kp - K)))
    w_pad = jnp.pad(w.astype(jnp.bfloat16), ((0, Kp - K), (0, Np - N)))
    b_pad = jnp.pad(b.astype(jnp.float32), (0, Np - N)).reshape(1, Np)

    kernel = functools.partial(_conv_bias_kernel, tk=TK, apply_leaky=apply_leaky)
    out = pl.pallas_call(
        kernel,
        out_shape=jax.ShapeDtypeStruct((Mp, Np), out_dtype),
        grid=(Mp // TM, Kp // TK),
        in_specs=[
            pl.BlockSpec((TM, TK), lambda m, k: (m, k)),
            pl.BlockSpec((Kp, Np), lambda m, k: (0, 0)),   # weight VMEM-resident
            pl.BlockSpec((1, Np), lambda m, k: (0, 0)),    # bias VMEM-resident
        ],
        out_specs=pl.BlockSpec((TM, Np), lambda m, k: (m, 0)),
        scratch_shapes=[pltpu.VMEM((TM, Np), jnp.float32)],
        compiler_params=pltpu.CompilerParams(
            dimension_semantics=("parallel", "arbitrary"),
            vmem_limit_bytes=VMEM_LIMIT),
    )(p_pad, w_pad, b_pad)
    return out


def conv_bn_leaky(patches, w, gamma, beta, m_rows):
    """No-bias conv + BatchNorm2d (training-mode batch stats) + LeakyReLU(0.2).

    Conv pass emits bf16 output plus per-M-tile f32 sum/sumsq partials (fused
    into the matmul finalize); the tiny per-channel mean/rstd finish is plain
    JAX; the normalize+LeakyReLU pass is a parallel tiled Pallas kernel.
    Returns the padded (Mp, Np) bf16 result."""
    M, K = patches.shape
    N = w.shape[1]
    Mp, Kp, Np, TM, TK = _conv_tiles(M, K, N)
    nMt = Mp // TM

    p_pad = jnp.pad(patches, ((0, Mp - M), (0, Kp - K)))
    w_pad = jnp.pad(w.astype(jnp.bfloat16), ((0, Kp - K), (0, Np - N)))

    kernel = functools.partial(_conv_bn_stats_kernel, tk=TK)
    out, psum, pssq = pl.pallas_call(
        kernel,
        out_shape=(jax.ShapeDtypeStruct((Mp, Np), jnp.bfloat16),
                   jax.ShapeDtypeStruct((8 * nMt, Np), jnp.float32),
                   jax.ShapeDtypeStruct((8 * nMt, Np), jnp.float32)),
        grid=(nMt, Kp // TK),
        in_specs=[
            pl.BlockSpec((TM, TK), lambda m, k: (m, k)),
            pl.BlockSpec((Kp, Np), lambda m, k: (0, 0)),   # weight VMEM-resident
        ],
        out_specs=(pl.BlockSpec((TM, Np), lambda m, k: (m, 0)),
                   pl.BlockSpec((8, Np), lambda m, k: (m, 0)),
                   pl.BlockSpec((8, Np), lambda m, k: (m, 0))),
        scratch_shapes=[pltpu.VMEM((TM, Np), jnp.float32)],
        compiler_params=pltpu.CompilerParams(
            dimension_semantics=("parallel", "arbitrary"),
            vmem_limit_bytes=VMEM_LIMIT),
    )(p_pad, w_pad)

    # Tiny per-channel finish (each tile's row is replicated over 8 sublanes).
    inv_m = 1.0 / (8.0 * float(m_rows))
    mean = jnp.sum(psum, axis=0, keepdims=True) * inv_m          # (1, Np)
    ex2 = jnp.sum(pssq, axis=0, keepdims=True) * inv_m
    # clamp to avoid tiny negative variance from E[x^2]-E[x]^2 cancellation
    var = jnp.maximum(ex2 - mean * mean, 0.0)
    rstd = jax.lax.rsqrt(var + BN_EPS)
    g = jnp.pad(gamma.astype(jnp.float32), (0, Np - N)).reshape(1, Np)
    bt = jnp.pad(beta.astype(jnp.float32), (0, Np - N)).reshape(1, Np)
    scale = rstd * g
    shift = bt - mean * scale

    # Parallel, tiled normalize + LeakyReLU.  Padded rows yield `shift` values
    # (wasted but harmless); they are sliced off by the caller.
    TMB = Mp if Mp <= 512 else 512
    y = pl.pallas_call(
        _bn_apply_kernel,
        out_shape=jax.ShapeDtypeStruct((Mp, Np), jnp.bfloat16),
        grid=(Mp // TMB,),
        in_specs=[
            pl.BlockSpec((TMB, Np), lambda i: (i, 0)),
            pl.BlockSpec((1, Np), lambda i: (0, 0)),
            pl.BlockSpec((1, Np), lambda i: (0, 0)),
        ],
        out_specs=pl.BlockSpec((TMB, Np), lambda i: (i, 0)),
        compiler_params=pltpu.CompilerParams(
            dimension_semantics=("parallel",),
            vmem_limit_bytes=VMEM_LIMIT),
    )(out, scale, shift)
    return y


# --------------------------------------------------------------------------
# im2col glue (plain JAX, bf16 end-to-end)
# --------------------------------------------------------------------------
def im2col(x, stride):
    """x: (N, H, W, C) -> (N*Ho*Wo, KW*KW*C), patch index order (kh, kw, cin)."""
    xp = jnp.pad(x, ((0, 0), (PADW, PADW), (PADW, PADW), (0, 0)))
    n, hp, wp, c = xp.shape
    ho = (hp - KW) // stride + 1
    wo = (wp - KW) // stride + 1
    cols = []
    for di in range(KW):
        for dj in range(KW):
            cols.append(xp[:, di:di + stride * ho:stride,
                           dj:dj + stride * wo:stride, :])
    patches = jnp.stack(cols, axis=3).reshape(n, ho, wo, KW * KW * c)
    return patches.reshape(n * ho * wo, KW * KW * c), (n, ho, wo)


# --------------------------------------------------------------------------
# Parameters (deterministic synthetic init; weight stored as (kh, kw, cin, cout))
# --------------------------------------------------------------------------
def init_params(key, in_nc, nf=64, n_layers=3):
    # (cin, cout, stride, has_bias, use_bn, leaky) following patch_GAN.__init__
    cfg = [(in_nc, nf, 2, True, False, True)]
    nf_mult = 1
    for n in range(1, n_layers):
        nf_mult_prev = nf_mult
        nf_mult = min(2 ** n, 8)
        cfg.append((nf * nf_mult_prev, nf * nf_mult, 2, False, True, True))
    nf_mult_prev = nf_mult
    nf_mult = min(2 ** n_layers, 8)
    cfg.append((nf * nf_mult_prev, nf * nf_mult, 1, False, True, True))
    cfg.append((nf * nf_mult, 1, 1, True, False, False))

    params = []
    for (cin, cout, stride, has_bias, use_bn, leaky) in cfg:
        key, wk = jax.random.split(key)
        w = 0.05 * jax.random.normal(wk, (KW, KW, cin, cout), jnp.float32)
        if has_bias:
            key, bk = jax.random.split(key)
            b = 0.05 * jax.random.normal(bk, (cout,), jnp.float32)
        else:
            b = jnp.zeros((cout,), jnp.float32)
        gamma = jnp.ones((cout,), jnp.float32) if use_bn else None
        beta = jnp.zeros((cout,), jnp.float32) if use_bn else None
        params.append(dict(w=w, b=b, gamma=gamma, beta=beta, stride=stride,
                           has_bias=has_bias, use_bn=use_bn, leaky=leaky))
    return params


# --------------------------------------------------------------------------
# Forward (Pallas) and pure-JAX reference
# --------------------------------------------------------------------------
def patch_gan_forward(x_nchw, params):
    x = jnp.transpose(x_nchw, (0, 2, 3, 1)).astype(jnp.bfloat16)  # NCHW -> NHWC
    last = len(params) - 1
    for idx, p in enumerate(params):
        patches, (n, ho, wo) = im2col(x, p["stride"])
        cin = x.shape[-1]
        cout = p["w"].shape[-1]
        w2d = p["w"].reshape(KW * KW * cin, cout)

        if p["use_bn"]:
            out_pad = conv_bn_leaky(patches, w2d, p["gamma"], p["beta"],
                                    m_rows=n * ho * wo)
        else:
            out_dtype = jnp.float32 if idx == last else jnp.bfloat16
            out_pad = conv_bias_leaky(patches, w2d, p["b"], p["leaky"], out_dtype)

        x = out_pad[:n * ho * wo, :cout].reshape(n, ho, wo, cout)
    return jnp.transpose(x, (0, 3, 1, 2))  # NHWC -> NCHW (f32 from last conv)


def reference_forward(x_nchw, params):
    x = jnp.transpose(x_nchw, (0, 2, 3, 1)).astype(jnp.float32)
    for p in params:
        y = jax.lax.conv_general_dilated(
            x, p["w"], window_strides=(p["stride"], p["stride"]),
            padding=((PADW, PADW), (PADW, PADW)),
            dimension_numbers=("NHWC", "HWIO", "NHWC"),
            precision=jax.lax.Precision.HIGHEST)
        if p["has_bias"]:
            y = y + p["b"]
        if p["use_bn"]:
            mean = jnp.mean(y, axis=(0, 1, 2), keepdims=True)
            var = jnp.mean((y - mean) ** 2, axis=(0, 1, 2), keepdims=True)
            y = (y - mean) * jax.lax.rsqrt(var + BN_EPS) * p["gamma"] + p["beta"]
        if p["leaky"]:
            y = jnp.where(y >= 0, y, LEAKY_SLOPE * y)
        x = y
    return jnp.transpose(x, (0, 3, 1, 2))


if __name__ == "__main__":
    key = jax.random.PRNGKey(0)
    key, xk = jax.random.split(key)

    in_nc, nf, n_layers = 4, 8, 3
    # spatial must be >= 24 for n_layers=3 so the stride-1 tail convs keep a
    # non-degenerate output (16x16 would collapse to 0x0); 32x32 -> 2x2 output.
    x = jax.random.normal(xk, (2, in_nc, 32, 32), jnp.float32)  # NCHW input
    params = init_params(key, in_nc, nf=nf, n_layers=n_layers)

    fwd = jax.jit(lambda inp: patch_gan_forward(inp, params))
    out = fwd(x)
    out = jax.block_until_ready(out)

    ref = reference_forward(x, params)
    assert out.shape == (2, 1, 2, 2), out.shape
    assert bool(jnp.all(jnp.isfinite(out)))
    max_err = float(jnp.max(jnp.abs(out.astype(jnp.float32) - ref)))
    # bf16 end-to-end activations vs. f32 HIGHEST reference.
    assert jnp.allclose(out.astype(jnp.float32), ref, rtol=5e-2, atol=2e-2), \
        f"max_err={max_err}"
    print("KERNEL_OK")
</pallas_src>

<mosaic_0001>
module attributes {stable_mosaic.version = 11 : i64} {
  func.func @_conv_bias_kernel(%arg0: i32, %arg1: i32, %arg2: memref<512x128xbf16, #tpu.memory_space<vmem>>, %arg3: memref<128x128xbf16, #tpu.memory_space<vmem>>, %arg4: memref<1x128xf32, #tpu.memory_space<vmem>>, %arg5: memref<512x128xbf16, #tpu.memory_space<vmem>>, %arg6: memref<512x128xf32, #tpu.memory_space<vmem>>) attributes {dimension_semantics = [#tpu.dimension_semantics<parallel>, #tpu.dimension_semantics<arbitrary>], iteration_bounds = array<i64: 1, 1>, scalar_prefetch = 0 : i64, scratch_operands = 1 : i64, tpu.core_type = #tpu.core_type<tc>, window_params = [{transform_indices = @transform_0, window_bounds = array<i64: 512, 128>}, {pipeline_mode = #tpu.pipeline_mode<synchronous>, transform_indices = @transform_1, window_bounds = array<i64: 128, 128>}, {pipeline_mode = #tpu.pipeline_mode<synchronous>, transform_indices = @transform_2, window_bounds = array<i64: 1, 128>}, {transform_indices = @transform_3, window_bounds = array<i64: 512, 128>}]} {
    %c0_i32 = arith.constant 0 : i32
    %0 = arith.cmpi eq, %arg1, %c0_i32 : i32
    %1 = arith.extui %0 : i1 to i32
    %c0_i32_0 = arith.constant 0 : i32
    %2 = arith.cmpi ne, %1, %c0_i32_0 : i32
    scf.if %2 {
      %cst_9 = arith.constant 0.000000e+00 : f32
      %15 = vector.broadcast %cst_9 : f32 to vector<512x128xf32>
      %c0_10 = arith.constant 0 : index
      %c0_11 = arith.constant 0 : index
      %16 = vector.load %arg6[%c0_10, %c0_11] : memref<512x128xf32, #tpu.memory_space<vmem>>, vector<512x128xf32>
      tpu.vector_store %arg6[%c0_10, %c0_11], %15 {strides = array<i32>} : memref<512x128xf32, #tpu.memory_space<vmem>>, vector<512x128xf32>,
    } else {
    }
    %c128_i32 = arith.constant 128 : i32
    %3 = arith.muli %arg1, %c128_i32 : i32
    %4 = tpu.assume_multiple %3, 128 : i32
    %c0 = arith.constant 0 : index
    %c0_1 = arith.constant 0 : index
    %5 = vector.load %arg6[%c0, %c0_1] : memref<512x128xf32, #tpu.memory_space<vmem>>, vector<512x128xf32>
    %c0_2 = arith.constant 0 : index
    %c0_3 = arith.constant 0 : index
    %6 = vector.load %arg2[%c0_2, %c0_3] : memref<512x128xbf16, #tpu.memory_space<vmem>>, vector<512x128xbf16>
    %7 = arith.index_cast %4 : i32 to index
    %c0_4 = arith.constant 0 : index
    %8 = vector.load %arg3[%7, %c0_4] : memref<128x128xbf16, #tpu.memory_space<vmem>>, vector<128x128xbf16>
    %cst = arith.constant dense<0.000000e+00> : vector<512x128xf32>
    %9 = tpu.matmul %6, %8, %cst {dimension_numbers = #tpu.dot_dimension_numbers<[1], [0], [0], [1], [0, 0, 1, 1], [], []>} : vector<512x128xbf16>, vector<128x128xbf16>, vector<512x128xf32> -> vector<512x128xf32>
    %10 = arith.addf %5, %9 : vector<512x128xf32>
    %c0_5 = arith.constant 0 : index
    %c0_6 = arith.constant 0 : index
    %11 = vector.load %arg6[%c0_5, %c0_6] : memref<512x128xf32, #tpu.memory_space<vmem>>, vector<512x128xf32>
    tpu.vector_store %arg6[%c0_5, %c0_6], %10 {strides = array<i32>} : memref<512x128xf32, #tpu.memory_space<vmem>>, vector<512x128xf32>,
    %c0_i32_7 = arith.constant 0 : i32
    %12 = arith.cmpi eq, %arg1, %c0_i32_7 : i32
    %13 = arith.extui %12 : i1 to i32
    %c0_i32_8 = arith.constant 0 : i32
    %14 = arith.cmpi ne, %13, %c0_i32_8 : i32
    scf.if %14 {
      %c0_9 = arith.constant 0 : index
      %c0_10 = arith.constant 0 : index
      %15 = vector.load %arg6[%c0_9, %c0_10] : memref<512x128xf32, #tpu.memory_space<vmem>>, vector<512x128xf32>
      %c0_11 = arith.constant 0 : index
      %c0_12 = arith.constant 0 : index
      %16 = vector.load %arg4[%c0_11, %c0_12] : memref<1x128xf32, #tpu.memory_space<vmem>>, vector<1x128xf32>
      %17 = vector.broadcast %16 : vector<1x128xf32> to vector<512x128xf32>
      %18 = arith.addf %15, %17 : vector<512x128xf32>
      %cst_13 = arith.constant 0.000000e+00 : f32
      %19 = vector.broadcast %cst_13 : f32 to vector<512x128xf32>
      %20 = arith.cmpf oge, %18, %19 : vector<512x128xf32>
      %cst_14 = arith.constant 2.000000e-01 : f32
      %21 = vector.broadcast %cst_14 : f32 to vector<512x128xf32>
      %22 = arith.mulf %21, %18 : vector<512x128xf32>
      %23 = arith.select %20, %18, %22 : vector<512x128xi1>, vector<512x128xf32>
      %24 = arith.truncf %23 : vector<512x128xf32> to vector<512x128xbf16>
      %c0_15 = arith.constant 0 : index
      %c0_16 = arith.constant 0 : index
      %25 = vector.load %arg5[%c0_15, %c0_16] : memref<512x128xbf16, #tpu.memory_space<vmem>>, vector<512x128xbf16>
      tpu.vector_store %arg5[%c0_15, %c0_16], %24 {strides = array<i32>} : memref<512x128xbf16, #tpu.memory_space<vmem>>, vector<512x128xbf16>,
    } else {
    }
    return
  }
  func.func @transform_0(%arg0: i32, %arg1: i32) -> (i32, i32) {
    %c0_i32 = arith.constant 0 : i32
    return %arg0, %arg1 : i32, i32
  }
  func.func @transform_1(%arg0: i32, %arg1: i32) -> (i32, i32) {
    %c0_i32 = arith.constant 0 : i32
    %c0_i32_0 = arith.constant 0 : i32
    %c0_i32_1 = arith.constant 0 : i32
    return %c0_i32, %c0_i32_0 : i32, i32
  }
  func.func @transform_2(%arg0: i32, %arg1: i32) -> (i32, i32) {
    %c0_i32 = arith.constant 0 : i32
    %c0_i32_0 = arith.constant 0 : i32
    %c0_i32_1 = arith.constant 0 : i32
    return %c0_i32, %c0_i32_0 : i32, i32
  }
  func.func @transform_3(%arg0: i32, %arg1: i32) -> (i32, i32) {
    %c0_i32 = arith.constant 0 : i32
    %c0_i32_0 = arith.constant 0 : i32
    return %arg0, %c0_i32 : i32, i32
  }
}

module attributes {stable_mosaic.version = 11 : i64} {
  func.func @_conv_bn_stats_kernel(%arg0: i32, %arg1: i32, %arg2: memref<128x128xbf16, #tpu.memory_space<vmem>>, %arg3: memref<128x128xbf16, #tpu.memory_space<vmem>>, %arg4: memref<128x128xbf16, #tpu.memory_space<vmem>>, %arg5: memref<8x128xf32, #tpu.memory_space<vmem>>, %arg6: memref<8x128xf32, #tpu.memory_space<vmem>>, %arg7: memref<128x128xf32, #tpu.memory_space<vmem>>) attributes {dimension_semantics = [#tpu.dimension_semantics<parallel>, #tpu.dimension_semantics<arbitrary>], iteration_bounds = array<i64: 1, 1>, scalar_prefetch = 0 : i64, scratch_operands = 1 : i64, tpu.core_type = #tpu.core_type<tc>, window_params = [{transform_indices = @transform_0, window_bounds = array<i64: 128, 128>}, {pipeline_mode = #tpu.pipeline_mode<synchronous>, transform_indices = @transform_1, window_bounds = array<i64: 128, 128>}, {transform_indices = @transform_2, window_bounds = array<i64: 128, 128>}, {transform_indices = @transform_3, window_bounds = array<i64: 8, 128>}, {transform_indices = @transform_4, window_bounds = array<i64: 8, 128>}]} {
    %c0_i32 = arith.constant 0 : i32
    %0 = arith.cmpi eq, %arg1, %c0_i32 : i32
    %1 = arith.extui %0 : i1 to i32
    %c0_i32_0 = arith.constant 0 : i32
    %2 = arith.cmpi ne, %1, %c0_i32_0 : i32
    scf.if %2 {
      %cst_9 = arith.constant 0.000000e+00 : f32
      %15 = vector.broadcast %cst_9 : f32 to vector<128x128xf32>
      %c0_10 = arith.constant 0 : index
      %c0_11 = arith.constant 0 : index
      %16 = vector.load %arg7[%c0_10, %c0_11] : memref<128x128xf32, #tpu.memory_space<vmem>>, vector<128x128xf32>
      tpu.vector_store %arg7[%c0_10, %c0_11], %15 {strides = array<i32>} : memref<128x128xf32, #tpu.memory_space<vmem>>, vector<128x128xf32>,
    } else {
    }
    %c128_i32 = arith.constant 128 : i32
    %3 = arith.muli %arg1, %c128_i32 : i32
    %4 = tpu.assume_multiple %3, 128 : i32
    %c0 = arith.constant 0 : index
    %c0_1 = arith.constant 0 : index
    %5 = vector.load %arg7[%c0, %c0_1] : memref<128x128xf32, #tpu.memory_space<vmem>>, vector<128x128xf32>
    %c0_2 = arith.constant 0 : index
    %c0_3 = arith.constant 0 : index
    %6 = vector.load %arg2[%c0_2, %c0_3] : memref<128x128xbf16, #tpu.memory_space<vmem>>, vector<128x128xbf16>
    %7 = arith.index_cast %4 : i32 to index
    %c0_4 = arith.constant 0 : index
    %8 = vector.load %arg3[%7, %c0_4] : memref<128x128xbf16, #tpu.memory_space<vmem>>, vector<128x128xbf16>
    %cst = arith.constant dense<0.000000e+00> : vector<128x128xf32>
    %9 = tpu.matmul %6, %8, %cst {dimension_numbers = #tpu.dot_dimension_numbers<[1], [0], [0], [1], [0, 0, 1, 1], [], []>} : vector<128x128xbf16>, vector<128x128xbf16>, vector<128x128xf32> -> vector<128x128xf32>
    %10 = arith.addf %5, %9 : vector<128x128xf32>
    %c0_5 = arith.constant 0 : index
    %c0_6 = arith.constant 0 : index
    %11 = vector.load %arg7[%c0_5, %c0_6] : memref<128x128xf32, #tpu.memory_space<vmem>>, vector<128x128xf32>
    tpu.vector_store %arg7[%c0_5, %c0_6], %10 {strides = array<i32>} : memref<128x128xf32, #tpu.memory_space<vmem>>, vector<128x128xf32>,
    %c0_i32_7 = arith.constant 0 : i32
    %12 = arith.cmpi eq, %arg1, %c0_i32_7 : i32
    %13 = arith.extui %12 : i1 to i32
    %c0_i32_8 = arith.constant 0 : i32
    %14 = arith.cmpi ne, %13, %c0_i32_8 : i32
    scf.if %14 {
      %c0_9 = arith.constant 0 : index
      %c0_10 = arith.constant 0 : index
      %15 = vector.load %arg7[%c0_9, %c0_10] : memref<128x128xf32, #tpu.memory_space<vmem>>, vector<128x128xf32>
      %16 = arith.truncf %15 : vector<128x128xf32> to vector<128x128xbf16>
      %c0_11 = arith.constant 0 : index
      %c0_12 = arith.constant 0 : index
      %17 = vector.load %arg4[%c0_11, %c0_12] : memref<128x128xbf16, #tpu.memory_space<vmem>>, vector<128x128xbf16>
      tpu.vector_store %arg4[%c0_11, %c0_12], %16 {strides = array<i32>} : memref<128x128xbf16, #tpu.memory_space<vmem>>, vector<128x128xbf16>,
      %cst_13 = arith.constant dense<0.000000e+00> : vector<128xf32>
      %18 = vector.multi_reduction <add>, %15, %cst_13 [0] : vector<128x128xf32> to vector<128xf32>
      %19 = vector.shape_cast %18 : vector<128xf32> to vector<1x128xf32>
      %20 = arith.mulf %15, %15 : vector<128x128xf32>
      %cst_14 = arith.constant dense<0.000000e+00> : vector<128xf32>
      %21 = vector.multi_reduction <add>, %20, %cst_14 [0] : vector<128x128xf32> to vector<128xf32>
      %22 = vector.shape_cast %21 : vector<128xf32> to vector<1x128xf32>
      %23 = vector.shape_cast %19 : vector<1x128xf32> to vector<1x128xf32>
      %24 = vector.broadcast %23 : vector<1x128xf32> to vector<8x128xf32>
      %c0_15 = arith.constant 0 : index
      %c0_16 = arith.constant 0 : index
      %25 = vector.load %arg5[%c0_15, %c0_16] : memref<8x128xf32, #tpu.memory_space<vmem>>, vector<8x128xf32>
      tpu.vector_store %arg5[%c0_15, %c0_16], %24 {strides = array<i32>} : memref<8x128xf32, #tpu.memory_space<vmem>>, vector<8x128xf32>,
      %26 = vector.shape_cast %22 : vector<1x128xf32> to vector<1x128xf32>
      %27 = vector.broadcast %26 : vector<1x128xf32> to vector<8x128xf32>
      %c0_17 = arith.constant 0 : index
      %c0_18 = arith.constant 0 : index
      %28 = vector.load %arg6[%c0_17, %c0_18] : memref<8x128xf32, #tpu.memory_space<vmem>>, vector<8x128xf32>
      tpu.vector_store %arg6[%c0_17, %c0_18], %27 {strides = array<i32>} : memref<8x128xf32, #tpu.memory_space<vmem>>, vector<8x128xf32>,
    } else {
    }
    return
  }
  func.func @transform_0(%arg0: i32, %arg1: i32) -> (i32, i32) {
    %c0_i32 = arith.constant 0 : i32
    return %arg0, %arg1 : i32, i32
  }
  func.func @transform_1(%arg0: i32, %arg1: i32) -> (i32, i32) {
    %c0_i32 = arith.constant 0 : i32
    %c0_i32_0 = arith.constant 0 : i32
    %c0_i32_1 = arith.constant 0 : i32
    return %c0_i32, %c0_i32_0 : i32, i32
  }
  func.func @transform_2(%arg0: i32, %arg1: i32) -> (i32, i32) {
    %c0_i32 = arith.constant 0 : i32
    %c0_i32_0 = arith.constant 0 : i32
    return %arg0, %c0_i32 : i32, i32
  }
  func.func @transform_3(%arg0: i32, %arg1: i32) -> (i32, i32) {
    %c0_i32 = arith.constant 0 : i32
    %c0_i32_0 = arith.constant 0 : i32
    return %arg0, %c0_i32 : i32, i32
  }
  func.func @transform_4(%arg0: i32, %arg1: i32) -> (i32, i32) {
    %c0_i32 = arith.constant 0 : i32
    %c0_i32_0 = arith.constant 0 : i32
    return %arg0, %c0_i32 : i32, i32
  }
}

module attributes {stable_mosaic.version = 11 : i64} {
  func.func @_bn_apply_kernel(%arg0: i32, %arg1: memref<128x128xbf16, #tpu.memory_space<vmem>>, %arg2: memref<1x128xf32, #tpu.memory_space<vmem>>, %arg3: memref<1x128xf32, #tpu.memory_space<vmem>>, %arg4: memref<128x128xbf16, #tpu.memory_space<vmem>>) attributes {dimension_semantics = [#tpu.dimension_semantics<parallel>], iteration_bounds = array<i64: 1>, scalar_prefetch = 0 : i64, scratch_operands = 0 : i64, tpu.core_type = #tpu.core_type<tc>, window_params = [{transform_indices = @transform_0, window_bounds = array<i64: 128, 128>}, {pipeline_mode = #tpu.pipeline_mode<synchronous>, transform_indices = @transform_1, window_bounds = array<i64: 1, 128>}, {pipeline_mode = #tpu.pipeline_mode<synchronous>, transform_indices = @transform_2, window_bounds = array<i64: 1, 128>}, {transform_indices = @transform_3, window_bounds = array<i64: 128, 128>}]} {
    %c0 = arith.constant 0 : index
    %c0_0 = arith.constant 0 : index
    %0 = vector.load %arg1[%c0, %c0_0] : memref<128x128xbf16, #tpu.memory_space<vmem>>, vector<128x128xbf16>
    %1 = arith.extf %0 : vector<128x128xbf16> to vector<128x128xf32>
    %c0_1 = arith.constant 0 : index
    %c0_2 = arith.constant 0 : index
    %2 = vector.load %arg2[%c0_1, %c0_2] : memref<1x128xf32, #tpu.memory_space<vmem>>, vector<1x128xf32>
    %3 = vector.broadcast %2 : vector<1x128xf32> to vector<128x128xf32>
    %4 = arith.mulf %1, %3 : vector<128x128xf32>
    %c0_3 = arith.constant 0 : index
    %c0_4 = arith.constant 0 : index
    %5 = vector.load %arg3[%c0_3, %c0_4] : memref<1x128xf32, #tpu.memory_space<vmem>>, vector<1x128xf32>
    %6 = vector.broadcast %5 : vector<1x128xf32> to vector<128x128xf32>
    %7 = arith.addf %4, %6 : vector<128x128xf32>
    %cst = arith.constant 0.000000e+00 : f32
    %8 = vector.broadcast %cst : f32 to vector<128x128xf32>
    %9 = arith.cmpf oge, %7, %8 : vector<128x128xf32>
    %cst_5 = arith.constant 2.000000e-01 : f32
    %10 = vector.broadcast %cst_5 : f32 to vector<128x128xf32>
    %11 = arith.mulf %10, %7 : vector<128x128xf32>
    %12 = arith.select %9, %7, %11 : vector<128x128xi1>, vector<128x128xf32>
    %13 = arith.truncf %12 : vector<128x128xf32> to vector<128x128xbf16>
    %c0_6 = arith.constant 0 : index
    %c0_7 = arith.constant 0 : index
    %14 = vector.load %arg4[%c0_6, %c0_7] : memref<128x128xbf16, #tpu.memory_space<vmem>>, vector<128x128xbf16>
    tpu.vector_store %arg4[%c0_6, %c0_7], %13 {strides = array<i32>} : memref<128x128xbf16, #tpu.memory_space<vmem>>, vector<128x128xbf16>,
    return
  }
  func.func @transform_0(%arg0: i32) -> (i32, i32) {
    %c0_i32 = arith.constant 0 : i32
    %c0_i32_0 = arith.constant 0 : i32
    return %arg0, %c0_i32 : i32, i32
  }
  func.func @transform_1(%arg0: i32) -> (i32, i32) {
    %c0_i32 = arith.constant 0 : i32
    %c0_i32_0 = arith.constant 0 : i32
    %c0_i32_1 = arith.constant 0 : i32
    return %c0_i32, %c0_i32_0 : i32, i32
  }
  func.func @transform_2(%arg0: i32) -> (i32, i32) {
    %c0_i32 = arith.constant 0 : i32
    %c0_i32_0 = arith.constant 0 : i32
    %c0_i32_1 = arith.constant 0 : i32
    return %c0_i32, %c0_i32_0 : i32, i32
  }
  func.func @transform_3(%arg0: i32) -> (i32, i32) {
    %c0_i32 = arith.constant 0 : i32
    %c0_i32_0 = arith.constant 0 : i32
    return %arg0, %c0_i32 : i32, i32
  }
}

module attributes {stable_mosaic.version = 11 : i64} {
  func.func @_bn_apply_kernel(%arg0: i32, %arg1: memref<32x128xbf16, #tpu.memory_space<vmem>>, %arg2: memref<1x128xf32, #tpu.memory_space<vmem>>, %arg3: memref<1x128xf32, #tpu.memory_space<vmem>>, %arg4: memref<32x128xbf16, #tpu.memory_space<vmem>>) attributes {dimension_semantics = [#tpu.dimension_semantics<parallel>], iteration_bounds = array<i64: 1>, scalar_prefetch = 0 : i64, scratch_operands = 0 : i64, tpu.core_type = #tpu.core_type<tc>, window_params = [{transform_indices = @transform_0, window_bounds = array<i64: 32, 128>}, {pipeline_mode = #tpu.pipeline_mode<synchronous>, transform_indices = @transform_1, window_bounds = array<i64: 1, 128>}, {pipeline_mode = #tpu.pipeline_mode<synchronous>, transform_indices = @transform_2, window_bounds = array<i64: 1, 128>}, {transform_indices = @transform_3, window_bounds = array<i64: 32, 128>}]} {
    %c0 = arith.constant 0 : index
    %c0_0 = arith.constant 0 : index
    %0 = vector.load %arg1[%c0, %c0_0] : memref<32x128xbf16, #tpu.memory_space<vmem>>, vector<32x128xbf16>
    %1 = arith.extf %0 : vector<32x128xbf16> to vector<32x128xf32>
    %c0_1 = arith.constant 0 : index
    %c0_2 = arith.constant 0 : index
    %2 = vector.load %arg2[%c0_1, %c0_2] : memref<1x128xf32, #tpu.memory_space<vmem>>, vector<1x128xf32>
    %3 = vector.broadcast %2 : vector<1x128xf32> to vector<32x128xf32>
    %4 = arith.mulf %1, %3 : vector<32x128xf32>
    %c0_3 = arith.constant 0 : index
    %c0_4 = arith.constant 0 : index
    %5 = vector.load %arg3[%c0_3, %c0_4] : memref<1x128xf32, #tpu.memory_space<vmem>>, vector<1x128xf32>
    %6 = vector.broadcast %5 : vector<1x128xf32> to vector<32x128xf32>
    %7 = arith.addf %4, %6 : vector<32x128xf32>
    %cst = arith.constant 0.000000e+00 : f32
    %8 = vector.broadcast %cst : f32 to vector<32x128xf32>
    %9 = arith.cmpf oge, %7, %8 : vector<32x128xf32>
    %cst_5 = arith.constant 2.000000e-01 : f32
    %10 = vector.broadcast %cst_5 : f32 to vector<32x128xf32>
    %11 = arith.mulf %10, %7 : vector<32x128xf32>
    %12 = arith.select %9, %7, %11 : vector<32x128xi1>, vector<32x128xf32>
    %13 = arith.truncf %12 : vector<32x128xf32> to vector<32x128xbf16>
    %c0_6 = arith.constant 0 : index
    %c0_7 = arith.constant 0 : index
    %14 = vector.load %arg4[%c0_6, %c0_7] : memref<32x128xbf16, #tpu.memory_space<vmem>>, vector<32x128xbf16>
    tpu.vector_store %arg4[%c0_6, %c0_7], %13 {strides = array<i32>} : memref<32x128xbf16, #tpu.memory_space<vmem>>, vector<32x128xbf16>,
    return
  }
  func.func @transform_0(%arg0: i32) -> (i32, i32) {
    %c0_i32 = arith.constant 0 : i32
    %c0_i32_0 = arith.constant 0 : i32
    return %arg0, %c0_i32 : i32, i32
  }
  func.func @transform_1(%arg0: i32) -> (i32, i32) {
    %c0_i32 = arith.constant 0 : i32
    %c0_i32_0 = arith.constant 0 : i32
    %c0_i32_1 = arith.constant 0 : i32
    return %c0_i32, %c0_i32_0 : i32, i32
  }
  func.func @transform_2(%arg0: i32) -> (i32, i32) {
    %c0_i32 = arith.constant 0 : i32
    %c0_i32_0 = arith.constant 0 : i32
    %c0_i32_1 = arith.constant 0 : i32
    return %c0_i32, %c0_i32_0 : i32, i32
  }
  func.func @transform_3(%arg0: i32) -> (i32, i32) {
    %c0_i32 = arith.constant 0 : i32
    %c0_i32_0 = arith.constant 0 : i32
    return %arg0, %c0_i32 : i32, i32
  }
}

module attributes {stable_mosaic.version = 11 : i64} {
  func.func @_conv_bn_stats_kernel(%arg0: i32, %arg1: i32, %arg2: memref<32x256xbf16, #tpu.memory_space<vmem>>, %arg3: memref<256x128xbf16, #tpu.memory_space<vmem>>, %arg4: memref<32x128xbf16, #tpu.memory_space<vmem>>, %arg5: memref<8x128xf32, #tpu.memory_space<vmem>>, %arg6: memref<8x128xf32, #tpu.memory_space<vmem>>, %arg7: memref<32x128xf32, #tpu.memory_space<vmem>>) attributes {dimension_semantics = [#tpu.dimension_semantics<parallel>, #tpu.dimension_semantics<arbitrary>], iteration_bounds = array<i64: 1, 1>, scalar_prefetch = 0 : i64, scratch_operands = 1 : i64, tpu.core_type = #tpu.core_type<tc>, window_params = [{transform_indices = @transform_0, window_bounds = array<i64: 32, 256>}, {pipeline_mode = #tpu.pipeline_mode<synchronous>, transform_indices = @transform_1, window_bounds = array<i64: 256, 128>}, {transform_indices = @transform_2, window_bounds = array<i64: 32, 128>}, {transform_indices = @transform_3, window_bounds = array<i64: 8, 128>}, {transform_indices = @transform_4, window_bounds = array<i64: 8, 128>}]} {
    %c0_i32 = arith.constant 0 : i32
    %0 = arith.cmpi eq, %arg1, %c0_i32 : i32
    %1 = arith.extui %0 : i1 to i32
    %c0_i32_0 = arith.constant 0 : i32
    %2 = arith.cmpi ne, %1, %c0_i32_0 : i32
    scf.if %2 {
      %cst_9 = arith.constant 0.000000e+00 : f32
      %15 = vector.broadcast %cst_9 : f32 to vector<32x128xf32>
      %c0_10 = arith.constant 0 : index
      %c0_11 = arith.constant 0 : index
      %16 = vector.load %arg7[%c0_10, %c0_11] : memref<32x128xf32, #tpu.memory_space<vmem>>, vector<32x128xf32>
      tpu.vector_store %arg7[%c0_10, %c0_11], %15 {strides = array<i32>} : memref<32x128xf32, #tpu.memory_space<vmem>>, vector<32x128xf32>,
    } else {
    }
    %c256_i32 = arith.constant 256 : i32
    %3 = arith.muli %arg1, %c256_i32 : i32
    %4 = tpu.assume_multiple %3, 256 : i32
    %c0 = arith.constant 0 : index
    %c0_1 = arith.constant 0 : index
    %5 = vector.load %arg7[%c0, %c0_1] : memref<32x128xf32, #tpu.memory_space<vmem>>, vector<32x128xf32>
    %c0_2 = arith.constant 0 : index
    %c0_3 = arith.constant 0 : index
    %6 = vector.load %arg2[%c0_2, %c0_3] : memref<32x256xbf16, #tpu.memory_space<vmem>>, vector<32x256xbf16>
    %7 = arith.index_cast %4 : i32 to index
    %c0_4 = arith.constant 0 : index
    %8 = vector.load %arg3[%7, %c0_4] : memref<256x128xbf16, #tpu.memory_space<vmem>>, vector<256x128xbf16>
    %cst = arith.constant dense<0.000000e+00> : vector<32x128xf32>
    %9 = tpu.matmul %6, %8, %cst {dimension_numbers = #tpu.dot_dimension_numbers<[1], [0], [0], [1], [0, 0, 1, 1], [], []>} : vector<32x256xbf16>, vector<256x128xbf16>, vector<32x128xf32> -> vector<32x128xf32>
    %10 = arith.addf %5, %9 : vector<32x128xf32>
    %c0_5 = arith.constant 0 : index
    %c0_6 = arith.constant 0 : index
    %11 = vector.load %arg7[%c0_5, %c0_6] : memref<32x128xf32, #tpu.memory_space<vmem>>, vector<32x128xf32>
    tpu.vector_store %arg7[%c0_5, %c0_6], %10 {strides = array<i32>} : memref<32x128xf32, #tpu.memory_space<vmem>>, vector<32x128xf32>,
    %c0_i32_7 = arith.constant 0 : i32
    %12 = arith.cmpi eq, %arg1, %c0_i32_7 : i32
    %13 = arith.extui %12 : i1 to i32
    %c0_i32_8 = arith.constant 0 : i32
    %14 = arith.cmpi ne, %13, %c0_i32_8 : i32
    scf.if %14 {
      %c0_9 = arith.constant 0 : index
      %c0_10 = arith.constant 0 : index
      %15 = vector.load %arg7[%c0_9, %c0_10] : memref<32x128xf32, #tpu.memory_space<vmem>>, vector<32x128xf32>
      %16 = arith.truncf %15 : vector<32x128xf32> to vector<32x128xbf16>
      %c0_11 = arith.constant 0 : index
      %c0_12 = arith.constant 0 : index
      %17 = vector.load %arg4[%c0_11, %c0_12] : memref<32x128xbf16, #tpu.memory_space<vmem>>, vector<32x128xbf16>
      tpu.vector_store %arg4[%c0_11, %c0_12], %16 {strides = array<i32>} : memref<32x128xbf16, #tpu.memory_space<vmem>>, vector<32x128xbf16>,
      %cst_13 = arith.constant dense<0.000000e+00> : vector<128xf32>
      %18 = vector.multi_reduction <add>, %15, %cst_13 [0] : vector<32x128xf32> to vector<128xf32>
      %19 = vector.shape_cast %18 : vector<128xf32> to vector<1x128xf32>
      %20 = arith.mulf %15, %15 : vector<32x128xf32>
      %cst_14 = arith.constant dense<0.000000e+00> : vector<128xf32>
      %21 = vector.multi_reduction <add>, %20, %cst_14 [0] : vector<32x128xf32> to vector<128xf32>
      %22 = vector.shape_cast %21 : vector<128xf32> to vector<1x128xf32>
      %23 = vector.shape_cast %19 : vector<1x128xf32> to vector<1x128xf32>
      %24 = vector.broadcast %23 : vector<1x128xf32> to vector<8x128xf32>
      %c0_15 = arith.constant 0 : index
      %c0_16 = arith.constant 0 : index
      %25 = vector.load %arg5[%c0_15, %c0_16] : memref<8x128xf32, #tpu.memory_space<vmem>>, vector<8x128xf32>
      tpu.vector_store %arg5[%c0_15, %c0_16], %24 {strides = array<i32>} : memref<8x128xf32, #tpu.memory_space<vmem>>, vector<8x128xf32>,
      %26 = vector.shape_cast %22 : vector<1x128xf32> to vector<1x128xf32>
      %27 = vector.broadcast %26 : vector<1x128xf32> to vector<8x128xf32>
      %c0_17 = arith.constant 0 : index
      %c0_18 = arith.constant 0 : index
      %28 = vector.load %arg6[%c0_17, %c0_18] : memref<8x128xf32, #tpu.memory_space<vmem>>, vector<8x128xf32>
      tpu.vector_store %arg6[%c0_17, %c0_18], %27 {strides = array<i32>} : memref<8x128xf32, #tpu.memory_space<vmem>>, vector<8x128xf32>,
    } else {
    }
    return
  }
  func.func @transform_0(%arg0: i32, %arg1: i32) -> (i32, i32) {
    %c0_i32 = arith.constant 0 : i32
    return %arg0, %arg1 : i32, i32
  }
  func.func @transform_1(%arg0: i32, %arg1: i32) -> (i32, i32) {
    %c0_i32 = arith.constant 0 : i32
    %c0_i32_0 = arith.constant 0 : i32
    %c0_i32_1 = arith.constant 0 : i32
    return %c0_i32, %c0_i32_0 : i32, i32
  }
  func.func @transform_2(%arg0: i32, %arg1: i32) -> (i32, i32) {
    %c0_i32 = arith.constant 0 : i32
    %c0_i32_0 = arith.constant 0 : i32
    return %arg0, %c0_i32 : i32, i32
  }
  func.func @transform_3(%arg0: i32, %arg1: i32) -> (i32, i32) {
    %c0_i32 = arith.constant 0 : i32
    %c0_i32_0 = arith.constant 0 : i32
    return %arg0, %c0_i32 : i32, i32
  }
  func.func @transform_4(%arg0: i32, %arg1: i32) -> (i32, i32) {
    %c0_i32 = arith.constant 0 : i32
    %c0_i32_0 = arith.constant 0 : i32
    return %arg0, %c0_i32 : i32, i32
  }
}

module attributes {stable_mosaic.version = 11 : i64} {
  func.func @_conv_bn_stats_kernel(%arg0: i32, %arg1: i32, %arg2: memref<24x512xbf16, #tpu.memory_space<vmem>>, %arg3: memref<512x128xbf16, #tpu.memory_space<vmem>>, %arg4: memref<24x128xbf16, #tpu.memory_space<vmem>>, %arg5: memref<8x128xf32, #tpu.memory_space<vmem>>, %arg6: memref<8x128xf32, #tpu.memory_space<vmem>>, %arg7: memref<24x128xf32, #tpu.memory_space<vmem>>) attributes {dimension_semantics = [#tpu.dimension_semantics<parallel>, #tpu.dimension_semantics<arbitrary>], iteration_bounds = array<i64: 1, 1>, scalar_prefetch = 0 : i64, scratch_operands = 1 : i64, tpu.core_type = #tpu.core_type<tc>, window_params = [{transform_indices = @transform_0, window_bounds = array<i64: 24, 512>}, {pipeline_mode = #tpu.pipeline_mode<synchronous>, transform_indices = @transform_1, window_bounds = array<i64: 512, 128>}, {transform_indices = @transform_2, window_bounds = array<i64: 24, 128>}, {transform_indices = @transform_3, window_bounds = array<i64: 8, 128>}, {transform_indices = @transform_4, window_bounds = array<i64: 8, 128>}]} {
    %c0_i32 = arith.constant 0 : i32
    %0 = arith.cmpi eq, %arg1, %c0_i32 : i32
    %1 = arith.extui %0 : i1 to i32
    %c0_i32_0 = arith.constant 0 : i32
    %2 = arith.cmpi ne, %1, %c0_i32_0 : i32
    scf.if %2 {
      %cst_9 = arith.constant 0.000000e+00 : f32
      %15 = vector.broadcast %cst_9 : f32 to vector<24x128xf32>
      %c0_10 = arith.constant 0 : index
      %c0_11 = arith.constant 0 : index
      %16 = vector.load %arg7[%c0_10, %c0_11] : memref<24x128xf32, #tpu.memory_space<vmem>>, vector<24x128xf32>
      tpu.vector_store %arg7[%c0_10, %c0_11], %15 {strides = array<i32>} : memref<24x128xf32, #tpu.memory_space<vmem>>, vector<24x128xf32>,
    } else {
    }
    %c512_i32 = arith.constant 512 : i32
    %3 = arith.muli %arg1, %c512_i32 : i32
    %4 = tpu.assume_multiple %3, 512 : i32
    %c0 = arith.constant 0 : index
    %c0_1 = arith.constant 0 : index
    %5 = vector.load %arg7[%c0, %c0_1] : memref<24x128xf32, #tpu.memory_space<vmem>>, vector<24x128xf32>
    %c0_2 = arith.constant 0 : index
    %c0_3 = arith.constant 0 : index
    %6 = vector.load %arg2[%c0_2, %c0_3] : memref<24x512xbf16, #tpu.memory_space<vmem>>, vector<24x512xbf16>
    %7 = arith.index_cast %4 : i32 to index
    %c0_4 = arith.constant 0 : index
    %8 = vector.load %arg3[%7, %c0_4] : memref<512x128xbf16, #tpu.memory_space<vmem>>, vector<512x128xbf16>
    %cst = arith.constant dense<0.000000e+00> : vector<24x128xf32>
    %9 = tpu.matmul %6, %8, %cst {dimension_numbers = #tpu.dot_dimension_numbers<[1], [0], [0], [1], [0, 0, 1, 1], [], []>} : vector<24x512xbf16>, vector<512x128xbf16>, vector<24x128xf32> -> vector<24x128xf32>
    %10 = arith.addf %5, %9 : vector<24x128xf32>
    %c0_5 = arith.constant 0 : index
    %c0_6 = arith.constant 0 : index
    %11 = vector.load %arg7[%c0_5, %c0_6] : memref<24x128xf32, #tpu.memory_space<vmem>>, vector<24x128xf32>
    tpu.vector_store %arg7[%c0_5, %c0_6], %10 {strides = array<i32>} : memref<24x128xf32, #tpu.memory_space<vmem>>, vector<24x128xf32>,
    %c0_i32_7 = arith.constant 0 : i32
    %12 = arith.cmpi eq, %arg1, %c0_i32_7 : i32
    %13 = arith.extui %12 : i1 to i32
    %c0_i32_8 = arith.constant 0 : i32
    %14 = arith.cmpi ne, %13, %c0_i32_8 : i32
    scf.if %14 {
      %c0_9 = arith.constant 0 : index
      %c0_10 = arith.constant 0 : index
      %15 = vector.load %arg7[%c0_9, %c0_10] : memref<24x128xf32, #tpu.memory_space<vmem>>, vector<24x128xf32>
      %16 = arith.truncf %15 : vector<24x128xf32> to vector<24x128xbf16>
      %c0_11 = arith.constant 0 : index
      %c0_12 = arith.constant 0 : index
      %17 = vector.load %arg4[%c0_11, %c0_12] : memref<24x128xbf16, #tpu.memory_space<vmem>>, vector<24x128xbf16>
      tpu.vector_store %arg4[%c0_11, %c0_12], %16 {strides = array<i32>} : memref<24x128xbf16, #tpu.memory_space<vmem>>, vector<24x128xbf16>,
      %cst_13 = arith.constant dense<0.000000e+00> : vector<128xf32>
      %18 = vector.multi_reduction <add>, %15, %cst_13 [0] : vector<24x128xf32> to vector<128xf32>
      %19 = vector.shape_cast %18 : vector<128xf32> to vector<1x128xf32>
      %20 = arith.mulf %15, %15 : vector<24x128xf32>
      %cst_14 = arith.constant dense<0.000000e+00> : vector<128xf32>
      %21 = vector.multi_reduction <add>, %20, %cst_14 [0] : vector<24x128xf32> to vector<128xf32>
      %22 = vector.shape_cast %21 : vector<128xf32> to vector<1x128xf32>
      %23 = vector.shape_cast %19 : vector<1x128xf32> to vector<1x128xf32>
      %24 = vector.broadcast %23 : vector<1x128xf32> to vector<8x128xf32>
      %c0_15 = arith.constant 0 : index
      %c0_16 = arith.constant 0 : index
      %25 = vector.load %arg5[%c0_15, %c0_16] : memref<8x128xf32, #tpu.memory_space<vmem>>, vector<8x128xf32>
      tpu.vector_store %arg5[%c0_15, %c0_16], %24 {strides = array<i32>} : memref<8x128xf32, #tpu.memory_space<vmem>>, vector<8x128xf32>,
      %26 = vector.shape_cast %22 : vector<1x128xf32> to vector<1x128xf32>
      %27 = vector.broadcast %26 : vector<1x128xf32> to vector<8x128xf32>
      %c0_17 = arith.constant 0 : index
      %c0_18 = arith.constant 0 : index
      %28 = vector.load %arg6[%c0_17, %c0_18] : memref<8x128xf32, #tpu.memory_space<vmem>>, vector<8x128xf32>
      tpu.vector_store %arg6[%c0_17, %c0_18], %27 {strides = array<i32>} : memref<8x128xf32, #tpu.memory_space<vmem>>, vector<8x128xf32>,
    } else {
    }
    return
  }
  func.func @transform_0(%arg0: i32, %arg1: i32) -> (i32, i32) {
    %c0_i32 = arith.constant 0 : i32
    return %arg0, %arg1 : i32, i32
  }
  func.func @transform_1(%arg0: i32, %arg1: i32) -> (i32, i32) {
    %c0_i32 = arith.constant 0 : i32
    %c0_i32_0 = arith.constant 0 : i32
    %c0_i32_1 = arith.constant 0 : i32
    return %c0_i32, %c0_i32_0 : i32, i32
  }
  func.func @transform_2(%arg0: i32, %arg1: i32) -> (i32, i32) {
    %c0_i32 = arith.constant 0 : i32
    %c0_i32_0 = arith.constant 0 : i32
    return %arg0, %c0_i32 : i32, i32
  }
  func.func @transform_3(%arg0: i32, %arg1: i32) -> (i32, i32) {
    %c0_i32 = arith.constant 0 : i32
    %c0_i32_0 = arith.constant 0 : i32
    return %arg0, %c0_i32 : i32, i32
  }
  func.func @transform_4(%arg0: i32, %arg1: i32) -> (i32, i32) {
    %c0_i32 = arith.constant 0 : i32
    %c0_i32_0 = arith.constant 0 : i32
    return %arg0, %c0_i32 : i32, i32
  }
}

module attributes {stable_mosaic.version = 11 : i64} {
  func.func @_bn_apply_kernel(%arg0: i32, %arg1: memref<24x128xbf16, #tpu.memory_space<vmem>>, %arg2: memref<1x128xf32, #tpu.memory_space<vmem>>, %arg3: memref<1x128xf32, #tpu.memory_space<vmem>>, %arg4: memref<24x128xbf16, #tpu.memory_space<vmem>>) attributes {dimension_semantics = [#tpu.dimension_semantics<parallel>], iteration_bounds = array<i64: 1>, scalar_prefetch = 0 : i64, scratch_operands = 0 : i64, tpu.core_type = #tpu.core_type<tc>, window_params = [{transform_indices = @transform_0, window_bounds = array<i64: 24, 128>}, {pipeline_mode = #tpu.pipeline_mode<synchronous>, transform_indices = @transform_1, window_bounds = array<i64: 1, 128>}, {pipeline_mode = #tpu.pipeline_mode<synchronous>, transform_indices = @transform_2, window_bounds = array<i64: 1, 128>}, {transform_indices = @transform_3, window_bounds = array<i64: 24, 128>}]} {
    %c0 = arith.constant 0 : index
    %c0_0 = arith.constant 0 : index
    %0 = vector.load %arg1[%c0, %c0_0] : memref<24x128xbf16, #tpu.memory_space<vmem>>, vector<24x128xbf16>
    %1 = arith.extf %0 : vector<24x128xbf16> to vector<24x128xf32>
    %c0_1 = arith.constant 0 : index
    %c0_2 = arith.constant 0 : index
    %2 = vector.load %arg2[%c0_1, %c0_2] : memref<1x128xf32, #tpu.memory_space<vmem>>, vector<1x128xf32>
    %3 = vector.broadcast %2 : vector<1x128xf32> to vector<24x128xf32>
    %4 = arith.mulf %1, %3 : vector<24x128xf32>
    %c0_3 = arith.constant 0 : index
    %c0_4 = arith.constant 0 : index
    %5 = vector.load %arg3[%c0_3, %c0_4] : memref<1x128xf32, #tpu.memory_space<vmem>>, vector<1x128xf32>
    %6 = vector.broadcast %5 : vector<1x128xf32> to vector<24x128xf32>
    %7 = arith.addf %4, %6 : vector<24x128xf32>
    %cst = arith.constant 0.000000e+00 : f32
    %8 = vector.broadcast %cst : f32 to vector<24x128xf32>
    %9 = arith.cmpf oge, %7, %8 : vector<24x128xf32>
    %cst_5 = arith.constant 2.000000e-01 : f32
    %10 = vector.broadcast %cst_5 : f32 to vector<24x128xf32>
    %11 = arith.mulf %10, %7 : vector<24x128xf32>
    %12 = arith.select %9, %7, %11 : vector<24x128xi1>, vector<24x128xf32>
    %13 = arith.truncf %12 : vector<24x128xf32> to vector<24x128xbf16>
    %c0_6 = arith.constant 0 : index
    %c0_7 = arith.constant 0 : index
    %14 = vector.load %arg4[%c0_6, %c0_7] : memref<24x128xbf16, #tpu.memory_space<vmem>>, vector<24x128xbf16>
    tpu.vector_store %arg4[%c0_6, %c0_7], %13 {strides = array<i32>} : memref<24x128xbf16, #tpu.memory_space<vmem>>, vector<24x128xbf16>,
    return
  }
  func.func @transform_0(%arg0: i32) -> (i32, i32) {
    %c0_i32 = arith.constant 0 : i32
    %c0_i32_0 = arith.constant 0 : i32
    return %arg0, %c0_i32 : i32, i32
  }
  func.func @transform_1(%arg0: i32) -> (i32, i32) {
    %c0_i32 = arith.constant 0 : i32
    %c0_i32_0 = arith.constant 0 : i32
    %c0_i32_1 = arith.constant 0 : i32
    return %c0_i32, %c0_i32_0 : i32, i32
  }
  func.func @transform_2(%arg0: i32) -> (i32, i32) {
    %c0_i32 = arith.constant 0 : i32
    %c0_i32_0 = arith.constant 0 : i32
    %c0_i32_1 = arith.constant 0 : i32
    return %c0_i32, %c0_i32_0 : i32, i32
  }
  func.func @transform_3(%arg0: i32) -> (i32, i32) {
    %c0_i32 = arith.constant 0 : i32
    %c0_i32_0 = arith.constant 0 : i32
    return %arg0, %c0_i32 : i32, i32
  }
}

module attributes {stable_mosaic.version = 11 : i64} {
  func.func @_conv_bias_kernel(%arg0: i32, %arg1: i32, %arg2: memref<8x512xbf16, #tpu.memory_space<vmem>>, %arg3: memref<1024x128xbf16, #tpu.memory_space<vmem>>, %arg4: memref<1x128xf32, #tpu.memory_space<vmem>>, %arg5: memref<8x128xf32, #tpu.memory_space<vmem>>, %arg6: memref<8x128xf32, #tpu.memory_space<vmem>>) attributes {dimension_semantics = [#tpu.dimension_semantics<parallel>, #tpu.dimension_semantics<arbitrary>], iteration_bounds = array<i64: 1, 2>, scalar_prefetch = 0 : i64, scratch_operands = 1 : i64, tpu.core_type = #tpu.core_type<tc>, window_params = [{transform_indices = @transform_0, window_bounds = array<i64: 8, 512>}, {pipeline_mode = #tpu.pipeline_mode<synchronous>, transform_indices = @transform_1, window_bounds = array<i64: 1024, 128>}, {pipeline_mode = #tpu.pipeline_mode<synchronous>, transform_indices = @transform_2, window_bounds = array<i64: 1, 128>}, {transform_indices = @transform_3, window_bounds = array<i64: 8, 128>}]} {
    %c0_i32 = arith.constant 0 : i32
    %0 = arith.cmpi eq, %arg1, %c0_i32 : i32
    %1 = arith.extui %0 : i1 to i32
    %c0_i32_0 = arith.constant 0 : i32
    %2 = arith.cmpi ne, %1, %c0_i32_0 : i32
    scf.if %2 {
      %cst_8 = arith.constant 0.000000e+00 : f32
      %15 = vector.broadcast %cst_8 : f32 to vector<8x128xf32>
      %c0_9 = arith.constant 0 : index
      %c0_10 = arith.constant 0 : index
      %16 = vector.load %arg6[%c0_9, %c0_10] : memref<8x128xf32, #tpu.memory_space<vmem>>, vector<8x128xf32>
      tpu.vector_store %arg6[%c0_9, %c0_10], %15 {strides = array<i32>} : memref<8x128xf32, #tpu.memory_space<vmem>>, vector<8x128xf32>,
    } else {
    }
    %c512_i32 = arith.constant 512 : i32
    %3 = arith.muli %arg1, %c512_i32 : i32
    %4 = tpu.assume_multiple %3, 512 : i32
    %c0 = arith.constant 0 : index
    %c0_1 = arith.constant 0 : index
    %5 = vector.load %arg6[%c0, %c0_1] : memref<8x128xf32, #tpu.memory_space<vmem>>, vector<8x128xf32>
    %c0_2 = arith.constant 0 : index
    %c0_3 = arith.constant 0 : index
    %6 = vector.load %arg2[%c0_2, %c0_3] : memref<8x512xbf16, #tpu.memory_space<vmem>>, vector<8x512xbf16>
    %7 = arith.index_cast %4 : i32 to index
    %c0_4 = arith.constant 0 : index
    %8 = vector.load %arg3[%7, %c0_4] : memref<1024x128xbf16, #tpu.memory_space<vmem>>, vector<512x128xbf16>
    %cst = arith.constant dense<0.000000e+00> : vector<8x128xf32>
    %9 = tpu.matmul %6, %8, %cst {dimension_numbers = #tpu.dot_dimension_numbers<[1], [0], [0], [1], [0, 0, 1, 1], [], []>} : vector<8x512xbf16>, vector<512x128xbf16>, vector<8x128xf32> -> vector<8x128xf32>
    %10 = arith.addf %5, %9 : vector<8x128xf32>
    %c0_5 = arith.constant 0 : index
    %c0_6 = arith.constant 0 : index
    %11 = vector.load %arg6[%c0_5, %c0_6] : memref<8x128xf32, #tpu.memory_space<vmem>>, vector<8x128xf32>
    tpu.vector_store %arg6[%c0_5, %c0_6], %10 {strides = array<i32>} : memref<8x128xf32, #tpu.memory_space<vmem>>, vector<8x128xf32>,
    %c1_i32 = arith.constant 1 : i32
    %12 = arith.cmpi eq, %arg1, %c1_i32 : i32
    %13 = arith.extui %12 : i1 to i32
    %c0_i32_7 = arith.constant 0 : i32
    %14 = arith.cmpi ne, %13, %c0_i32_7 : i32
    scf.if %14 {
      %c0_8 = arith.constant 0 : index
      %c0_9 = arith.constant 0 : index
      %15 = vector.load %arg6[%c0_8, %c0_9] : memref<8x128xf32, #tpu.memory_space<vmem>>, vector<8x128xf32>
      %c0_10 = arith.constant 0 : index
      %c0_11 = arith.constant 0 : index
      %16 = vector.load %arg4[%c0_10, %c0_11] : memref<1x128xf32, #tpu.memory_space<vmem>>, vector<1x128xf32>
      %17 = vector.broadcast %16 : vector<1x128xf32> to vector<8x128xf32>
      %18 = arith.addf %15, %17 : vector<8x128xf32>
      %c0_12 = arith.constant 0 : index
      %c0_13 = arith.constant 0 : index
      %19 = vector.load %arg5[%c0_12, %c0_13] : memref<8x128xf32, #tpu.memory_space<vmem>>, vector<8x128xf32>
      tpu.vector_store %arg5[%c0_12, %c0_13], %18 {strides = array<i32>} : memref<8x128xf32, #tpu.memory_space<vmem>>, vector<8x128xf32>,
    } else {
    }
    return
  }
  func.func @transform_0(%arg0: i32, %arg1: i32) -> (i32, i32) {
    %c0_i32 = arith.constant 0 : i32
    return %arg0, %arg1 : i32, i32
  }
  func.func @transform_1(%arg0: i32, %arg1: i32) -> (i32, i32) {
    %c0_i32 = arith.constant 0 : i32
    %c0_i32_0 = arith.constant 0 : i32
    %c0_i32_1 = arith.constant 0 : i32
    return %c0_i32, %c0_i32_0 : i32, i32
  }
  func.func @transform_2(%arg0: i32, %arg1: i32) -> (i32, i32) {
    %c0_i32 = arith.constant 0 : i32
    %c0_i32_0 = arith.constant 0 : i32
    %c0_i32_1 = arith.constant 0 : i32
    return %c0_i32, %c0_i32_0 : i32, i32
  }
  func.func @transform_3(%arg0: i32, %arg1: i32) -> (i32, i32) {
    %c0_i32 = arith.constant 0 : i32
    %c0_i32_0 = arith.constant 0 : i32
    return %arg0, %c0_i32 : i32, i32
  }
}

</mosaic_0001>

<llo_original>
// kernel: _lambda_.8
$region0: #{_lambda_.8}
  #allocation0 [shape = 'u32[]', space=smem, size = 0x4, offset = 0x4, fixed_abs, tag = 'smem constant byte address 0x4 - core index']
  #allocation1 [shape = 'u32[72,128]{1,0:T(1,128)}', space=vmem, size = 0x9000, scoped, tag = 'internal scratch']
  #allocation2 [shape = 'f32[512,128]{1,0:T(8,128)}', space=vmem, size = 0x40000, scoped, tag = 'scratch operand']
  %s0 = inlined_call_operand.vmem [shape: bf16[512,128], index: 0, kind: input, shape index: {}]
  %s1 = inlined_call_operand.vmem [shape: bf16[128,128], index: 1, kind: input, shape index: {}]
  %s2 = inlined_call_operand.vmem [shape: f32[1,128], index: 2, kind: input, shape index: {}]
  %s3 = inlined_call_operand.vmem [shape: bf16[512,128], index: 3, kind: output, shape index: {}]
  %s4 = sld [smem:[#allocation0]]
  $region30: #{_lambda_.8} parent=0
    _
  %s6 = ssub.s32 1, %s4
  %s7 = scalar_select 0, %s6, %s4
  // Predicated region
  $region2: #{_lambda_.8} parent=0 // pred_check
    _
  $region3: #{_lambda_.8} parent=0 // pred_check_branch
    %9 = sbr.rel (0) target = $region5
  $region4: #{_lambda_.8} parent=0 // pred_region
    _
  $region5: #{_lambda_.8} parent=0 // pred_fallthru
    _
  // Predicated region
  $region6: #{_lambda_.8} parent=0 // pred_check
    _
  $region7: #{_lambda_.8} parent=0 // pred_check_branch
    %11 = sbr.rel (0) target = $region9
  $region8: #{_lambda_.8} parent=0 // pred_region
    _
  $region9: #{_lambda_.8} parent=0 // pred_fallthru
    _
  // Predicated region
  $region10: #{_lambda_.8} parent=0 // pred_check
    _
  $region11: #{_lambda_.8} parent=0 // pred_check_branch
    %13 = sbr.rel (0) target = $region13
  $region12: #{_lambda_.8} parent=0 // pred_region
    _
  $region13: #{_lambda_.8} parent=0 // pred_fallthru
    _
  %p14 = scmp.eq.s32.totalorder 0, 0
  // Predicated region
  $region14: #{_lambda_.8} parent=0 // pred_check
    %p15 = pneg %p14
  $region15: #{_lambda_.8} parent=0 // pred_check_branch
    %17 = sbr.rel (%p15) target = $region17
  $region16: #{_lambda_.8} parent=0 // pred_region
    %18 = vst [vmem:[#allocation2] sm:$0xff] 0.0
    %19 = vst [vmem:[#allocation2 + $0x8] sm:$0xff] 0.0
    %20 = vst [vmem:[#allocation2 + $0x10] sm:$0xff] 0.0
    %21 = vst [vmem:[#allocation2 + $0x18] sm:$0xff] 0.0
    %22 = vst [vmem:[#allocation2 + $0x20] sm:$0xff] 0.0
    %23 = vst [vmem:[#allocation2 + $0x28] sm:$0xff] 0.0
    %24 = vst [vmem:[#allocation2 + $0x30] sm:$0xff] 0.0
    %25 = vst [vmem:[#allocation2 + $0x38] sm:$0xff] 0.0
    %26 = vst [vmem:[#allocation2 + $0x40] sm:$0xff] 0.0
    %27 = vst [vmem:[#allocation2 + $0x48] sm:$0xff] 0.0
    %28 = vst [vmem:[#allocation2 + $0x50] sm:$0xff] 0.0
    %29 = vst [vmem:[#allocation2 + $0x58] sm:$0xff] 0.0
    %30 = vst [vmem:[#allocation2 + $0x60] sm:$0xff] 0.0
    %31 = vst [vmem:[#allocation2 + $0x68] sm:$0xff] 0.0
    %32 = vst [vmem:[#allocation2 + $0x70] sm:$0xff] 0.0
    %33 = vst [vmem:[#allocation2 + $0x78] sm:$0xff] 0.0
    %34 = vst [vmem:[#allocation2 + $0x80] sm:$0xff] 0.0
    %35 = vst [vmem:[#allocation2 + $0x88] sm:$0xff] 0.0
    %36 = vst [vmem:[#allocation2 + $0x90] sm:$0xff] 0.0
    %37 = vst [vmem:[#allocation2 + $0x98] sm:$0xff] 0.0
    %38 = vst [vmem:[#allocation2 + $0xa0] sm:$0xff] 0.0
    %39 = vst [vmem:[#allocation2 + $0xa8] sm:$0xff] 0.0
    %40 = vst [vmem:[#allocation2 + $0xb0] sm:$0xff] 0.0
    %41 = vst [vmem:[#allocation2 + $0xb8] sm:$0xff] 0.0
    %42 = vst [vmem:[#allocation2 + $0xc0] sm:$0xff] 0.0
    %43 = vst [vmem:[#allocation2 + $0xc8] sm:$0xff] 0.0
    %44 = vst [vmem:[#allocation2 + $0xd0] sm:$0xff] 0.0
    %45 = vst [vmem:[#allocation2 + $0xd8] sm:$0xff] 0.0
    %46 = vst [vmem:[#allocation2 + $0xe0] sm:$0xff] 0.0
    %47 = vst [vmem:[#allocation2 + $0xe8] sm:$0xff] 0.0
    %48 = vst [vmem:[#allocation2 + $0xf0] sm:$0xff] 0.0
    %49 = vst [vmem:[#allocation2 + $0xf8] sm:$0xff] 0.0
    %50 = vst [vmem:[#allocation2 + $0x100] sm:$0xff] 0.0
    %51 = vst [vmem:[#allocation2 + $0x108] sm:$0xff] 0.0
    %52 = vst [vmem:[#allocation2 + $0x110] sm:$0xff] 0.0
    %53 = vst [vmem:[#allocation2 + $0x118] sm:$0xff] 0.0
    %54 = vst [vmem:[#allocation2 + $0x120] sm:$0xff] 0.0
    %55 = vst [vmem:[#allocation2 + $0x128] sm:$0xff] 0.0
    %56 = vst [vmem:[#allocation2 + $0x130] sm:$0xff] 0.0
    %57 = vst [vmem:[#allocation2 + $0x138] sm:$0xff] 0.0
    %58 = vst [vmem:[#allocation2 + $0x140] sm:$0xff] 0.0
    %59 = vst [vmem:[#allocation2 + $0x148] sm:$0xff] 0.0
    %60 = vst [vmem:[#allocation2 + $0x150] sm:$0xff] 0.0
    %61 = vst [vmem:[#allocation2 + $0x158] sm:$0xff] 0.0
    %62 = vst [vmem:[#allocation2 + $0x160] sm:$0xff] 0.0
    %63 = vst [vmem:[#allocation2 + $0x168] sm:$0xff] 0.0
    %64 = vst [vmem:[#allocation2 + $0x170] sm:$0xff] 0.0
    %65 = vst [vmem:[#allocation2 + $0x178] sm:$0xff] 0.0
    %66 = vst [vmem:[#allocation2 + $0x180] sm:$0xff] 0.0
    %67 = vst [vmem:[#allocation2 + $0x188] sm:$0xff] 0.0
    %68 = vst [vmem:[#allocation2 + $0x190] sm:$0xff] 0.0
    %69 = vst [vmem:[#allocation2 + $0x198] sm:$0xff] 0.0
    %70 = vst [vmem:[#allocation2 + $0x1a0] sm:$0xff] 0.0
    %71 = vst [vmem:[#allocation2 + $0x1a8] sm:$0xff] 0.0
    %72 = vst [vmem:[#allocation2 + $0x1b0] sm:$0xff] 0.0
    %73 = vst [vmem:[#allocation2 + $0x1b8] sm:$0xff] 0.0
    %74 = vst [vmem:[#allocation2 + $0x1c0] sm:$0xff] 0.0
    %75 = vst [vmem:[#allocation2 + $0x1c8] sm:$0xff] 0.0
    %76 = vst [vmem:[#allocation2 + $0x1d0] sm:$0xff] 0.0
    %77 = vst [vmem:[#allocation2 + $0x1d8] sm:$0xff] 0.0
    %78 = vst [vmem:[#allocation2 + $0x1e0] sm:$0xff] 0.0
    %79 = vst [vmem:[#allocation2 + $0x1e8] sm:$0xff] 0.0
    %80 = vst [vmem:[#allocation2 + $0x1f0] sm:$0xff] 0.0
    %81 = vst [vmem:[#allocation2 + $0x1f8] sm:$0xff] 0.0
  $region17: #{_lambda_.8} parent=0 // pred_fallthru
    _
  %s82 = smul.u32 0, 128
  %v83 = vld [vmem:[#allocation2] sm:$0xff]
  %v84 = vld [vmem:[#allocation2 + $0x8] sm:$0xff]
  %v85 = vld [vmem:[#allocation2 + $0x10] sm:$0xff]
  %v86 = vld [vmem:[#allocation2 + $0x18] sm:$0xff]
  %v87 = vld [vmem:[#allocation2 + $0x20] sm:$0xff]
  %v88 = vld [vmem:[#allocation2 + $0x28] sm:$0xff]
  %v89 = vld [vmem:[#allocation2 + $0x30] sm:$0xff]
  %v90 = vld [vmem:[#allocation2 + $0x38] sm:$0xff]
  %v91 = vld [vmem:[#allocation2 + $0x40] sm:$0xff]
  %v92 = vld [vmem:[#allocation2 + $0x48] sm:$0xff]
  %v93 = vld [vmem:[#allocation2 + $0x50] sm:$0xff]
  %v94 = vld [vmem:[#allocation2 + $0x58] sm:$0xff]
  %v95 = vld [vmem:[#allocation2 + $0x60] sm:$0xff]
  %v96 = vld [vmem:[#allocation2 + $0x68] sm:$0xff]
  %v97 = vld [vmem:[#allocation2 + $0x70] sm:$0xff]
  %v98 = vld [vmem:[#allocation2 + $0x78] sm:$0xff]
  %v99 = vld [vmem:[#allocation2 + $0x80] sm:$0xff]
  %v100 = vld [vmem:[#allocation2 + $0x88] sm:$0xff]
  %v101 = vld [vmem:[#allocation2 + $0x90] sm:$0xff]
  %v102 = vld [vmem:[#allocation2 + $0x98] sm:$0xff]
  %v103 = vld [vmem:[#allocation2 + $0xa0] sm:$0xff]
  %v104 = vld [vmem:[#allocation2 + $0xa8] sm:$0xff]
  %v105 = vld [vmem:[#allocation2 + $0xb0] sm:$0xff]
  %v106 = vld [vmem:[#allocation2 + $0xb8] sm:$0xff]
  %v107 = vld [vmem:[#allocation2 + $0xc0] sm:$0xff]
  %v108 = vld [vmem:[#allocation2 + $0xc8] sm:$0xff]
  %v109 = vld [vmem:[#allocation2 + $0xd0] sm:$0xff]
  %v110 = vld [vmem:[#allocation2 + $0xd8] sm:$0xff]
  %v111 = vld [vmem:[#allocation2 + $0xe0] sm:$0xff]
  %v112 = vld [vmem:[#allocation2 + $0xe8] sm:$0xff]
  %v113 = vld [vmem:[#allocation2 + $0xf0] sm:$0xff]
  %v114 = vld [vmem:[#allocation2 + $0xf8] sm:$0xff]
  %v115 = vld [vmem:[#allocation2 + $0x100] sm:$0xff]
  %v116 = vld [vmem:[#allocation2 + $0x108] sm:$0xff]
  %v117 = vld [vmem:[#allocation2 + $0x110] sm:$0xff]
  %v118 = vld [vmem:[#allocation2 + $0x118] sm:$0xff]
  %v119 = vld [vmem:[#allocation2 + $0x120] sm:$0xff]
  %v120 = vld [vmem:[#allocation2 + $0x128] sm:$0xff]
  %v121 = vld [vmem:[#allocation2 + $0x130] sm:$0xff]
  %v122 = vld [vmem:[#allocation2 + $0x138] sm:$0xff]
  %v123 = vld [vmem:[#allocation2 + $0x140] sm:$0xff]
  %v124 = vld [vmem:[#allocation2 + $0x148] sm:$0xff]
  %v125 = vld [vmem:[#allocation2 + $0x150] sm:$0xff]
  %v126 = vld [vmem:[#allocation2 + $0x158] sm:$0xff]
  %v127 = vld [vmem:[#allocation2 + $0x160] sm:$0xff]
  %v128 = vld [vmem:[#allocation2 + $0x168] sm:$0xff]
  %v129 = vld [vmem:[#allocation2 + $0x170] sm:$0xff]
  %v130 = vld [vmem:[#allocation2 + $0x178] sm:$0xff]
  %v131 = vld [vmem:[#allocation2 + $0x180] sm:$0xff]
  %v132 = vld [vmem:[#allocation2 + $0x188] sm:$0xff]
  %v133 = vld [vmem:[#allocation2 + $0x190] sm:$0xff]
  %v134 = vld [vmem:[#allocation2 + $0x198] sm:$0xff]
  %v135 = vld [vmem:[#allocation2 + $0x1a0] sm:$0xff]
  %v136 = vld [vmem:[#allocation2 + $0x1a8] sm:$0xff]
  %v137 = vld [vmem:[#allocation2 + $0x1b0] sm:$0xff]
  %v138 = vld [vmem:[#allocation2 + $0x1b8] sm:$0xff]
  %v139 = vld [vmem:[#allocation2 + $0x1c0] sm:$0xff]
  %v140 = vld [vmem:[#allocation2 + $0x1c8] sm:$0xff]
  %v141 = vld [vmem:[#allocation2 + $0x1d0] sm:$0xff]
  %v142 = vld [vmem:[#allocation2 + $0x1d8] sm:$0xff]
  %v143 = vld [vmem:[#allocation2 + $0x1e0] sm:$0xff]
  %v144 = vld [vmem:[#allocation2 + $0x1e8] sm:$0xff]
  %v145 = vld [vmem:[#allocation2 + $0x1f0] sm:$0xff]
  %v146 = vld [vmem:[#allocation2 + $0x1f8] sm:$0xff]
  %v147 = vld [vmem:[%s0] sm:$0xf]
  %v148 = vld [vmem:[%s0 + $0x4] sm:$0xf]
  %v149 = vld [vmem:[%s0 + $0x8] sm:$0xf]
  %v150 = vld [vmem:[%s0 + $0xc] sm:$0xf]
  %v151 = vld [vmem:[%s0 + $0x10] sm:$0xf]
  %v152 = vld [vmem:[%s0 + $0x14] sm:$0xf]
  %v153 = vld [vmem:[%s0 + $0x18] sm:$0xf]
  %v154 = vld [vmem:[%s0 + $0x1c] sm:$0xf]
  %v155 = vld [vmem:[%s0 + $0x20] sm:$0xf]
  %v156 = vld [vmem:[%s0 + $0x24] sm:$0xf]
  %v157 = vld [vmem:[%s0 + $0x28] sm:$0xf]
  %v158 = vld [vmem:[%s0 + $0x2c] sm:$0xf]
  %v159 = vld [vmem:[%s0 + $0x30] sm:$0xf]
  %v160 = vld [vmem:[%s0 + $0x34] sm:$0xf]
  %v161 = vld [vmem:[%s0 + $0x38] sm:$0xf]
  %v162 = vld [vmem:[%s0 + $0x3c] sm:$0xf]
  %v163 = vld [vmem:[%s0 + $0x40] sm:$0xf]
  %v164 = vld [vmem:[%s0 + $0x44] sm:$0xf]
  %v165 = vld [vmem:[%s0 + $0x48] sm:$0xf]
  %v166 = vld [vmem:[%s0 + $0x4c] sm:$0xf]
  %v167 = vld [vmem:[%s0 + $0x50] sm:$0xf]
  %v168 = vld [vmem:[%s0 + $0x54] sm:$0xf]
  %v169 = vld [vmem:[%s0 + $0x58] sm:$0xf]
  %v170 = vld [vmem:[%s0 + $0x5c] sm:$0xf]
  %v171 = vld [vmem:[%s0 + $0x60] sm:$0xf]
  %v172 = vld [vmem:[%s0 + $0x64] sm:$0xf]
  %v173 = vld [vmem:[%s0 + $0x68] sm:$0xf]
  %v174 = vld [vmem:[%s0 + $0x6c] sm:$0xf]
  %v175 = vld [vmem:[%s0 + $0x70] sm:$0xf]
  %v176 = vld [vmem:[%s0 + $0x74] sm:$0xf]
  %v177 = vld [vmem:[%s0 + $0x78] sm:$0xf]
  %v178 = vld [vmem:[%s0 + $0x7c] sm:$0xf]
  %v179 = vld [vmem:[%s0 + $0x80] sm:$0xf]
  %v180 = vld [vmem:[%s0 + $0x84] sm:$0xf]
  %v181 = vld [vmem:[%s0 + $0x88] sm:$0xf]
  %v182 = vld [vmem:[%s0 + $0x8c] sm:$0xf]
  %v183 = vld [vmem:[%s0 + $0x90] sm:$0xf]
  %v184 = vld [vmem:[%s0 + $0x94] sm:$0xf]
  %v185 = vld [vmem:[%s0 + $0x98] sm:$0xf]
  %v186 = vld [vmem:[%s0 + $0x9c] sm:$0xf]
  %v187 = vld [vmem:[%s0 + $0xa0] sm:$0xf]
  %v188 = vld [vmem:[%s0 + $0xa4] sm:$0xf]
  %v189 = vld [vmem:[%s0 + $0xa8] sm:$0xf]
  %v190 = vld [vmem:[%s0 + $0xac] sm:$0xf]
  %v191 = vld [vmem:[%s0 + $0xb0] sm:$0xf]
  %v192 = vld [vmem:[%s0 + $0xb4] sm:$0xf]
  %v193 = vld [vmem:[%s0 + $0xb8] sm:$0xf]
  %v194 = vld [vmem:[%s0 + $0xbc] sm:$0xf]
  %v195 = vld [vmem:[%s0 + $0xc0] sm:$0xf]
  %v196 = vld [vmem:[%s0 + $0xc4] sm:$0xf]
  %v197 = vld [vmem:[%s0 + $0xc8] sm:$0xf]
  %v198 = vld [vmem:[%s0 + $0xcc] sm:$0xf]
  %v199 = vld [vmem:[%s0 + $0xd0] sm:$0xf]
  %v200 = vld [vmem:[%s0 + $0xd4] sm:$0xf]
  %v201 = vld [vmem:[%s0 + $0xd8] sm:$0xf]
  %v202 = vld [vmem:[%s0 + $0xdc] sm:$0xf]
  %v203 = vld [vmem:[%s0 + $0xe0] sm:$0xf]
  %v204 = vld [vmem:[%s0 + $0xe4] sm:$0xf]
  %v205 = vld [vmem:[%s0 + $0xe8] sm:$0xf]
  %v206 = vld [vmem:[%s0 + $0xec] sm:$0xf]
  %v207 = vld [vmem:[%s0 + $0xf0] sm:$0xf]
  %v208 = vld [vmem:[%s0 + $0xf4] sm:$0xf]
  %v209 = vld [vmem:[%s0 + $0xf8] sm:$0xf]
  %v210 = vld [vmem:[%s0 + $0xfc] sm:$0xf]
  %s211 = sshra.s32 %s82, 3
  %s212 = sand.u32 %s82, 7
  %s213 = smul.addr %s211, 4
  %s214 = scalar_lea.vmem %s1, %s213
  %v215 = vld [vmem:[%s214] sm:$0xf]
  %v216 = vld [vmem:[%s214 + $0x4] sm:$0xf]
  %v217 = vld [vmem:[%s214 + $0x8] sm:$0xf]
  %v218 = vld [vmem:[%s214 + $0xc] sm:$0xf]
  %v219 = vld [vmem:[%s214 + $0x10] sm:$0xf]
  %v220 = vld [vmem:[%s214 + $0x14] sm:$0xf]
  %v221 = vld [vmem:[%s214 + $0x18] sm:$0xf]
  %v222 = vld [vmem:[%s214 + $0x1c] sm:$0xf]
  %v223 = vld [vmem:[%s214 + $0x20] sm:$0xf]
  %v224 = vld [vmem:[%s214 + $0x24] sm:$0xf]
  %v225 = vld [vmem:[%s214 + $0x28] sm:$0xf]
  %v226 = vld [vmem:[%s214 + $0x2c] sm:$0xf]
  %v227 = vld [vmem:[%s214 + $0x30] sm:$0xf]
  %v228 = vld [vmem:[%s214 + $0x34] sm:$0xf]
  %v229 = vld [vmem:[%s214 + $0x38] sm:$0xf]
  %v230 = vld [vmem:[%s214 + $0x3c] sm:$0xf]
  %v295 = vunpack.c.l.b16 %v147
  %v296 = vunpack.c.l.b16 %v148
  %v297 = vunpack.c.l.b16 %v149
  %v298 = vunpack.c.l.b16 %v150
  %v299 = vunpack.c.l.b16 %v151
  %v300 = vunpack.c.l.b16 %v152
  %v301 = vunpack.c.l.b16 %v153
  %v302 = vunpack.c.l.b16 %v154
  %v303 = vunpack.c.l.b16 %v155
  %v304 = vunpack.c.l.b16 %v156
  %v305 = vunpack.c.l.b16 %v157
  %v306 = vunpack.c.l.b16 %v158
  %v307 = vunpack.c.l.b16 %v159
  %v308 = vunpack.c.l.b16 %v160
  %v309 = vunpack.c.l.b16 %v161
  %v310 = vunpack.c.l.b16 %v162
  %v311 = vunpack.c.l.b16 %v163
  %v312 = vunpack.c.l.b16 %v164
  %v313 = vunpack.c.l.b16 %v165
  %v314 = vunpack.c.l.b16 %v166
  %v315 = vunpack.c.l.b16 %v167
  %v316 = vunpack.c.l.b16 %v168
  %v317 = vunpack.c.l.b16 %v169
  %v318 = vunpack.c.l.b16 %v170
  %v319 = vunpack.c.l.b16 %v171
  %v320 = vunpack.c.l.b16 %v172
  %v321 = vunpack.c.l.b16 %v173
  %v322 = vunpack.c.l.b16 %v174
  %v323 = vunpack.c.l.b16 %v175
  %v324 = vunpack.c.l.b16 %v176
  %v325 = vunpack.c.l.b16 %v177
  %v326 = vunpack.c.l.b16 %v178
  %v327 = vunpack.c.l.b16 %v179
  %v328 = vunpack.c.l.b16 %v180
  %v329 = vunpack.c.l.b16 %v181
  %v330 = vunpack.c.l.b16 %v182
  %v331 = vunpack.c.l.b16 %v183
  %v332 = vunpack.c.l.b16 %v184
  %v333 = vunpack.c.l.b16 %v185
  %v334 = vunpack.c.l.b16 %v186
  %v335 = vunpack.c.l.b16 %v187
  %v336 = vunpack.c.l.b16 %v188
  %v337 = vunpack.c.l.b16 %v189
  %v338 = vunpack.c.l.b16 %v190
  %v339 = vunpack.c.l.b16 %v191
  %v340 = vunpack.c.l.b16 %v192
  %v341 = vunpack.c.l.b16 %v193
  %v342 = vunpack.c.l.b16 %v194
  %v343 = vunpack.c.l.b16 %v195
  %v344 = vunpack.c.l.b16 %v196
  %v345 = vunpack.c.l.b16 %v197
  %v346 = vunpack.c.l.b16 %v198
  %v347 = vunpack.c.l.b16 %v199
  %v348 = vunpack.c.l.b16 %v200
  %v349 = vunpack.c.l.b16 %v201
  %v350 = vunpack.c.l.b16 %v202
  %v351 = vunpack.c.l.b16 %v203
  %v352 = vunpack.c.l.b16 %v204
  %v353 = vunpack.c.l.b16 %v205
  %v354 = vunpack.c.l.b16 %v206
  %v355 = vunpack.c.l.b16 %v207
  %v356 = vunpack.c.l.b16 %v208
  %v357 = vunpack.c.l.b16 %v209
  %v358 = vunpack.c.l.b16 %v210
  %v359 = vpack.c.b16 %v296, %v295
  %v360 = vpack.c.b16 %v298, %v297
  %v361 = vpack.c.b16 %v300, %v299
  %v362 = vpack.c.b16 %v302, %v301
  %v363 = vpack.c.b16 %v304, %v303
  %v364 = vpack.c.b16 %v306, %v305
  %v365 = vpack.c.b16 %v308, %v307
  %v366 = vpack.c.b16 %v310, %v309
  %v367 = vpack.c.b16 %v312, %v311
  %v368 = vpack.c.b16 %v314, %v313
  %v369 = vpack.c.b16 %v316, %v315
  %v370 = vpack.c.b16 %v318, %v317
  %v371 = vpack.c.b16 %v320, %v319
  %v372 = vpack.c.b16 %v322, %v321
  %v373 = vpack.c.b16 %v324, %v323
  %v374 = vpack.c.b16 %v326, %v325
  %v375 = vpack.c.b16 %v328, %v327
  %v376 = vpack.c.b16 %v330, %v329
  %v377 = vpack.c.b16 %v332, %v331
  %v378 = vpack.c.b16 %v334, %v333
  %v379 = vpack.c.b16 %v336, %v335
  %v380 = vpack.c.b16 %v338, %v337
  %v381 = vpack.c.b16 %v340, %v339
  %v382 = vpack.c.b16 %v342, %v341
  %v383 = vpack.c.b16 %v344, %v343
  %v384 = vpack.c.b16 %v346, %v345
  %v385 = vpack.c.b16 %v348, %v347
  %v386 = vpack.c.b16 %v350, %v349
  %v387 = vpack.c.b16 %v352, %v351
  %v388 = vpack.c.b16 %v354, %v353
  %v389 = vpack.c.b16 %v356, %v355
  %v390 = vpack.c.b16 %v358, %v357
  %v439 = vunpack.c.l.b16 %v215
  %v440 = vunpack.c.l.b16 %v216
  %v441 = vunpack.c.l.b16 %v217
  %v442 = vunpack.c.l.b16 %v218
  %v443 = vunpack.c.l.b16 %v219
  %v444 = vunpack.c.l.b16 %v220
  %v445 = vunpack.c.l.b16 %v221
  %v446 = vunpack.c.l.b16 %v222
  %v447 = vunpack.c.l.b16 %v223
  %v448 = vunpack.c.l.b16 %v224
  %v449 = vunpack.c.l.b16 %v225
  %v450 = vunpack.c.l.b16 %v226
  %v451 = vunpack.c.l.b16 %v227
  %v452 = vunpack.c.l.b16 %v228
  %v453 = vunpack.c.l.b16 %v229
  %v454 = vunpack.c.l.b16 %v230
  %v455 = vpack.c.b16 %v440, %v439
  %v456 = vpack.c.b16 %v442, %v441
  %v457 = vpack.c.b16 %v444, %v443
  %v458 = vpack.c.b16 %v446, %v445
  %v459 = vpack.c.b16 %v448, %v447
  %v460 = vpack.c.b16 %v450, %v449
  %v461 = vpack.c.b16 %v452, %v451
  %v462 = vpack.c.b16 %v454, %v453
  %471 = vmatpush.bf16.msra.mxu0 %v462
  %472 = vmatpush.bf16.msra.mxu0 %v461
  %473 = vmatpush.bf16.msra.mxu0 %v460
  %474 = vmatpush.bf16.msra.mxu0 %v459
  %475 = vmatpush.bf16.msra.mxu0 %v458
  %476 = vmatpush.bf16.msra.mxu0 %v457
  %477 = vmatpush.bf16.msra.mxu0 %v456
  %478 = vmatpush.bf16.msra.mxu0 %v455
  %479 = vmatmul.bf16.gmra.mxu0 %v359
  %v480 = vpop.f32.mrf.mxu0
  %v481 = vadd.f32 0.0, %v480
  %v482 = vpop.f32.mrf.mxu0
  %v483 = vadd.f32 0.0, %v482
  %484 = vmatmul.bf16.gmra.mxu0 %v360
  %v485 = vpop.f32.mrf.mxu0
  %v486 = vadd.f32 0.0, %v485
  %v487 = vpop.f32.mrf.mxu0
  %v488 = vadd.f32 0.0, %v487
  %489 = vmatmul.bf16.gmra.mxu0 %v361
  %v490 = vpop.f32.mrf.mxu0
  %v491 = vadd.f32 0.0, %v490
  %v492 = vpop.f32.mrf.mxu0
  %v493 = vadd.f32 0.0, %v492
  %494 = vmatmul.bf16.gmra.mxu0 %v362
  %v495 = vpop.f32.mrf.mxu0
  %v496 = vadd.f32 0.0, %v495
  %v497 = vpop.f32.mrf.mxu0
  %v498 = vadd.f32 0.0, %v497
  %499 = vmatmul.bf16.gmra.mxu0 %v363
  %v500 = vpop.f32.mrf.mxu0
  %v501 = vadd.f32 0.0, %v500
  %v502 = vpop.f32.mrf.mxu0
  %v503 = vadd.f32 0.0, %v502
  %504 = vmatmul.bf16.gmra.mxu0 %v364
  %v505 = vpop.f32.mrf.mxu0
  %v506 = vadd.f32 0.0, %v505
  %v507 = vpop.f32.mrf.mxu0
  %v508 = vadd.f32 0.0, %v507
  %509 = vmatmul.bf16.gmra.mxu0 %v365
  %v510 = vpop.f32.mrf.mxu0
  %v511 = vadd.f32 0.0, %v510
  %v512 = vpop.f32.mrf.mxu0
  %v513 = vadd.f32 0.0, %v512
  %514 = vmatmul.bf16.gmra.mxu0 %v366
  %v515 = vpop.f32.mrf.mxu0
  %v516 = vadd.f32 0.0, %v515
  %v517 = vpop.f32.mrf.mxu0
  %v518 = vadd.f32 0.0, %v517
  %519 = vmatmul.bf16.gmra.mxu0 %v367
  %v520 = vpop.f32.mrf.mxu0
  %v521 = vadd.f32 0.0, %v520
  %v522 = vpop.f32.mrf.mxu0
  %v523 = vadd.f32 0.0, %v522
  %524 = vmatmul.bf16.gmra.mxu0 %v368
  %v525 = vpop.f32.mrf.mxu0
  %v526 = vadd.f32 0.0, %v525
  %v527 = vpop.f32.mrf.mxu0
  %v528 = vadd.f32 0.0, %v527
  %529 = vmatmul.bf16.gmra.mxu0 %v369
  %v530 = vpop.f32.mrf.mxu0
  %v531 = vadd.f32 0.0, %v530
  %v532 = vpop.f32.mrf.mxu0
  %v533 = vadd.f32 0.0, %v532
  %534 = vmatmul.bf16.gmra.mxu0 %v370
  %v535 = vpop.f32.mrf.mxu0
  %v536 = vadd.f32 0.0, %v535
  %v537 = vpop.f32.mrf.mxu0
  %v538 = vadd.f32 0.0, %v537
  %539 = vmatmul.bf16.gmra.mxu0 %v371
  %v540 = vpop.f32.mrf.mxu0
  %v541 = vadd.f32 0.0, %v540
  %v542 = vpop.f32.mrf.mxu0
  %v543 = vadd.f32 0.0, %v542
  %544 = vmatmul.bf16.gmra.mxu0 %v372
  %v545 = vpop.f32.mrf.mxu0
  %v546 = vadd.f32 0.0, %v545
  %v547 = vpop.f32.mrf.mxu0
  %v548 = vadd.f32 0.0, %v547
  %549 = vmatmul.bf16.gmra.mxu0 %v373
  %v550 = vpop.f32.mrf.mxu0
  %v551 = vadd.f32 0.0, %v550
  %v552 = vpop.f32.mrf.mxu0
  %v553 = vadd.f32 0.0, %v552
  %554 = vmatmul.bf16.gmra.mxu0 %v374
  %v555 = vpop.f32.mrf.mxu0
  %v556 = vadd.f32 0.0, %v555
  %v557 = vpop.f32.mrf.mxu0
  %v558 = vadd.f32 0.0, %v557
  %559 = vmatmul.bf16.gmra.mxu0 %v375
  %v560 = vpop.f32.mrf.mxu0
  %v561 = vadd.f32 0.0, %v560
  %v562 = vpop.f32.mrf.mxu0
  %v563 = vadd.f32 0.0, %v562
  %564 = vmatmul.bf16.gmra.mxu0 %v376
  %v565 = vpop.f32.mrf.mxu0
  %v566 = vadd.f32 0.0, %v565
  %v567 = vpop.f32.mrf.mxu0
  %v568 = vadd.f32 0.0, %v567
  %569 = vmatmul.bf16.gmra.mxu0 %v377
  %v570 = vpop.f32.mrf.mxu0
  %v571 = vadd.f32 0.0, %v570
  %v572 = vpop.f32.mrf.mxu0
  %v573 = vadd.f32 0.0, %v572
  %574 = vmatmul.bf16.gmra.mxu0 %v378
  %v575 = vpop.f32.mrf.mxu0
  %v576 = vadd.f32 0.0, %v575
  %v577 = vpop.f32.mrf.mxu0
  %v578 = vadd.f32 0.0, %v577
  %579 = vmatmul.bf16.gmra.mxu0 %v379
  %v580 = vpop.f32.mrf.mxu0
  %v581 = vadd.f32 0.0, %v580
  %v582 = vpop.f32.mrf.mxu0
  %v583 = vadd.f32 0.0, %v582
  %584 = vmatmul.bf16.gmra.mxu0 %v380
  %v585 = vpop.f32.mrf.mxu0
  %v586 = vadd.f32 0.0, %v585
  %v587 = vpop.f32.mrf.mxu0
  %v588 = vadd.f32 0.0, %v587
  %589 = vmatmul.bf16.gmra.mxu0 %v381
  %v590 = vpop.f32.mrf.mxu0
  %v591 = vadd.f32 0.0, %v590
  %v592 = vpop.f32.mrf.mxu0
  %v593 = vadd.f32 0.0, %v592
  %594 = vmatmul.bf16.gmra.mxu0 %v382
  %v595 = vpop.f32.mrf.mxu0
  %v596 = vadd.f32 0.0, %v595
  %v597 = vpop.f32.mrf.mxu0
  %v598 = vadd.f32 0.0, %v597
  %599 = vmatmul.bf16.gmra.mxu0 %v383
  %v600 = vpop.f32.mrf.mxu0
  %v601 = vadd.f32 0.0, %v600
  %v602 = vpop.f32.mrf.mxu0
  %v603 = vadd.f32 0.0, %v602
  %604 = vmatmul.bf16.gmra.mxu0 %v384
  %v605 = vpop.f32.mrf.mxu0
  %v606 = vadd.f32 0.0, %v605
  %v607 = vpop.f32.mrf.mxu0
  %v608 = vadd.f32 0.0, %v607
  %609 = vmatmul.bf16.gmra.mxu0 %v385
  %v610 = vpop.f32.mrf.mxu0
  %v611 = vadd.f32 0.0, %v610
  %v612 = vpop.f32.mrf.mxu0
  %v613 = vadd.f32 0.0, %v612
  %614 = vmatmul.bf16.gmra.mxu0 %v386
  %v615 = vpop.f32.mrf.mxu0
  %v616 = vadd.f32 0.0, %v615
  %v617 = vpop.f32.mrf.mxu0
  %v618 = vadd.f32 0.0, %v617
  %619 = vmatmul.bf16.gmra.mxu0 %v387
  %v620 = vpop.f32.mrf.mxu0
  %v621 = vadd.f32 0.0, %v620
  %v622 = vpop.f32.mrf.mxu0
  %v623 = vadd.f32 0.0, %v622
  %624 = vmatmul.bf16.gmra.mxu0 %v388
  %v625 = vpop.f32.mrf.mxu0
  %v626 = vadd.f32 0.0, %v625
  %v627 = vpop.f32.mrf.mxu0
  %v628 = vadd.f32 0.0, %v627
  %629 = vmatmul.bf16.gmra.mxu0 %v389
  %v630 = vpop.f32.mrf.mxu0
  %v631 = vadd.f32 0.0, %v630
  %v632 = vpop.f32.mrf.mxu0
  %v633 = vadd.f32 0.0, %v632
  %634 = vmatmul.bf16.gmra.mxu0 %v390
  %v635 = vpop.f32.mrf.mxu0
  %v636 = vadd.f32 0.0, %v635
  %v637 = vpop.f32.mrf.mxu0
  %v638 = vadd.f32 0.0, %v637
  %639 = vdwg.mxu0
  %v640 = vadd.f32 %v83, %v481
  %v641 = vadd.f32 %v84, %v483
  %v642 = vadd.f32 %v85, %v486
  %v643 = vadd.f32 %v86, %v488
  %v644 = vadd.f32 %v87, %v491
  %v645 = vadd.f32 %v88, %v493
  %v646 = vadd.f32 %v89, %v496
  %v647 = vadd.f32 %v90, %v498
  %v648 = vadd.f32 %v91, %v501
  %v649 = vadd.f32 %v92, %v503
  %v650 = vadd.f32 %v93, %v506
  %v651 = vadd.f32 %v94, %v508
  %v652 = vadd.f32 %v95, %v511
  %v653 = vadd.f32 %v96, %v513
  %v654 = vadd.f32 %v97, %v516
  %v655 = vadd.f32 %v98, %v518
  %v656 = vadd.f32 %v99, %v521
  %v657 = vadd.f32 %v100, %v523
  %v658 = vadd.f32 %v101, %v526
  %v659 = vadd.f32 %v102, %v528
  %v660 = vadd.f32 %v103, %v531
  %v661 = vadd.f32 %v104, %v533
  %v662 = vadd.f32 %v105, %v536
  %v663 = vadd.f32 %v106, %v538
  %v664 = vadd.f32 %v107, %v541
  %v665 = vadd.f32 %v108, %v543
  %v666 = vadd.f32 %v109, %v546
  %v667 = vadd.f32 %v110, %v548
  %v668 = vadd.f32 %v111, %v551
  %v669 = vadd.f32 %v112, %v553
  %v670 = vadd.f32 %v113, %v556
  %v671 = vadd.f32 %v114, %v558
  %v672 = vadd.f32 %v115, %v561
  %v673 = vadd.f32 %v116, %v563
  %v674 = vadd.f32 %v117, %v566
  %v675 = vadd.f32 %v118, %v568
  %v676 = vadd.f32 %v119, %v571
  %v677 = vadd.f32 %v120, %v573
  %v678 = vadd.f32 %v121, %v576
  %v679 = vadd.f32 %v122, %v578
  %v680 = vadd.f32 %v123, %v581
  %v681 = vadd.f32 %v124, %v583
  %v682 = vadd.f32 %v125, %v586
  %v683 = vadd.f32 %v126, %v588
  %v684 = vadd.f32 %v127, %v591
  %v685 = vadd.f32 %v128, %v593
  %v686 = vadd.f32 %v129, %v596
  %v687 = vadd.f32 %v130, %v598
  %v688 = vadd.f32 %v131, %v601
  %v689 = vadd.f32 %v132, %v603
  %v690 = vadd.f32 %v133, %v606
  %v691 = vadd.f32 %v134, %v608
  %v692 = vadd.f32 %v135, %v611
  %v693 = vadd.f32 %v136, %v613
  %v694 = vadd.f32 %v137, %v616
  %v695 = vadd.f32 %v138, %v618
  %v696 = vadd.f32 %v139, %v621
  %v697 = vadd.f32 %v140, %v623
  %v698 = vadd.f32 %v141, %v626
  %v699 = vadd.f32 %v142, %v628
  %v700 = vadd.f32 %v143, %v631
  %v701 = vadd.f32 %v144, %v633
  %v702 = vadd.f32 %v145, %v636
  %v703 = vadd.f32 %v146, %v638
  %704 = vst [vmem:[#allocation2] sm:$0xff] %v640
  %705 = vst [vmem:[#allocation2 + $0x8] sm:$0xff] %v641
  %706 = vst [vmem:[#allocation2 + $0x10] sm:$0xff] %v642
  %707 = vst [vmem:[#allocation2 + $0x18] sm:$0xff] %v643
  %708 = vst [vmem:[#allocation2 + $0x20] sm:$0xff] %v644
  %709 = vst [vmem:[#allocation2 + $0x28] sm:$0xff] %v645
  %710 = vst [vmem:[#allocation2 + $0x30] sm:$0xff] %v646
  %711 = vst [vmem:[#allocation2 + $0x38] sm:$0xff] %v647
  %712 = vst [vmem:[#allocation2 + $0x40] sm:$0xff] %v648
  %713 = vst [vmem:[#allocation2 + $0x48] sm:$0xff] %v649
  %714 = vst [vmem:[#allocation2 + $0x50] sm:$0xff] %v650
  %715 = vst [vmem:[#allocation2 + $0x58] sm:$0xff] %v651
  %716 = vst [vmem:[#allocation2 + $0x60] sm:$0xff] %v652
  %717 = vst [vmem:[#allocation2 + $0x68] sm:$0xff] %v653
  %718 = vst [vmem:[#allocation2 + $0x70] sm:$0xff] %v654
  %719 = vst [vmem:[#allocation2 + $0x78] sm:$0xff] %v655
  %720 = vst [vmem:[#allocation2 + $0x80] sm:$0xff] %v656
  %721 = vst [vmem:[#allocation2 + $0x88] sm:$0xff] %v657
  %722 = vst [vmem:[#allocation2 + $0x90] sm:$0xff] %v658
  %723 = vst [vmem:[#allocation2 + $0x98] sm:$0xff] %v659
  %724 = vst [vmem:[#allocation2 + $0xa0] sm:$0xff] %v660
  %725 = vst [vmem:[#allocation2 + $0xa8] sm:$0xff] %v661
  %726 = vst [vmem:[#allocation2 + $0xb0] sm:$0xff] %v662
  %727 = vst [vmem:[#allocation2 + $0xb8] sm:$0xff] %v663
  %728 = vst [vmem:[#allocation2 + $0xc0] sm:$0xff] %v664
  %729 = vst [vmem:[#allocation2 + $0xc8] sm:$0xff] %v665
  %730 = vst [vmem:[#allocation2 + $0xd0] sm:$0xff] %v666
  %731 = vst [vmem:[#allocation2 + $0xd8] sm:$0xff] %v667
  %732 = vst [vmem:[#allocation2 + $0xe0] sm:$0xff] %v668
  %733 = vst [vmem:[#allocation2 + $0xe8] sm:$0xff] %v669
  %734 = vst [vmem:[#allocation2 + $0xf0] sm:$0xff] %v670
  %735 = vst [vmem:[#allocation2 + $0xf8] sm:$0xff] %v671
  %736 = vst [vmem:[#allocation2 + $0x100] sm:$0xff] %v672
  %737 = vst [vmem:[#allocation2 + $0x108] sm:$0xff] %v673
  %738 = vst [vmem:[#allocation2 + $0x110] sm:$0xff] %v674
  %739 = vst [vmem:[#allocation2 + $0x118] sm:$0xff] %v675
  %740 = vst [vmem:[#allocation2 + $0x120] sm:$0xff] %v676
  %741 = vst [vmem:[#allocation2 + $0x128] sm:$0xff] %v677
  %742 = vst [vmem:[#allocation2 + $0x130] sm:$0xff] %v678
  %743 = vst [vmem:[#allocation2 + $0x138] sm:$0xff] %v679
  %744 = vst [vmem:[#allocation2 + $0x140] sm:$0xff] %v680
  %745 = vst [vmem:[#allocation2 + $0x148] sm:$0xff] %v681
  %746 = vst [vmem:[#allocation2 + $0x150] sm:$0xff] %v682
  %747 = vst [vmem:[#allocation2 + $0x158] sm:$0xff] %v683
  %748 = vst [vmem:[#allocation2 + $0x160] sm:$0xff] %v684
  %749 = vst [vmem:[#allocation2 + $0x168] sm:$0xff] %v685
  %750 = vst [vmem:[#allocation2 + $0x170] sm:$0xff] %v686
  %751 = vst [vmem:[#allocation2 + $0x178] sm:$0xff] %v687
  %752 = vst [vmem:[#allocation2 + $0x180] sm:$0xff] %v688
  %753 = vst [vmem:[#allocation2 + $0x188] sm:$0xff] %v689
  %754 = vst [vmem:[#allocation2 + $0x190] sm:$0xff] %v690
  %755 = vst [vmem:[#allocation2 + $0x198] sm:$0xff] %v691
  %756 = vst [vmem:[#allocation2 + $0x1a0] sm:$0xff] %v692
  %757 = vst [vmem:[#allocation2 + $0x1a8] sm:$0xff] %v693
  %758 = vst [vmem:[#allocation2 + $0x1b0] sm:$0xff] %v694
  %759 = vst [vmem:[#allocation2 + $0x1b8] sm:$0xff] %v695
  %760 = vst [vmem:[#allocation2 + $0x1c0] sm:$0xff] %v696
  %761 = vst [vmem:[#allocation2 + $0x1c8] sm:$0xff] %v697
  %762 = vst [vmem:[#allocation2 + $0x1d0] sm:$0xff] %v698
  %763 = vst [vmem:[#allocation2 + $0x1d8] sm:$0xff] %v699
  %764 = vst [vmem:[#allocation2 + $0x1e0] sm:$0xff] %v700
  %765 = vst [vmem:[#allocation2 + $0x1e8] sm:$0xff] %v701
  %766 = vst [vmem:[#allocation2 + $0x1f0] sm:$0xff] %v702
  %767 = vst [vmem:[#allocation2 + $0x1f8] sm:$0xff] %v703
  // Predicated region
  $region18: #{_lambda_.8} parent=0 // pred_check
    %p768 = pneg %p14
  $region19: #{_lambda_.8} parent=0 // pred_check_branch
    %770 = sbr.rel (%p768) target = $region21
  $region20: #{_lambda_.8} parent=0 // pred_region
    %v771 = vld [vmem:[#allocation2] sm:$0xff]
    %v772 = vld [vmem:[#allocation2 + $0x8] sm:$0xff]
    %v773 = vld [vmem:[#allocation2 + $0x10] sm:$0xff]
    %v774 = vld [vmem:[#allocation2 + $0x18] sm:$0xff]
    %v775 = vld [vmem:[#allocation2 + $0x20] sm:$0xff]
    %v776 = vld [vmem:[#allocation2 + $0x28] sm:$0xff]
    %v777 = vld [vmem:[#allocation2 + $0x30] sm:$0xff]
    %v778 = vld [vmem:[#allocation2 + $0x38] sm:$0xff]
    %v779 = vld [vmem:[#allocation2 + $0x40] sm:$0xff]
    %v780 = vld [vmem:[#allocation2 + $0x48] sm:$0xff]
    %v781 = vld [vmem:[#allocation2 + $0x50] sm:$0xff]
    %v782 = vld [vmem:[#allocation2 + $0x58] sm:$0xff]
    %v783 = vld [vmem:[#allocation2 + $0x60] sm:$0xff]
    %v784 = vld [vmem:[#allocation2 + $0x68] sm:$0xff]
    %v785 = vld [vmem:[#allocation2 + $0x70] sm:$0xff]
    %v786 = vld [vmem:[#allocation2 + $0x78] sm:$0xff]
    %v787 = vld [vmem:[#allocation2 + $0x80] sm:$0xff]
    %v788 = vld [vmem:[#allocation2 + $0x88] sm:$0xff]
    %v789 = vld [vmem:[#allocation2 + $0x90] sm:$0xff]
    %v790 = vld [vmem:[#allocation2 + $0x98] sm:$0xff]
    %v791 = vld [vmem:[#allocation2 + $0xa0] sm:$0xff]
    %v792 = vld [vmem:[#allocation2 + $0xa8] sm:$0xff]
    %v793 = vld [vmem:[#allocation2 + $0xb0] sm:$0xff]
    %v794 = vld [vmem:[#allocation2 + $0xb8] sm:$0xff]
    %v795 = vld [vmem:[#allocation2 + $0xc0] sm:$0xff]
    %v796 = vld [vmem:[#allocation2 + $0xc8] sm:$0xff]
    %v797 = vld [vmem:[#allocation2 + $0xd0] sm:$0xff]
    %v798 = vld [vmem:[#allocation2 + $0xd8] sm:$0xff]
    %v799 = vld [vmem:[#allocation2 + $0xe0] sm:$0xff]
    %v800 = vld [vmem:[#allocation2 + $0xe8] sm:$0xff]
    %v801 = vld [vmem:[#allocation2 + $0xf0] sm:$0xff]
    %v802 = vld [vmem:[#allocation2 + $0xf8] sm:$0xff]
    %v803 = vld [vmem:[#allocation2 + $0x100] sm:$0xff]
    %v804 = vld [vmem:[#allocation2 + $0x108] sm:$0xff]
    %v805 = vld [vmem:[#allocation2 + $0x110] sm:$0xff]
    %v806 = vld [vmem:[#allocation2 + $0x118] sm:$0xff]
    %v807 = vld [vmem:[#allocation2 + $0x120] sm:$0xff]
    %v808 = vld [vmem:[#allocation2 + $0x128] sm:$0xff]
    %v809 = vld [vmem:[#allocation2 + $0x130] sm:$0xff]
    %v810 = vld [vmem:[#allocation2 + $0x138] sm:$0xff]
    %v811 = vld [vmem:[#allocation2 + $0x140] sm:$0xff]
    %v812 = vld [vmem:[#allocation2 + $0x148] sm:$0xff]
    %v813 = vld [vmem:[#allocation2 + $0x150] sm:$0xff]
    %v814 = vld [vmem:[#allocation2 + $0x158] sm:$0xff]
    %v815 = vld [vmem:[#allocation2 + $0x160] sm:$0xff]
    %v816 = vld [vmem:[#allocation2 + $0x168] sm:$0xff]
    %v817 = vld [vmem:[#allocation2 + $0x170] sm:$0xff]
    %v818 = vld [vmem:[#allocation2 + $0x178] sm:$0xff]
    %v819 = vld [vmem:[#allocation2 + $0x180] sm:$0xff]
    %v820 = vld [vmem:[#allocation2 + $0x188] sm:$0xff]
    %v821 = vld [vmem:[#allocation2 + $0x190] sm:$0xff]
    %v822 = vld [vmem:[#allocation2 + $0x198] sm:$0xff]
    %v823 = vld [vmem:[#allocation2 + $0x1a0] sm:$0xff]
    %v824 = vld [vmem:[#allocation2 + $0x1a8] sm:$0xff]
    %v825 = vld [vmem:[#allocation2 + $0x1b0] sm:$0xff]
    %v826 = vld [vmem:[#allocation2 + $0x1b8] sm:$0xff]
    %v827 = vld [vmem:[#allocation2 + $0x1c0] sm:$0xff]
    %v828 = vld [vmem:[#allocation2 + $0x1c8] sm:$0xff]
    %v829 = vld [vmem:[#allocation2 + $0x1d0] sm:$0xff]
    %v830 = vld [vmem:[#allocation2 + $0x1d8] sm:$0xff]
    %v831 = vld [vmem:[#allocation2 + $0x1e0] sm:$0xff]
    %v832 = vld [vmem:[#allocation2 + $0x1e8] sm:$0xff]
    %v833 = vld [vmem:[#allocation2 + $0x1f0] sm:$0xff]
    %v834 = vld [vmem:[#allocation2 + $0x1f8] sm:$0xff]
    %v835 = vld [vmem:[%s2] sm:$0x1]
    %v837 = vperm.slane %v835, 0
    %v839 = vadd.f32 %v771, %v837
    %v840 = vadd.f32 %v772, %v837
    %v841 = vadd.f32 %v773, %v837
    %v842 = vadd.f32 %v774, %v837
    %v843 = vadd.f32 %v775, %v837
    %v844 = vadd.f32 %v776, %v837
    %v845 = vadd.f32 %v777, %v837
    %v846 = vadd.f32 %v778, %v837
    %v847 = vadd.f32 %v779, %v837
    %v848 = vadd.f32 %v780, %v837
    %v849 = vadd.f32 %v781, %v837
    %v850 = vadd.f32 %v782, %v837
    %v851 = vadd.f32 %v783, %v837
    %v852 = vadd.f32 %v784, %v837
    %v853 = vadd.f32 %v785, %v837
    %v854 = vadd.f32 %v786, %v837
    %v855 = vadd.f32 %v787, %v837
    %v856 = vadd.f32 %v788, %v837
    %v857 = vadd.f32 %v789, %v837
    %v858 = vadd.f32 %v790, %v837
    %v859 = vadd.f32 %v791, %v837
    %v860 = vadd.f32 %v792, %v837
    %v861 = vadd.f32 %v793, %v837
    %v862 = vadd.f32 %v794, %v837
    %v863 = vadd.f32 %v795, %v837
    %v864 = vadd.f32 %v796, %v837
    %v865 = vadd.f32 %v797, %v837
    %v866 = vadd.f32 %v798, %v837
    %v867 = vadd.f32 %v799, %v837
    %v868 = vadd.f32 %v800, %v837
    %v869 = vadd.f32 %v801, %v837
    %v870 = vadd.f32 %v802, %v837
    %v871 = vadd.f32 %v803, %v837
    %v872 = vadd.f32 %v804, %v837
    %v873 = vadd.f32 %v805, %v837
    %v874 = vadd.f32 %v806, %v837
    %v875 = vadd.f32 %v807, %v837
    %v876 = vadd.f32 %v808, %v837
    %v877 = vadd.f32 %v809, %v837
    %v878 = vadd.f32 %v810, %v837
    %v879 = vadd.f32 %v811, %v837
    %v880 = vadd.f32 %v812, %v837
    %v881 = vadd.f32 %v813, %v837
    %v882 = vadd.f32 %v814, %v837
    %v883 = vadd.f32 %v815, %v837
    %v884 = vadd.f32 %v816, %v837
    %v885 = vadd.f32 %v817, %v837
    %v886 = vadd.f32 %v818, %v837
    %v887 = vadd.f32 %v819, %v837
    %v888 = vadd.f32 %v820, %v837
    %v889 = vadd.f32 %v821, %v837
    %v890 = vadd.f32 %v822, %v837
    %v891 = vadd.f32 %v823, %v837
    %v892 = vadd.f32 %v824, %v837
    %v893 = vadd.f32 %v825, %v837
    %v894 = vadd.f32 %v826, %v837
    %v895 = vadd.f32 %v827, %v837
    %v896 = vadd.f32 %v828, %v837
    %v897 = vadd.f32 %v829, %v837
    %v898 = vadd.f32 %v830, %v837
    %v899 = vadd.f32 %v831, %v837
    %v900 = vadd.f32 %v832, %v837
    %v901 = vadd.f32 %v833, %v837
    %v902 = vadd.f32 %v834, %v837
    %vm903 = vcmp.ge.f32.partialorder %v839, 0.0
    %vm904 = vcmp.ge.f32.partialorder %v840, 0.0
    %vm905 = vcmp.ge.f32.partialorder %v841, 0.0
    %vm906 = vcmp.ge.f32.partialorder %v842, 0.0
    %vm907 = vcmp.ge.f32.partialorder %v843, 0.0
    %vm908 = vcmp.ge.f32.partialorder %v844, 0.0
    %vm909 = vcmp.ge.f32.partialorder %v845, 0.0
    %vm910 = vcmp.ge.f32.partialorder %v846, 0.0
    %vm911 = vcmp.ge.f32.partialorder %v847, 0.0
    %vm912 = vcmp.ge.f32.partialorder %v848, 0.0
    %vm913 = vcmp.ge.f32.partialorder %v849, 0.0
    %vm914 = vcmp.ge.f32.partialorder %v850, 0.0
    %vm915 = vcmp.ge.f32.partialorder %v851, 0.0
    %vm916 = vcmp.ge.f32.partialorder %v852, 0.0
    %vm917 = vcmp.ge.f32.partialorder %v853, 0.0
    %vm918 = vcmp.ge.f32.partialorder %v854, 0.0
    %vm919 = vcmp.ge.f32.partialorder %v855, 0.0
    %vm920 = vcmp.ge.f32.partialorder %v856, 0.0
    %vm921 = vcmp.ge.f32.partialorder %v857, 0.0
    %vm922 = vcmp.ge.f32.partialorder %v858, 0.0
    %vm923 = vcmp.ge.f32.partialorder %v859, 0.0
    %vm924 = vcmp.ge.f32.partialorder %v860, 0.0
    %vm925 = vcmp.ge.f32.partialorder %v861, 0.0
    %vm926 = vcmp.ge.f32.partialorder %v862, 0.0
    %vm927 = vcmp.ge.f32.partialorder %v863, 0.0
    %vm928 = vcmp.ge.f32.partialorder %v864, 0.0
    %vm929 = vcmp.ge.f32.partialorder %v865, 0.0
    %vm930 = vcmp.ge.f32.partialorder %v866, 0.0
    %vm931 = vcmp.ge.f32.partialorder %v867, 0.0
    %vm932 = vcmp.ge.f32.partialorder %v868, 0.0
    %vm933 = vcmp.ge.f32.partialorder %v869, 0.0
    %vm934 = vcmp.ge.f32.partialorder %v870, 0.0
    %vm935 = vcmp.ge.f32.partialorder %v871, 0.0
    %vm936 = vcmp.ge.f32.partialorder %v872, 0.0
    %vm937 = vcmp.ge.f32.partialorder %v873, 0.0
    %vm938 = vcmp.ge.f32.partialorder %v874, 0.0
    %vm939 = vcmp.ge.f32.partialorder %v875, 0.0
    %vm940 = vcmp.ge.f32.partialorder %v876, 0.0
    %vm941 = vcmp.ge.f32.partialorder %v877, 0.0
    %vm942 = vcmp.ge.f32.partialorder %v878, 0.0
    %vm943 = vcmp.ge.f32.partialorder %v879, 0.0
    %vm944 = vcmp.ge.f32.partialorder %v880, 0.0
    %vm945 = vcmp.ge.f32.partialorder %v881, 0.0
    %vm946 = vcmp.ge.f32.partialorder %v882, 0.0
    %vm947 = vcmp.ge.f32.partialorder %v883, 0.0
    %vm948 = vcmp.ge.f32.partialorder %v884, 0.0
    %vm949 = vcmp.ge.f32.partialorder %v885, 0.0
    %vm950 = vcmp.ge.f32.partialorder %v886, 0.0
    %vm951 = vcmp.ge.f32.partialorder %v887, 0.0
    %vm952 = vcmp.ge.f32.partialorder %v888, 0.0
    %vm953 = vcmp.ge.f32.partialorder %v889, 0.0
    %vm954 = vcmp.ge.f32.partialorder %v890, 0.0
    %vm955 = vcmp.ge.f32.partialorder %v891, 0.0
    %vm956 = vcmp.ge.f32.partialorder %v892, 0.0
    %vm957 = vcmp.ge.f32.partialorder %v893, 0.0
    %vm958 = vcmp.ge.f32.partialorder %v894, 0.0
    %vm959 = vcmp.ge.f32.partialorder %v895, 0.0
    %vm960 = vcmp.ge.f32.partialorder %v896, 0.0
    %vm961 = vcmp.ge.f32.partialorder %v897, 0.0
    %vm962 = vcmp.ge.f32.partialorder %v898, 0.0
    %vm963 = vcmp.ge.f32.partialorder %v899, 0.0
    %vm964 = vcmp.ge.f32.partialorder %v900, 0.0
    %vm965 = vcmp.ge.f32.partialorder %v901, 0.0
    %vm966 = vcmp.ge.f32.partialorder %v902, 0.0
    %v967 = vmul.f32 %v839, 0.2
    %v968 = vmul.f32 %v840, 0.2
    %v969 = vmul.f32 %v841, 0.2
    %v970 = vmul.f32 %v842, 0.2
    %v971 = vmul.f32 %v843, 0.2
    %v972 = vmul.f32 %v844, 0.2
    %v973 = vmul.f32 %v845, 0.2
    %v974 = vmul.f32 %v846, 0.2
    %v975 = vmul.f32 %v847, 0.2
    %v976 = vmul.f32 %v848, 0.2
    %v977 = vmul.f32 %v849, 0.2
    %v978 = vmul.f32 %v850, 0.2
    %v979 = vmul.f32 %v851, 0.2
    %v980 = vmul.f32 %v852, 0.2
    %v981 = vmul.f32 %v853, 0.2
    %v982 = vmul.f32 %v854, 0.2
    %v983 = vmul.f32 %v855, 0.2
    %v984 = vmul.f32 %v856, 0.2
    %v985 = vmul.f32 %v857, 0.2
    %v986 = vmul.f32 %v858, 0.2
    %v987 = vmul.f32 %v859, 0.2
    %v988 = vmul.f32 %v860, 0.2
    %v989 = vmul.f32 %v861, 0.2
    %v990 = vmul.f32 %v862, 0.2
    %v991 = vmul.f32 %v863, 0.2
    %v992 = vmul.f32 %v864, 0.2
    %v993 = vmul.f32 %v865, 0.2
    %v994 = vmul.f32 %v866, 0.2
    %v995 = vmul.f32 %v867, 0.2
    %v996 = vmul.f32 %v868, 0.2
    %v997 = vmul.f32 %v869, 0.2
    %v998 = vmul.f32 %v870, 0.2
    %v999 = vmul.f32 %v871, 0.2
    %v1000 = vmul.f32 %v872, 0.2
    %v1001 = vmul.f32 %v873, 0.2
    %v1002 = vmul.f32 %v874, 0.2
    %v1003 = vmul.f32 %v875, 0.2
    %v1004 = vmul.f32 %v876, 0.2
    %v1005 = vmul.f32 %v877, 0.2
    %v1006 = vmul.f32 %v878, 0.2
    %v1007 = vmul.f32 %v879, 0.2
    %v1008 = vmul.f32 %v880, 0.2
    %v1009 = vmul.f32 %v881, 0.2
    %v1010 = vmul.f32 %v882, 0.2
    %v1011 = vmul.f32 %v883, 0.2
    %v1012 = vmul.f32 %v884, 0.2
    %v1013 = vmul.f32 %v885, 0.2
    %v1014 = vmul.f32 %v886, 0.2
    %v1015 = vmul.f32 %v887, 0.2
    %v1016 = vmul.f32 %v888, 0.2
    %v1017 = vmul.f32 %v889, 0.2
    %v1018 = vmul.f32 %v890, 0.2
    %v1019 = vmul.f32 %v891, 0.2
    %v1020 = vmul.f32 %v892, 0.2
    %v1021 = vmul.f32 %v893, 0.2
    %v1022 = vmul.f32 %v894, 0.2
    %v1023 = vmul.f32 %v895, 0.2
    %v1024 = vmul.f32 %v896, 0.2
    %v1025 = vmul.f32 %v897, 0.2
    %v1026 = vmul.f32 %v898, 0.2
    %v1027 = vmul.f32 %v899, 0.2
    %v1028 = vmul.f32 %v900, 0.2
    %v1029 = vmul.f32 %v901, 0.2
    %v1030 = vmul.f32 %v902, 0.2
    %v1031 = vsel %vm903, %v839, %v967
    %v1032 = vsel %vm904, %v840, %v968
    %v1033 = vsel %vm905, %v841, %v969
    %v1034 = vsel %vm906, %v842, %v970
    %v1035 = vsel %vm907, %v843, %v971
    %v1036 = vsel %vm908, %v844, %v972
    %v1037 = vsel %vm909, %v845, %v973
    %v1038 = vsel %vm910, %v846, %v974
    %v1039 = vsel %vm911, %v847, %v975
    %v1040 = vsel %vm912, %v848, %v976
    %v1041 = vsel %vm913, %v849, %v977
    %v1042 = vsel %vm914, %v850, %v978
    %v1043 = vsel %vm915, %v851, %v979
    %v1044 = vsel %vm916, %v852, %v980
    %v1045 = vsel %vm917, %v853, %v981
    %v1046 = vsel %vm918, %v854, %v982
    %v1047 = vsel %vm919, %v855, %v983
    %v1048 = vsel %vm920, %v856, %v984
    %v1049 = vsel %vm921, %v857, %v985
    %v1050 = vsel %vm922, %v858, %v986
    %v1051 = vsel %vm923, %v859, %v987
    %v1052 = vsel %vm924, %v860, %v988
    %v1053 = vsel %vm925, %v861, %v989
    %v1054 = vsel %vm926, %v862, %v990
    %v1055 = vsel %vm927, %v863, %v991
    %v1056 = vsel %vm928, %v864, %v992
    %v1057 = vsel %vm929, %v865, %v993
    %v1058 = vsel %vm930, %v866, %v994
    %v1059 = vsel %vm931, %v867, %v995
    %v1060 = vsel %vm932, %v868, %v996
    %v1061 = vsel %vm933, %v869, %v997
    %v1062 = vsel %vm934, %v870, %v998
    %v1063 = vsel %vm935, %v871, %v999
    %v1064 = vsel %vm936, %v872, %v1000
    %v1065 = vsel %vm937, %v873, %v1001
    %v1066 = vsel %vm938, %v874, %v1002
    %v1067 = vsel %vm939, %v875, %v1003
    %v1068 = vsel %vm940, %v876, %v1004
    %v1069 = vsel %vm941, %v877, %v1005
    %v1070 = vsel %vm942, %v878, %v1006
    %v1071 = vsel %vm943, %v879, %v1007
    %v1072 = vsel %vm944, %v880, %v1008
    %v1073 = vsel %vm945, %v881, %v1009
    %v1074 = vsel %vm946, %v882, %v1010
    %v1075 = vsel %vm947, %v883, %v1011
    %v1076 = vsel %vm948, %v884, %v1012
    %v1077 = vsel %vm949, %v885, %v1013
    %v1078 = vsel %vm950, %v886, %v1014
    %v1079 = vsel %vm951, %v887, %v1015
    %v1080 = vsel %vm952, %v888, %v1016
    %v1081 = vsel %vm953, %v889, %v1017
    %v1082 = vsel %vm954, %v890, %v1018
    %v1083 = vsel %vm955, %v891, %v1019
    %v1084 = vsel %vm956, %v892, %v1020
    %v1085 = vsel %vm957, %v893, %v1021
    %v1086 = vsel %vm958, %v894, %v1022
    %v1087 = vsel %vm959, %v895, %v1023
    %v1088 = vsel %vm960, %v896, %v1024
    %v1089 = vsel %vm961, %v897, %v1025
    %v1090 = vsel %vm962, %v898, %v1026
    %v1091 = vsel %vm963, %v899, %v1027
    %v1092 = vsel %vm964, %v900, %v1028
    %v1093 = vsel %vm965, %v901, %v1029
    %v1094 = vsel %vm966, %v902, %v1030
    %v1095 = vpack.c.bf16 %v1031, %v1031
    %v1096 = vpack.c.bf16 %v1032, %v1032
    %v1097 = vpack.c.bf16 %v1033, %v1033
    %v1098 = vpack.c.bf16 %v1034, %v1034
    %v1099 = vpack.c.bf16 %v1035, %v1035
    %v1100 = vpack.c.bf16 %v1036, %v1036
    %v1101 = vpack.c.bf16 %v1037, %v1037
    %v1102 = vpack.c.bf16 %v1038, %v1038
    %v1103 = vpack.c.bf16 %v1039, %v1039
    %v1104 = vpack.c.bf16 %v1040, %v1040
    %v1105 = vpack.c.bf16 %v1041, %v1041
    %v1106 = vpack.c.bf16 %v1042, %v1042
    %v1107 = vpack.c.bf16 %v1043, %v1043
    %v1108 = vpack.c.bf16 %v1044, %v1044
    %v1109 = vpack.c.bf16 %v1045, %v1045
    %v1110 = vpack.c.bf16 %v1046, %v1046
    %v1111 = vpack.c.bf16 %v1047, %v1047
    %v1112 = vpack.c.bf16 %v1048, %v1048
    %v1113 = vpack.c.bf16 %v1049, %v1049
    %v1114 = vpack.c.bf16 %v1050, %v1050
    %v1115 = vpack.c.bf16 %v1051, %v1051
    %v1116 = vpack.c.bf16 %v1052, %v1052
    %v1117 = vpack.c.bf16 %v1053, %v1053
    %v1118 = vpack.c.bf16 %v1054, %v1054
    %v1119 = vpack.c.bf16 %v1055, %v1055
    %v1120 = vpack.c.bf16 %v1056, %v1056
    %v1121 = vpack.c.bf16 %v1057, %v1057
    %v1122 = vpack.c.bf16 %v1058, %v1058
    %v1123 = vpack.c.bf16 %v1059, %v1059
    %v1124 = vpack.c.bf16 %v1060, %v1060
    %v1125 = vpack.c.bf16 %v1061, %v1061
    %v1126 = vpack.c.bf16 %v1062, %v1062
    %v1127 = vpack.c.bf16 %v1063, %v1063
    %v1128 = vpack.c.bf16 %v1064, %v1064
    %v1129 = vpack.c.bf16 %v1065, %v1065
    %v1130 = vpack.c.bf16 %v1066, %v1066
    %v1131 = vpack.c.bf16 %v1067, %v1067
    %v1132 = vpack.c.bf16 %v1068, %v1068
    %v1133 = vpack.c.bf16 %v1069, %v1069
    %v1134 = vpack.c.bf16 %v1070, %v1070
    %v1135 = vpack.c.bf16 %v1071, %v1071
    %v1136 = vpack.c.bf16 %v1072, %v1072
    %v1137 = vpack.c.bf16 %v1073, %v1073
    %v1138 = vpack.c.bf16 %v1074, %v1074
    %v1139 = vpack.c.bf16 %v1075, %v1075
    %v1140 = vpack.c.bf16 %v1076, %v1076
    %v1141 = vpack.c.bf16 %v1077, %v1077
    %v1142 = vpack.c.bf16 %v1078, %v1078
    %v1143 = vpack.c.bf16 %v1079, %v1079
    %v1144 = vpack.c.bf16 %v1080, %v1080
    %v1145 = vpack.c.bf16 %v1081, %v1081
    %v1146 = vpack.c.bf16 %v1082, %v1082
    %v1147 = vpack.c.bf16 %v1083, %v1083
    %v1148 = vpack.c.bf16 %v1084, %v1084
    %v1149 = vpack.c.bf16 %v1085, %v1085
    %v1150 = vpack.c.bf16 %v1086, %v1086
    %v1151 = vpack.c.bf16 %v1087, %v1087
    %v1152 = vpack.c.bf16 %v1088, %v1088
    %v1153 = vpack.c.bf16 %v1089, %v1089
    %v1154 = vpack.c.bf16 %v1090, %v1090
    %v1155 = vpack.c.bf16 %v1091, %v1091
    %v1156 = vpack.c.bf16 %v1092, %v1092
    %v1157 = vpack.c.bf16 %v1093, %v1093
    %v1158 = vpack.c.bf16 %v1094, %v1094
    %1159 = vst [vmem:[%s3] sm:$0xf] %v1095
    %1160 = vst [vmem:[%s3 + $0x4] sm:$0xf] %v1096
    %1161 = vst [vmem:[%s3 + $0x8] sm:$0xf] %v1097
    %1162 = vst [vmem:[%s3 + $0xc] sm:$0xf] %v1098
    %1163 = vst [vmem:[%s3 + $0x10] sm:$0xf] %v1099
    %1164 = vst [vmem:[%s3 + $0x14] sm:$0xf] %v1100
    %1165 = vst [vmem:[%s3 + $0x18] sm:$0xf] %v1101
    %1166 = vst [vmem:[%s3 + $0x1c] sm:$0xf] %v1102
    %1167 = vst [vmem:[%s3 + $0x20] sm:$0xf] %v1103
    %1168 = vst [vmem:[%s3 + $0x24] sm:$0xf] %v1104
    %1169 = vst [vmem:[%s3 + $0x28] sm:$0xf] %v1105
    %1170 = vst [vmem:[%s3 + $0x2c] sm:$0xf] %v1106
    %1171 = vst [vmem:[%s3 + $0x30] sm:$0xf] %v1107
    %1172 = vst [vmem:[%s3 + $0x34] sm:$0xf] %v1108
    %1173 = vst [vmem:[%s3 + $0x38] sm:$0xf] %v1109
    %1174 = vst [vmem:[%s3 + $0x3c] sm:$0xf] %v1110
    %1175 = vst [vmem:[%s3 + $0x40] sm:$0xf] %v1111
    %1176 = vst [vmem:[%s3 + $0x44] sm:$0xf] %v1112
    %1177 = vst [vmem:[%s3 + $0x48] sm:$0xf] %v1113
    %1178 = vst [vmem:[%s3 + $0x4c] sm:$0xf] %v1114
    %1179 = vst [vmem:[%s3 + $0x50] sm:$0xf] %v1115
    %1180 = vst [vmem:[%s3 + $0x54] sm:$0xf] %v1116
    %1181 = vst [vmem:[%s3 + $0x58] sm:$0xf] %v1117
    %1182 = vst [vmem:[%s3 + $0x5c] sm:$0xf] %v1118
    %1183 = vst [vmem:[%s3 + $0x60] sm:$0xf] %v1119
    %1184 = vst [vmem:[%s3 + $0x64] sm:$0xf] %v1120
    %1185 = vst [vmem:[%s3 + $0x68] sm:$0xf] %v1121
    %1186 = vst [vmem:[%s3 + $0x6c] sm:$0xf] %v1122
    %1187 = vst [vmem:[%s3 + $0x70] sm:$0xf] %v1123
    %1188 = vst [vmem:[%s3 + $0x74] sm:$0xf] %v1124
    %1189 = vst [vmem:[%s3 + $0x78] sm:$0xf] %v1125
    %1190 = vst [vmem:[%s3 + $0x7c] sm:$0xf] %v1126
    %1191 = vst [vmem:[%s3 + $0x80] sm:$0xf] %v1127
    %1192 = vst [vmem:[%s3 + $0x84] sm:$0xf] %v1128
    %1193 = vst [vmem:[%s3 + $0x88] sm:$0xf] %v1129
    %1194 = vst [vmem:[%s3 + $0x8c] sm:$0xf] %v1130
    %1195 = vst [vmem:[%s3 + $0x90] sm:$0xf] %v1131
    %1196 = vst [vmem:[%s3 + $0x94] sm:$0xf] %v1132
    %1197 = vst [vmem:[%s3 + $0x98] sm:$0xf] %v1133
    %1198 = vst [vmem:[%s3 + $0x9c] sm:$0xf] %v1134
    %1199 = vst [vmem:[%s3 + $0xa0] sm:$0xf] %v1135
    %1200 = vst [vmem:[%s3 + $0xa4] sm:$0xf] %v1136
    %1201 = vst [vmem:[%s3 + $0xa8] sm:$0xf] %v1137
    %1202 = vst [vmem:[%s3 + $0xac] sm:$0xf] %v1138
    %1203 = vst [vmem:[%s3 + $0xb0] sm:$0xf] %v1139
    %1204 = vst [vmem:[%s3 + $0xb4] sm:$0xf] %v1140
    %1205 = vst [vmem:[%s3 + $0xb8] sm:$0xf] %v1141
    %1206 = vst [vmem:[%s3 + $0xbc] sm:$0xf] %v1142
    %1207 = vst [vmem:[%s3 + $0xc0] sm:$0xf] %v1143
    %1208 = vst [vmem:[%s3 + $0xc4] sm:$0xf] %v1144
    %1209 = vst [vmem:[%s3 + $0xc8] sm:$0xf] %v1145
    %1210 = vst [vmem:[%s3 + $0xcc] sm:$0xf] %v1146
    %1211 = vst [vmem:[%s3 + $0xd0] sm:$0xf] %v1147
    %1212 = vst [vmem:[%s3 + $0xd4] sm:$0xf] %v1148
    %1213 = vst [vmem:[%s3 + $0xd8] sm:$0xf] %v1149
    %1214 = vst [vmem:[%s3 + $0xdc] sm:$0xf] %v1150
    %1215 = vst [vmem:[%s3 + $0xe0] sm:$0xf] %v1151
    %1216 = vst [vmem:[%s3 + $0xe4] sm:$0xf] %v1152
    %1217 = vst [vmem:[%s3 + $0xe8] sm:$0xf] %v1153
    %1218 = vst [vmem:[%s3 + $0xec] sm:$0xf] %v1154
    %1219 = vst [vmem:[%s3 + $0xf0] sm:$0xf] %v1155
    %1220 = vst [vmem:[%s3 + $0xf4] sm:$0xf] %v1156
    %1221 = vst [vmem:[%s3 + $0xf8] sm:$0xf] %v1157
    %1222 = vst [vmem:[%s3 + $0xfc] sm:$0xf] %v1158
  $region21: #{_lambda_.8} parent=0 // pred_fallthru
    _
  // Predicated region
  $region22: #{_lambda_.8} parent=0 // pred_check
    _
  $region23: #{_lambda_.8} parent=0 // pred_check_branch
    %1224 = sbr.rel (0) target = $region25
  $region24: #{_lambda_.8} parent=0 // pred_region
    _
  $region25: #{_lambda_.8} parent=0 // pred_fallthru
    _
  // Predicated region
  $region26: #{_lambda_.8} parent=0 // pred_check
    _
  $region27: #{_lambda_.8} parent=0 // pred_check_branch
    %1226 = sbr.rel (0) target = $region29
  $region28: #{_lambda_.8} parent=0 // pred_region
    _
  $region29: #{_lambda_.8} parent=0 // pred_fallthru
    _

// kernel: _lambda_.9
$region0: #{_lambda_.9}
  #allocation0 [shape = 'u32[]', space=smem, size = 0x4, offset = 0x4, fixed_abs, tag = 'smem constant byte address 0x4 - core index']
  #allocation1 [shape = 'u32[72,128]{1,0:T(1,128)}', space=vmem, size = 0x9000, scoped, tag = 'internal scratch']
  #allocation2 [shape = 'f32[128,128]{1,0:T(8,128)}', space=vmem, size = 0x10000, scoped, tag = 'scratch operand']
  %s0 = inlined_call_operand.vmem [shape: bf16[128,128], index: 0, kind: input, shape index: {}]
  %s1 = inlined_call_operand.vmem [shape: bf16[128,128], index: 1, kind: input, shape index: {}]
  %s2 = inlined_call_operand.vmem [shape: bf16[128,128], index: 2, kind: output, shape index: {0}]
  %s3 = inlined_call_operand.vmem [shape: f32[8,128], index: 3, kind: output, shape index: {1}]
  %s4 = inlined_call_operand.vmem [shape: f32[8,128], index: 4, kind: output, shape index: {2}]
  %5 = xla_tuple %s2, %s3, %s4
  %s6 = sld [smem:[#allocation0]]
  $region42: #{_lambda_.9} parent=0
    _
  %s8 = ssub.s32 1, %s6
  %s9 = scalar_select 0, %s8, %s6
  // Predicated region
  $region2: #{_lambda_.9} parent=0 // pred_check
    _
  $region3: #{_lambda_.9} parent=0 // pred_check_branch
    %11 = sbr.rel (0) target = $region5
  $region4: #{_lambda_.9} parent=0 // pred_region
    _
  $region5: #{_lambda_.9} parent=0 // pred_fallthru
    _
  // Predicated region
  $region6: #{_lambda_.9} parent=0 // pred_check
    _
  $region7: #{_lambda_.9} parent=0 // pred_check_branch
    %13 = sbr.rel (0) target = $region9
  $region8: #{_lambda_.9} parent=0 // pred_region
    _
  $region9: #{_lambda_.9} parent=0 // pred_fallthru
    _
  %p14 = scmp.eq.s32.totalorder 0, 0
  // Predicated region
  $region10: #{_lambda_.9} parent=0 // pred_check
    %p15 = pneg %p14
  $region11: #{_lambda_.9} parent=0 // pred_check_branch
    %17 = sbr.rel (%p15) target = $region13
  $region12: #{_lambda_.9} parent=0 // pred_region
    %18 = vst [vmem:[#allocation2] sm:$0xff] 0.0
    %19 = vst [vmem:[#allocation2 + $0x8] sm:$0xff] 0.0
    %20 = vst [vmem:[#allocation2 + $0x10] sm:$0xff] 0.0
    %21 = vst [vmem:[#allocation2 + $0x18] sm:$0xff] 0.0
    %22 = vst [vmem:[#allocation2 + $0x20] sm:$0xff] 0.0
    %23 = vst [vmem:[#allocation2 + $0x28] sm:$0xff] 0.0
    %24 = vst [vmem:[#allocation2 + $0x30] sm:$0xff] 0.0
    %25 = vst [vmem:[#allocation2 + $0x38] sm:$0xff] 0.0
    %26 = vst [vmem:[#allocation2 + $0x40] sm:$0xff] 0.0
    %27 = vst [vmem:[#allocation2 + $0x48] sm:$0xff] 0.0
    %28 = vst [vmem:[#allocation2 + $0x50] sm:$0xff] 0.0
    %29 = vst [vmem:[#allocation2 + $0x58] sm:$0xff] 0.0
    %30 = vst [vmem:[#allocation2 + $0x60] sm:$0xff] 0.0
    %31 = vst [vmem:[#allocation2 + $0x68] sm:$0xff] 0.0
    %32 = vst [vmem:[#allocation2 + $0x70] sm:$0xff] 0.0
    %33 = vst [vmem:[#allocation2 + $0x78] sm:$0xff] 0.0
  $region13: #{_lambda_.9} parent=0 // pred_fallthru
    _
  %s34 = smul.u32 0, 128
  %v35 = vld [vmem:[#allocation2] sm:$0xff]
  %v36 = vld [vmem:[#allocation2 + $0x8] sm:$0xff]
  %v37 = vld [vmem:[#allocation2 + $0x10] sm:$0xff]
  %v38 = vld [vmem:[#allocation2 + $0x18] sm:$0xff]
  %v39 = vld [vmem:[#allocation2 + $0x20] sm:$0xff]
  %v40 = vld [vmem:[#allocation2 + $0x28] sm:$0xff]
  %v41 = vld [vmem:[#allocation2 + $0x30] sm:$0xff]
  %v42 = vld [vmem:[#allocation2 + $0x38] sm:$0xff]
  %v43 = vld [vmem:[#allocation2 + $0x40] sm:$0xff]
  %v44 = vld [vmem:[#allocation2 + $0x48] sm:$0xff]
  %v45 = vld [vmem:[#allocation2 + $0x50] sm:$0xff]
  %v46 = vld [vmem:[#allocation2 + $0x58] sm:$0xff]
  %v47 = vld [vmem:[#allocation2 + $0x60] sm:$0xff]
  %v48 = vld [vmem:[#allocation2 + $0x68] sm:$0xff]
  %v49 = vld [vmem:[#allocation2 + $0x70] sm:$0xff]
  %v50 = vld [vmem:[#allocation2 + $0x78] sm:$0xff]
  %v51 = vld [vmem:[%s0] sm:$0xf]
  %v52 = vld [vmem:[%s0 + $0x4] sm:$0xf]
  %v53 = vld [vmem:[%s0 + $0x8] sm:$0xf]
  %v54 = vld [vmem:[%s0 + $0xc] sm:$0xf]
  %v55 = vld [vmem:[%s0 + $0x10] sm:$0xf]
  %v56 = vld [vmem:[%s0 + $0x14] sm:$0xf]
  %v57 = vld [vmem:[%s0 + $0x18] sm:$0xf]
  %v58 = vld [vmem:[%s0 + $0x1c] sm:$0xf]
  %v59 = vld [vmem:[%s0 + $0x20] sm:$0xf]
  %v60 = vld [vmem:[%s0 + $0x24] sm:$0xf]
  %v61 = vld [vmem:[%s0 + $0x28] sm:$0xf]
  %v62 = vld [vmem:[%s0 + $0x2c] sm:$0xf]
  %v63 = vld [vmem:[%s0 + $0x30] sm:$0xf]
  %v64 = vld [vmem:[%s0 + $0x34] sm:$0xf]
  %v65 = vld [vmem:[%s0 + $0x38] sm:$0xf]
  %v66 = vld [vmem:[%s0 + $0x3c] sm:$0xf]
  %s67 = sshra.s32 %s34, 3
  %s68 = sand.u32 %s34, 7
  %s69 = smul.addr %s67, 4
  %s70 = scalar_lea.vmem %s1, %s69
  %v71 = vld [vmem:[%s70] sm:$0xf]
  %v72 = vld [vmem:[%s70 + $0x4] sm:$0xf]
  %v73 = vld [vmem:[%s70 + $0x8] sm:$0xf]
  %v74 = vld [vmem:[%s70 + $0xc] sm:$0xf]
  %v75 = vld [vmem:[%s70 + $0x10] sm:$0xf]
  %v76 = vld [vmem:[%s70 + $0x14] sm:$0xf]
  %v77 = vld [vmem:[%s70 + $0x18] sm:$0xf]
  %v78 = vld [vmem:[%s70 + $0x1c] sm:$0xf]
  %v79 = vld [vmem:[%s70 + $0x20] sm:$0xf]
  %v80 = vld [vmem:[%s70 + $0x24] sm:$0xf]
  %v81 = vld [vmem:[%s70 + $0x28] sm:$0xf]
  %v82 = vld [vmem:[%s70 + $0x2c] sm:$0xf]
  %v83 = vld [vmem:[%s70 + $0x30] sm:$0xf]
  %v84 = vld [vmem:[%s70 + $0x34] sm:$0xf]
  %v85 = vld [vmem:[%s70 + $0x38] sm:$0xf]
  %v86 = vld [vmem:[%s70 + $0x3c] sm:$0xf]
  %v103 = vunpack.c.l.b16 %v51
  %v104 = vunpack.c.l.b16 %v52
  %v105 = vunpack.c.l.b16 %v53
  %v106 = vunpack.c.l.b16 %v54
  %v107 = vunpack.c.l.b16 %v55
  %v108 = vunpack.c.l.b16 %v56
  %v109 = vunpack.c.l.b16 %v57
  %v110 = vunpack.c.l.b16 %v58
  %v111 = vunpack.c.l.b16 %v59
  %v112 = vunpack.c.l.b16 %v60
  %v113 = vunpack.c.l.b16 %v61
  %v114 = vunpack.c.l.b16 %v62
  %v115 = vunpack.c.l.b16 %v63
  %v116 = vunpack.c.l.b16 %v64
  %v117 = vunpack.c.l.b16 %v65
  %v118 = vunpack.c.l.b16 %v66
  %v119 = vpack.c.b16 %v104, %v103
  %v120 = vpack.c.b16 %v106, %v105
  %v121 = vpack.c.b16 %v108, %v107
  %v122 = vpack.c.b16 %v110, %v109
  %v123 = vpack.c.b16 %v112, %v111
  %v124 = vpack.c.b16 %v114, %v113
  %v125 = vpack.c.b16 %v116, %v115
  %v126 = vpack.c.b16 %v118, %v117
  %v151 = vunpack.c.l.b16 %v71
  %v152 = vunpack.c.l.b16 %v72
  %v153 = vunpack.c.l.b16 %v73
  %v154 = vunpack.c.l.b16 %v74
  %v155 = vunpack.c.l.b16 %v75
  %v156 = vunpack.c.l.b16 %v76
  %v157 = vunpack.c.l.b16 %v77
  %v158 = vunpack.c.l.b16 %v78
  %v159 = vunpack.c.l.b16 %v79
  %v160 = vunpack.c.l.b16 %v80
  %v161 = vunpack.c.l.b16 %v81
  %v162 = vunpack.c.l.b16 %v82
  %v163 = vunpack.c.l.b16 %v83
  %v164 = vunpack.c.l.b16 %v84
  %v165 = vunpack.c.l.b16 %v85
  %v166 = vunpack.c.l.b16 %v86
  %v167 = vpack.c.b16 %v152, %v151
  %v168 = vpack.c.b16 %v154, %v153
  %v169 = vpack.c.b16 %v156, %v155
  %v170 = vpack.c.b16 %v158, %v157
  %v171 = vpack.c.b16 %v160, %v159
  %v172 = vpack.c.b16 %v162, %v161
  %v173 = vpack.c.b16 %v164, %v163
  %v174 = vpack.c.b16 %v166, %v165
  %183 = vmatpush.bf16.msra.mxu0 %v174
  %184 = vmatpush.bf16.msra.mxu0 %v173
  %185 = vmatpush.bf16.msra.mxu0 %v172
  %186 = vmatpush.bf16.msra.mxu0 %v171
  %187 = vmatpush.bf16.msra.mxu0 %v170
  %188 = vmatpush.bf16.msra.mxu0 %v169
  %189 = vmatpush.bf16.msra.mxu0 %v168
  %190 = vmatpush.bf16.msra.mxu0 %v167
  %191 = vmatmul.bf16.gmra.mxu0 %v119
  %v192 = vpop.f32.mrf.mxu0
  %v193 = vadd.f32 0.0, %v192
  %v194 = vpop.f32.mrf.mxu0
  %v195 = vadd.f32 0.0, %v194
  %196 = vmatmul.bf16.gmra.mxu0 %v120
  %v197 = vpop.f32.mrf.mxu0
  %v198 = vadd.f32 0.0, %v197
  %v199 = vpop.f32.mrf.mxu0
  %v200 = vadd.f32 0.0, %v199
  %201 = vmatmul.bf16.gmra.mxu0 %v121
  %v202 = vpop.f32.mrf.mxu0
  %v203 = vadd.f32 0.0, %v202
  %v204 = vpop.f32.mrf.mxu0
  %v205 = vadd.f32 0.0, %v204
  %206 = vmatmul.bf16.gmra.mxu0 %v122
  %v207 = vpop.f32.mrf.mxu0
  %v208 = vadd.f32 0.0, %v207
  %v209 = vpop.f32.mrf.mxu0
  %v210 = vadd.f32 0.0, %v209
  %211 = vmatmul.bf16.gmra.mxu0 %v123
  %v212 = vpop.f32.mrf.mxu0
  %v213 = vadd.f32 0.0, %v212
  %v214 = vpop.f32.mrf.mxu0
  %v215 = vadd.f32 0.0, %v214
  %216 = vmatmul.bf16.gmra.mxu0 %v124
  %v217 = vpop.f32.mrf.mxu0
  %v218 = vadd.f32 0.0, %v217
  %v219 = vpop.f32.mrf.mxu0
  %v220 = vadd.f32 0.0, %v219
  %221 = vmatmul.bf16.gmra.mxu0 %v125
  %v222 = vpop.f32.mrf.mxu0
  %v223 = vadd.f32 0.0, %v222
  %v224 = vpop.f32.mrf.mxu0
  %v225 = vadd.f32 0.0, %v224
  %226 = vmatmul.bf16.gmra.mxu0 %v126
  %v227 = vpop.f32.mrf.mxu0
  %v228 = vadd.f32 0.0, %v227
  %v229 = vpop.f32.mrf.mxu0
  %v230 = vadd.f32 0.0, %v229
  %231 = vdwg.mxu0
  %v232 = vadd.f32 %v35, %v193
  %v233 = vadd.f32 %v36, %v195
  %v234 = vadd.f32 %v37, %v198
  %v235 = vadd.f32 %v38, %v200
  %v236 = vadd.f32 %v39, %v203
  %v237 = vadd.f32 %v40, %v205
  %v238 = vadd.f32 %v41, %v208
  %v239 = vadd.f32 %v42, %v210
  %v240 = vadd.f32 %v43, %v213
  %v241 = vadd.f32 %v44, %v215
  %v242 = vadd.f32 %v45, %v218
  %v243 = vadd.f32 %v46, %v220
  %v244 = vadd.f32 %v47, %v223
  %v245 = vadd.f32 %v48, %v225
  %v246 = vadd.f32 %v49, %v228
  %v247 = vadd.f32 %v50, %v230
  %248 = vst [vmem:[#allocation2] sm:$0xff] %v232
  %249 = vst [vmem:[#allocation2 + $0x8] sm:$0xff] %v233
  %250 = vst [vmem:[#allocation2 + $0x10] sm:$0xff] %v234
  %251 = vst [vmem:[#allocation2 + $0x18] sm:$0xff] %v235
  %252 = vst [vmem:[#allocation2 + $0x20] sm:$0xff] %v236
  %253 = vst [vmem:[#allocation2 + $0x28] sm:$0xff] %v237
  %254 = vst [vmem:[#allocation2 + $0x30] sm:$0xff] %v238
  %255 = vst [vmem:[#allocation2 + $0x38] sm:$0xff] %v239
  %256 = vst [vmem:[#allocation2 + $0x40] sm:$0xff] %v240
  %257 = vst [vmem:[#allocation2 + $0x48] sm:$0xff] %v241
  %258 = vst [vmem:[#allocation2 + $0x50] sm:$0xff] %v242
  %259 = vst [vmem:[#allocation2 + $0x58] sm:$0xff] %v243
  %260 = vst [vmem:[#allocation2 + $0x60] sm:$0xff] %v244
  %261 = vst [vmem:[#allocation2 + $0x68] sm:$0xff] %v245
  %262 = vst [vmem:[#allocation2 + $0x70] sm:$0xff] %v246
  %263 = vst [vmem:[#allocation2 + $0x78] sm:$0xff] %v247
  // Predicated region
  $region14: #{_lambda_.9} parent=0 // pred_check
    %p264 = pneg %p14
  $region15: #{_lambda_.9} parent=0 // pred_check_branch
    %266 = sbr.rel (%p264) target = $region17
  $region16: #{_lambda_.9} parent=0 // pred_region
    %v267 = vld [vmem:[#allocation2] sm:$0xff]
    %v268 = vld [vmem:[#allocation2 + $0x8] sm:$0xff]
    %v269 = vld [vmem:[#allocation2 + $0x10] sm:$0xff]
    %v270 = vld [vmem:[#allocation2 + $0x18] sm:$0xff]
    %v271 = vld [vmem:[#allocation2 + $0x20] sm:$0xff]
    %v272 = vld [vmem:[#allocation2 + $0x28] sm:$0xff]
    %v273 = vld [vmem:[#allocation2 + $0x30] sm:$0xff]
    %v274 = vld [vmem:[#allocation2 + $0x38] sm:$0xff]
    %v275 = vld [vmem:[#allocation2 + $0x40] sm:$0xff]
    %v276 = vld [vmem:[#allocation2 + $0x48] sm:$0xff]
    %v277 = vld [vmem:[#allocation2 + $0x50] sm:$0xff]
    %v278 = vld [vmem:[#allocation2 + $0x58] sm:$0xff]
    %v279 = vld [vmem:[#allocation2 + $0x60] sm:$0xff]
    %v280 = vld [vmem:[#allocation2 + $0x68] sm:$0xff]
    %v281 = vld [vmem:[#allocation2 + $0x70] sm:$0xff]
    %v282 = vld [vmem:[#allocation2 + $0x78] sm:$0xff]
    %v283 = vpack.c.bf16 %v267, %v267
    %v284 = vpack.c.bf16 %v268, %v268
    %v285 = vpack.c.bf16 %v269, %v269
    %v286 = vpack.c.bf16 %v270, %v270
    %v287 = vpack.c.bf16 %v271, %v271
    %v288 = vpack.c.bf16 %v272, %v272
    %v289 = vpack.c.bf16 %v273, %v273
    %v290 = vpack.c.bf16 %v274, %v274
    %v291 = vpack.c.bf16 %v275, %v275
    %v292 = vpack.c.bf16 %v276, %v276
    %v293 = vpack.c.bf16 %v277, %v277
    %v294 = vpack.c.bf16 %v278, %v278
    %v295 = vpack.c.bf16 %v279, %v279
    %v296 = vpack.c.bf16 %v280, %v280
    %v297 = vpack.c.bf16 %v281, %v281
    %v298 = vpack.c.bf16 %v282, %v282
    %299 = vst [vmem:[%s2] sm:$0xf] %v283
    %300 = vst [vmem:[%s2 + $0x4] sm:$0xf] %v284
    %301 = vst [vmem:[%s2 + $0x8] sm:$0xf] %v285
    %302 = vst [vmem:[%s2 + $0xc] sm:$0xf] %v286
    %303 = vst [vmem:[%s2 + $0x10] sm:$0xf] %v287
    %304 = vst [vmem:[%s2 + $0x14] sm:$0xf] %v288
    %305 = vst [vmem:[%s2 + $0x18] sm:$0xf] %v289
    %306 = vst [vmem:[%s2 + $0x1c] sm:$0xf] %v290
    %307 = vst [vmem:[%s2 + $0x20] sm:$0xf] %v291
    %308 = vst [vmem:[%s2 + $0x24] sm:$0xf] %v292
    %309 = vst [vmem:[%s2 + $0x28] sm:$0xf] %v293
    %310 = vst [vmem:[%s2 + $0x2c] sm:$0xf] %v294
    %311 = vst [vmem:[%s2 + $0x30] sm:$0xf] %v295
    %312 = vst [vmem:[%s2 + $0x34] sm:$0xf] %v296
    %313 = vst [vmem:[%s2 + $0x38] sm:$0xf] %v297
    %314 = vst [vmem:[%s2 + $0x3c] sm:$0xf] %v298
    %v315 = vadd.f32 %v267, %v268
    %v316 = vadd.f32 %v315, %v269
    %v317 = vadd.f32 %v316, %v270
    %v318 = vadd.f32 %v317, %v271
    %v319 = vadd.f32 %v318, %v272
    %v320 = vadd.f32 %v319, %v273
    %v321 = vadd.f32 %v320, %v274
    %v322 = vadd.f32 %v321, %v275
    %v323 = vadd.f32 %v322, %v276
    %v324 = vadd.f32 %v323, %v277
    %v325 = vadd.f32 %v324, %v278
    %v326 = vadd.f32 %v325, %v279
    %v327 = vadd.f32 %v326, %v280
    %v328 = vadd.f32 %v327, %v281
    %v329 = vadd.f32 %v328, %v282
    %v330 = vrot.slane %v329, 4
    %v331 = vadd.f32 %v329, %v330
    %v332 = vrot.slane %v331, 2
    %v333 = vadd.f32 %v331, %v332
    %v334 = vrot.slane %v333, 1
    %v335 = vadd.f32 %v333, %v334
    %v336 = vmul.f32 %v267, %v267
    %v337 = vmul.f32 %v268, %v268
    %v338 = vmul.f32 %v269, %v269
    %v339 = vmul.f32 %v270, %v270
    %v340 = vmul.f32 %v271, %v271
    %v341 = vmul.f32 %v272, %v272
    %v342 = vmul.f32 %v273, %v273
    %v343 = vmul.f32 %v274, %v274
    %v344 = vmul.f32 %v275, %v275
    %v345 = vmul.f32 %v276, %v276
    %v346 = vmul.f32 %v277, %v277
    %v347 = vmul.f32 %v278, %v278
    %v348 = vmul.f32 %v279, %v279
    %v349 = vmul.f32 %v280, %v280
    %v350 = vmul.f32 %v281, %v281
    %v351 = vmul.f32 %v282, %v282
    %v352 = vadd.f32 %v336, %v337
    %v353 = vadd.f32 %v352, %v338
    %v354 = vadd.f32 %v353, %v339
    %v355 = vadd.f32 %v354, %v340
    %v356 = vadd.f32 %v355, %v341
    %v357 = vadd.f32 %v356, %v342
    %v358 = vadd.f32 %v357, %v343
    %v359 = vadd.f32 %v358, %v344
    %v360 = vadd.f32 %v359, %v345
    %v361 = vadd.f32 %v360, %v346
    %v362 = vadd.f32 %v361, %v347
    %v363 = vadd.f32 %v362, %v348
    %v364 = vadd.f32 %v363, %v349
    %v365 = vadd.f32 %v364, %v350
    %v366 = vadd.f32 %v365, %v351
    %v367 = vrot.slane %v366, 4
    %v368 = vadd.f32 %v366, %v367
    %v369 = vrot.slane %v368, 2
    %v370 = vadd.f32 %v368, %v369
    %v371 = vrot.slane %v370, 1
    %v372 = vadd.f32 %v370, %v371
    %373 = vst [vmem:[%s3] sm:$0xff] %v335
    %374 = vst [vmem:[%s4] sm:$0xff] %v372
  $region17: #{_lambda_.9} parent=0 // pred_fallthru
    _
  // Predicated region
  $region18: #{_lambda_.9} parent=0 // pred_check
    _
  $region19: #{_lambda_.9} parent=0 // pred_check_branch
    %376 = sbr.rel (0) target = $region21
  $region20: #{_lambda_.9} parent=0 // pred_region
    _
  $region21: #{_lambda_.9} parent=0 // pred_fallthru
    _
  // Predicated region
  $region22: #{_lambda_.9} parent=0 // pred_check
    _
  $region23: #{_lambda_.9} parent=0 // pred_check_branch
    %378 = sbr.rel (0) target = $region25
  $region24: #{_lambda_.9} parent=0 // pred_region
    _
  $region25: #{_lambda_.9} parent=0 // pred_fallthru
    _
  // Predicated region
  $region26: #{_lambda_.9} parent=0 // pred_check
    _
  $region27: #{_lambda_.9} parent=0 // pred_check_branch
    %380 = sbr.rel (0) target = $region29
  $region28: #{_lambda_.9} parent=0 // pred_region
    _
  $region29: #{_lambda_.9} parent=0 // pred_fallthru
    _
  // Predicated region
  $region30: #{_lambda_.9} parent=0 // pred_check
    _
  $region31: #{_lambda_.9} parent=0 // pred_check_branch
    %382 = sbr.rel (0) target = $region33
  $region32: #{_lambda_.9} parent=0 // pred_region
    _
  $region33: #{_lambda_.9} parent=0 // pred_fallthru
    _
  // Predicated region
  $region34: #{_lambda_.9} parent=0 // pred_check
    _
  $region35: #{_lambda_.9} parent=0 // pred_check_branch
    %384 = sbr.rel (0) target = $region37
  $region36: #{_lambda_.9} parent=0 // pred_region
    _
  $region37: #{_lambda_.9} parent=0 // pred_fallthru
    _
  // Predicated region
  $region38: #{_lambda_.9} parent=0 // pred_check
    _
  $region39: #{_lambda_.9} parent=0 // pred_check_branch
    %386 = sbr.rel (0) target = $region41
  $region40: #{_lambda_.9} parent=0 // pred_region
    _
  $region41: #{_lambda_.9} parent=0 // pred_fallthru
    _

// kernel: _lambda_.10
$region0: #{_lambda_.10}
  #allocation0 [shape = 'u32[]', space=smem, size = 0x4, offset = 0x4, fixed_abs, tag = 'smem constant byte address 0x4 - core index']
  #allocation1 [shape = 'u32[72,128]{1,0:T(1,128)}', space=vmem, size = 0x9000, scoped, tag = 'internal scratch']
  %s0 = inlined_call_operand.vmem [shape: bf16[128,128], index: 0, kind: input, shape index: {}]
  %s1 = inlined_call_operand.vmem [shape: f32[1,128], index: 1, kind: input, shape index: {}]
  %s2 = inlined_call_operand.vmem [shape: f32[1,128], index: 2, kind: input, shape index: {}]
  %s3 = inlined_call_operand.vmem [shape: bf16[128,128], index: 3, kind: output, shape index: {}]
  %s4 = sld [smem:[#allocation0]]
  $region22: #{_lambda_.10} parent=0
    _
  %s6 = ssub.s32 1, %s4
  %s7 = scalar_select 0, %s6, %s4
  // Predicated region
  $region2: #{_lambda_.10} parent=0 // pred_check
    _
  $region3: #{_lambda_.10} parent=0 // pred_check_branch
    %9 = sbr.rel (0) target = $region5
  $region4: #{_lambda_.10} parent=0 // pred_region
    _
  $region5: #{_lambda_.10} parent=0 // pred_fallthru
    _
  // Predicated region
  $region6: #{_lambda_.10} parent=0 // pred_check
    _
  $region7: #{_lambda_.10} parent=0 // pred_check_branch
    %11 = sbr.rel (0) target = $region9
  $region8: #{_lambda_.10} parent=0 // pred_region
    _
  $region9: #{_lambda_.10} parent=0 // pred_fallthru
    _
  // Predicated region
  $region10: #{_lambda_.10} parent=0 // pred_check
    _
  $region11: #{_lambda_.10} parent=0 // pred_check_branch
    %13 = sbr.rel (0) target = $region13
  $region12: #{_lambda_.10} parent=0 // pred_region
    _
  $region13: #{_lambda_.10} parent=0 // pred_fallthru
    _
  %v14 = vld [vmem:[%s0] sm:$0xf]
  %v15 = vld [vmem:[%s0 + $0x4] sm:$0xf]
  %v16 = vld [vmem:[%s0 + $0x8] sm:$0xf]
  %v17 = vld [vmem:[%s0 + $0xc] sm:$0xf]
  %v18 = vld [vmem:[%s0 + $0x10] sm:$0xf]
  %v19 = vld [vmem:[%s0 + $0x14] sm:$0xf]
  %v20 = vld [vmem:[%s0 + $0x18] sm:$0xf]
  %v21 = vld [vmem:[%s0 + $0x1c] sm:$0xf]
  %v22 = vld [vmem:[%s0 + $0x20] sm:$0xf]
  %v23 = vld [vmem:[%s0 + $0x24] sm:$0xf]
  %v24 = vld [vmem:[%s0 + $0x28] sm:$0xf]
  %v25 = vld [vmem:[%s0 + $0x2c] sm:$0xf]
  %v26 = vld [vmem:[%s0 + $0x30] sm:$0xf]
  %v27 = vld [vmem:[%s0 + $0x34] sm:$0xf]
  %v28 = vld [vmem:[%s0 + $0x38] sm:$0xf]
  %v29 = vld [vmem:[%s0 + $0x3c] sm:$0xf]
  %v30 = vunpack.c.l.bf16 %v14
  %v31 = vunpack.c.l.bf16 %v15
  %v32 = vunpack.c.l.bf16 %v16
  %v33 = vunpack.c.l.bf16 %v17
  %v34 = vunpack.c.l.bf16 %v18
  %v35 = vunpack.c.l.bf16 %v19
  %v36 = vunpack.c.l.bf16 %v20
  %v37 = vunpack.c.l.bf16 %v21
  %v38 = vunpack.c.l.bf16 %v22
  %v39 = vunpack.c.l.bf16 %v23
  %v40 = vunpack.c.l.bf16 %v24
  %v41 = vunpack.c.l.bf16 %v25
  %v42 = vunpack.c.l.bf16 %v26
  %v43 = vunpack.c.l.bf16 %v27
  %v44 = vunpack.c.l.bf16 %v28
  %v45 = vunpack.c.l.bf16 %v29
  %v46 = vld [vmem:[%s1] sm:$0x1]
  %v48 = vperm.slane %v46, 0
  %v50 = vmul.f32 %v30, %v48
  %v51 = vmul.f32 %v31, %v48
  %v52 = vmul.f32 %v32, %v48
  %v53 = vmul.f32 %v33, %v48
  %v54 = vmul.f32 %v34, %v48
  %v55 = vmul.f32 %v35, %v48
  %v56 = vmul.f32 %v36, %v48
  %v57 = vmul.f32 %v37, %v48
  %v58 = vmul.f32 %v38, %v48
  %v59 = vmul.f32 %v39, %v48
  %v60 = vmul.f32 %v40, %v48
  %v61 = vmul.f32 %v41, %v48
  %v62 = vmul.f32 %v42, %v48
  %v63 = vmul.f32 %v43, %v48
  %v64 = vmul.f32 %v44, %v48
  %v65 = vmul.f32 %v45, %v48
  %v66 = vld [vmem:[%s2] sm:$0x1]
  %v68 = vperm.slane %v66, 0
  %v70 = vadd.f32 %v50, %v68
  %v71 = vadd.f32 %v51, %v68
  %v72 = vadd.f32 %v52, %v68
  %v73 = vadd.f32 %v53, %v68
  %v74 = vadd.f32 %v54, %v68
  %v75 = vadd.f32 %v55, %v68
  %v76 = vadd.f32 %v56, %v68
  %v77 = vadd.f32 %v57, %v68
  %v78 = vadd.f32 %v58, %v68
  %v79 = vadd.f32 %v59, %v68
  %v80 = vadd.f32 %v60, %v68
  %v81 = vadd.f32 %v61, %v68
  %v82 = vadd.f32 %v62, %v68
  %v83 = vadd.f32 %v63, %v68
  %v84 = vadd.f32 %v64, %v68
  %v85 = vadd.f32 %v65, %v68
  %vm86 = vcmp.ge.f32.partialorder %v70, 0.0
  %vm87 = vcmp.ge.f32.partialorder %v71, 0.0
  %vm88 = vcmp.ge.f32.partialorder %v72, 0.0
  %vm89 = vcmp.ge.f32.partialorder %v73, 0.0
  %vm90 = vcmp.ge.f32.partialorder %v74, 0.0
  %vm91 = vcmp.ge.f32.partialorder %v75, 0.0
  %vm92 = vcmp.ge.f32.partialorder %v76, 0.0
  %vm93 = vcmp.ge.f32.partialorder %v77, 0.0
  %vm94 = vcmp.ge.f32.partialorder %v78, 0.0
  %vm95 = vcmp.ge.f32.partialorder %v79, 0.0
  %vm96 = vcmp.ge.f32.partialorder %v80, 0.0
  %vm97 = vcmp.ge.f32.partialorder %v81, 0.0
  %vm98 = vcmp.ge.f32.partialorder %v82, 0.0
  %vm99 = vcmp.ge.f32.partialorder %v83, 0.0
  %vm100 = vcmp.ge.f32.partialorder %v84, 0.0
  %vm101 = vcmp.ge.f32.partialorder %v85, 0.0
  %v102 = vmul.f32 %v70, 0.2
  %v103 = vmul.f32 %v71, 0.2
  %v104 = vmul.f32 %v72, 0.2
  %v105 = vmul.f32 %v73, 0.2
  %v106 = vmul.f32 %v74, 0.2
  %v107 = vmul.f32 %v75, 0.2
  %v108 = vmul.f32 %v76, 0.2
  %v109 = vmul.f32 %v77, 0.2
  %v110 = vmul.f32 %v78, 0.2
  %v111 = vmul.f32 %v79, 0.2
  %v112 = vmul.f32 %v80, 0.2
  %v113 = vmul.f32 %v81, 0.2
  %v114 = vmul.f32 %v82, 0.2
  %v115 = vmul.f32 %v83, 0.2
  %v116 = vmul.f32 %v84, 0.2
  %v117 = vmul.f32 %v85, 0.2
  %v118 = vsel %vm86, %v70, %v102
  %v119 = vsel %vm87, %v71, %v103
  %v120 = vsel %vm88, %v72, %v104
  %v121 = vsel %vm89, %v73, %v105
  %v122 = vsel %vm90, %v74, %v106
  %v123 = vsel %vm91, %v75, %v107
  %v124 = vsel %vm92, %v76, %v108
  %v125 = vsel %vm93, %v77, %v109
  %v126 = vsel %vm94, %v78, %v110
  %v127 = vsel %vm95, %v79, %v111
  %v128 = vsel %vm96, %v80, %v112
  %v129 = vsel %vm97, %v81, %v113
  %v130 = vsel %vm98, %v82, %v114
  %v131 = vsel %vm99, %v83, %v115
  %v132 = vsel %vm100, %v84, %v116
  %v133 = vsel %vm101, %v85, %v117
  %v134 = vpack.c.bf16 %v118, %v118
  %v135 = vpack.c.bf16 %v119, %v119
  %v136 = vpack.c.bf16 %v120, %v120
  %v137 = vpack.c.bf16 %v121, %v121
  %v138 = vpack.c.bf16 %v122, %v122
  %v139 = vpack.c.bf16 %v123, %v123
  %v140 = vpack.c.bf16 %v124, %v124
  %v141 = vpack.c.bf16 %v125, %v125
  %v142 = vpack.c.bf16 %v126, %v126
  %v143 = vpack.c.bf16 %v127, %v127
  %v144 = vpack.c.bf16 %v128, %v128
  %v145 = vpack.c.bf16 %v129, %v129
  %v146 = vpack.c.bf16 %v130, %v130
  %v147 = vpack.c.bf16 %v131, %v131
  %v148 = vpack.c.bf16 %v132, %v132
  %v149 = vpack.c.bf16 %v133, %v133
  %150 = vst [vmem:[%s3] sm:$0xf] %v134
  %151 = vst [vmem:[%s3 + $0x4] sm:$0xf] %v135
  %152 = vst [vmem:[%s3 + $0x8] sm:$0xf] %v136
  %153 = vst [vmem:[%s3 + $0xc] sm:$0xf] %v137
  %154 = vst [vmem:[%s3 + $0x10] sm:$0xf] %v138
  %155 = vst [vmem:[%s3 + $0x14] sm:$0xf] %v139
  %156 = vst [vmem:[%s3 + $0x18] sm:$0xf] %v140
  %157 = vst [vmem:[%s3 + $0x1c] sm:$0xf] %v141
  %158 = vst [vmem:[%s3 + $0x20] sm:$0xf] %v142
  %159 = vst [vmem:[%s3 + $0x24] sm:$0xf] %v143
  %160 = vst [vmem:[%s3 + $0x28] sm:$0xf] %v144
  %161 = vst [vmem:[%s3 + $0x2c] sm:$0xf] %v145
  %162 = vst [vmem:[%s3 + $0x30] sm:$0xf] %v146
  %163 = vst [vmem:[%s3 + $0x34] sm:$0xf] %v147
  %164 = vst [vmem:[%s3 + $0x38] sm:$0xf] %v148
  %165 = vst [vmem:[%s3 + $0x3c] sm:$0xf] %v149
  // Predicated region
  $region14: #{_lambda_.10} parent=0 // pred_check
    _
  $region15: #{_lambda_.10} parent=0 // pred_check_branch
    %167 = sbr.rel (0) target = $region17
  $region16: #{_lambda_.10} parent=0 // pred_region
    _
  $region17: #{_lambda_.10} parent=0 // pred_fallthru
    _
  // Predicated region
  $region18: #{_lambda_.10} parent=0 // pred_check
    _
  $region19: #{_lambda_.10} parent=0 // pred_check_branch
    %169 = sbr.rel (0) target = $region21
  $region20: #{_lambda_.10} parent=0 // pred_region
    _
  $region21: #{_lambda_.10} parent=0 // pred_fallthru
    _

// kernel: _lambda_.12
$region0: #{_lambda_.12}
  #allocation0 [shape = 'u32[]', space=smem, size = 0x4, offset = 0x4, fixed_abs, tag = 'smem constant byte address 0x4 - core index']
  #allocation1 [shape = 'u32[72,128]{1,0:T(1,128)}', space=vmem, size = 0x9000, scoped, tag = 'internal scratch']
  %s0 = inlined_call_operand.vmem [shape: bf16[32,128], index: 0, kind: input, shape index: {}]
  %s1 = inlined_call_operand.vmem [shape: f32[1,128], index: 1, kind: input, shape index: {}]
  %s2 = inlined_call_operand.vmem [shape: f32[1,128], index: 2, kind: input, shape index: {}]
  %s3 = inlined_call_operand.vmem [shape: bf16[32,128], index: 3, kind: output, shape index: {}]
  %s4 = sld [smem:[#allocation0]]
  $region22: #{_lambda_.12} parent=0
    _
  %s6 = ssub.s32 1, %s4
  %s7 = scalar_select 0, %s6, %s4
  // Predicated region
  $region2: #{_lambda_.12} parent=0 // pred_check
    _
  $region3: #{_lambda_.12} parent=0 // pred_check_branch
    %9 = sbr.rel (0) target = $region5
  $region4: #{_lambda_.12} parent=0 // pred_region
    _
  $region5: #{_lambda_.12} parent=0 // pred_fallthru
    _
  // Predicated region
  $region6: #{_lambda_.12} parent=0 // pred_check
    _
  $region7: #{_lambda_.12} parent=0 // pred_check_branch
    %11 = sbr.rel (0) target = $region9
  $region8: #{_lambda_.12} parent=0 // pred_region
    _
  $region9: #{_lambda_.12} parent=0 // pred_fallthru
    _
  // Predicated region
  $region10: #{_lambda_.12} parent=0 // pred_check
    _
  $region11: #{_lambda_.12} parent=0 // pred_check_branch
    %13 = sbr.rel (0) target = $region13
  $region12: #{_lambda_.12} parent=0 // pred_region
    _
  $region13: #{_lambda_.12} parent=0 // pred_fallthru
    _
  %v14 = vld [vmem:[%s0] sm:$0xf]
  %v15 = vld [vmem:[%s0 + $0x4] sm:$0xf]
  %v16 = vld [vmem:[%s0 + $0x8] sm:$0xf]
  %v17 = vld [vmem:[%s0 + $0xc] sm:$0xf]
  %v18 = vunpack.c.l.bf16 %v14
  %v19 = vunpack.c.l.bf16 %v15
  %v20 = vunpack.c.l.bf16 %v16
  %v21 = vunpack.c.l.bf16 %v17
  %v22 = vld [vmem:[%s1] sm:$0x1]
  %v24 = vperm.slane %v22, 0
  %v26 = vmul.f32 %v18, %v24
  %v27 = vmul.f32 %v19, %v24
  %v28 = vmul.f32 %v20, %v24
  %v29 = vmul.f32 %v21, %v24
  %v30 = vld [vmem:[%s2] sm:$0x1]
  %v32 = vperm.slane %v30, 0
  %v34 = vadd.f32 %v26, %v32
  %v35 = vadd.f32 %v27, %v32
  %v36 = vadd.f32 %v28, %v32
  %v37 = vadd.f32 %v29, %v32
  %vm38 = vcmp.ge.f32.partialorder %v34, 0.0
  %vm39 = vcmp.ge.f32.partialorder %v35, 0.0
  %vm40 = vcmp.ge.f32.partialorder %v36, 0.0
  %vm41 = vcmp.ge.f32.partialorder %v37, 0.0
  %v42 = vmul.f32 %v34, 0.2
  %v43 = vmul.f32 %v35, 0.2
  %v44 = vmul.f32 %v36, 0.2
  %v45 = vmul.f32 %v37, 0.2
  %v46 = vsel %vm38, %v34, %v42
  %v47 = vsel %vm39, %v35, %v43
  %v48 = vsel %vm40, %v36, %v44
  %v49 = vsel %vm41, %v37, %v45
  %v50 = vpack.c.bf16 %v46, %v46
  %v51 = vpack.c.bf16 %v47, %v47
  %v52 = vpack.c.bf16 %v48, %v48
  %v53 = vpack.c.bf16 %v49, %v49
  %54 = vst [vmem:[%s3] sm:$0xf] %v50
  %55 = vst [vmem:[%s3 + $0x4] sm:$0xf] %v51
  %56 = vst [vmem:[%s3 + $0x8] sm:$0xf] %v52
  %57 = vst [vmem:[%s3 + $0xc] sm:$0xf] %v53
  // Predicated region
  $region14: #{_lambda_.12} parent=0 // pred_check
    _
  $region15: #{_lambda_.12} parent=0 // pred_check_branch
    %59 = sbr.rel (0) target = $region17
  $region16: #{_lambda_.12} parent=0 // pred_region
    _
  $region17: #{_lambda_.12} parent=0 // pred_fallthru
    _
  // Predicated region
  $region18: #{_lambda_.12} parent=0 // pred_check
    _
  $region19: #{_lambda_.12} parent=0 // pred_check_branch
    %61 = sbr.rel (0) target = $region21
  $region20: #{_lambda_.12} parent=0 // pred_region
    _
  $region21: #{_lambda_.12} parent=0 // pred_fallthru
    _

// kernel: _lambda_.11
$region0: #{_lambda_.11}
  #allocation0 [shape = 'u32[]', space=smem, size = 0x4, offset = 0x4, fixed_abs, tag = 'smem constant byte address 0x4 - core index']
  #allocation1 [shape = 'u32[72,128]{1,0:T(1,128)}', space=vmem, size = 0x9000, scoped, tag = 'internal scratch']
  #allocation2 [shape = 'f32[32,128]{1,0:T(8,128)}', space=vmem, size = 0x4000, scoped, tag = 'scratch operand']
  %s0 = inlined_call_operand.vmem [shape: bf16[32,256], index: 0, kind: input, shape index: {}]
  %s1 = inlined_call_operand.vmem [shape: bf16[256,128], index: 1, kind: input, shape index: {}]
  %s2 = inlined_call_operand.vmem [shape: bf16[32,128], index: 2, kind: output, shape index: {0}]
  %s3 = inlined_call_operand.vmem [shape: f32[8,128], index: 3, kind: output, shape index: {1}]
  %s4 = inlined_call_operand.vmem [shape: f32[8,128], index: 4, kind: output, shape index: {2}]
  %5 = xla_tuple %s2, %s3, %s4
  %s6 = sld [smem:[#allocation0]]
  $region42: #{_lambda_.11} parent=0
    _
  %s8 = ssub.s32 1, %s6
  %s9 = scalar_select 0, %s8, %s6
  // Predicated region
  $region2: #{_lambda_.11} parent=0 // pred_check
    _
  $region3: #{_lambda_.11} parent=0 // pred_check_branch
    %11 = sbr.rel (0) target = $region5
  $region4: #{_lambda_.11} parent=0 // pred_region
    _
  $region5: #{_lambda_.11} parent=0 // pred_fallthru
    _
  // Predicated region
  $region6: #{_lambda_.11} parent=0 // pred_check
    _
  $region7: #{_lambda_.11} parent=0 // pred_check_branch
    %13 = sbr.rel (0) target = $region9
  $region8: #{_lambda_.11} parent=0 // pred_region
    _
  $region9: #{_lambda_.11} parent=0 // pred_fallthru
    _
  %p14 = scmp.eq.s32.totalorder 0, 0
  // Predicated region
  $region10: #{_lambda_.11} parent=0 // pred_check
    %p15 = pneg %p14
  $region11: #{_lambda_.11} parent=0 // pred_check_branch
    %17 = sbr.rel (%p15) target = $region13
  $region12: #{_lambda_.11} parent=0 // pred_region
    %18 = vst [vmem:[#allocation2] sm:$0xff] 0.0
    %19 = vst [vmem:[#allocation2 + $0x8] sm:$0xff] 0.0
    %20 = vst [vmem:[#allocation2 + $0x10] sm:$0xff] 0.0
    %21 = vst [vmem:[#allocation2 + $0x18] sm:$0xff] 0.0
  $region13: #{_lambda_.11} parent=0 // pred_fallthru
    _
  %s22 = smul.u32 0, 256
  %v23 = vld [vmem:[#allocation2] sm:$0xff]
  %v24 = vld [vmem:[#allocation2 + $0x8] sm:$0xff]
  %v25 = vld [vmem:[#allocation2 + $0x10] sm:$0xff]
  %v26 = vld [vmem:[#allocation2 + $0x18] sm:$0xff]
  %v27 = vld [vmem:[%s0] sm:$0xff]
  %v28 = vld [vmem:[%s0 + $0x8] sm:$0xff]
  %v29 = vld [vmem:[%s0 + $0x10] sm:$0xff]
  %v30 = vld [vmem:[%s0 + $0x18] sm:$0xff]
  %s31 = sshra.s32 %s22, 3
  %s32 = sand.u32 %s22, 7
  %s33 = smul.addr %s31, 4
  %s34 = scalar_lea.vmem %s1, %s33
  %v35 = vld [vmem:[%s34] sm:$0xf]
  %v36 = vld [vmem:[%s34 + $0x4] sm:$0xf]
  %v37 = vld [vmem:[%s34 + $0x8] sm:$0xf]
  %v38 = vld [vmem:[%s34 + $0xc] sm:$0xf]
  %v39 = vld [vmem:[%s34 + $0x10] sm:$0xf]
  %v40 = vld [vmem:[%s34 + $0x14] sm:$0xf]
  %v41 = vld [vmem:[%s34 + $0x18] sm:$0xf]
  %v42 = vld [vmem:[%s34 + $0x1c] sm:$0xf]
  %v43 = vld [vmem:[%s34 + $0x20] sm:$0xf]
  %v44 = vld [vmem:[%s34 + $0x24] sm:$0xf]
  %v45 = vld [vmem:[%s34 + $0x28] sm:$0xf]
  %v46 = vld [vmem:[%s34 + $0x2c] sm:$0xf]
  %v47 = vld [vmem:[%s34 + $0x30] sm:$0xf]
  %v48 = vld [vmem:[%s34 + $0x34] sm:$0xf]
  %v49 = vld [vmem:[%s34 + $0x38] sm:$0xf]
  %v50 = vld [vmem:[%s34 + $0x3c] sm:$0xf]
  %v51 = vld [vmem:[%s34 + $0x40] sm:$0xf]
  %v52 = vld [vmem:[%s34 + $0x44] sm:$0xf]
  %v53 = vld [vmem:[%s34 + $0x48] sm:$0xf]
  %v54 = vld [vmem:[%s34 + $0x4c] sm:$0xf]
  %v55 = vld [vmem:[%s34 + $0x50] sm:$0xf]
  %v56 = vld [vmem:[%s34 + $0x54] sm:$0xf]
  %v57 = vld [vmem:[%s34 + $0x58] sm:$0xf]
  %v58 = vld [vmem:[%s34 + $0x5c] sm:$0xf]
  %v59 = vld [vmem:[%s34 + $0x60] sm:$0xf]
  %v60 = vld [vmem:[%s34 + $0x64] sm:$0xf]
  %v61 = vld [vmem:[%s34 + $0x68] sm:$0xf]
  %v62 = vld [vmem:[%s34 + $0x6c] sm:$0xf]
  %v63 = vld [vmem:[%s34 + $0x70] sm:$0xf]
  %v64 = vld [vmem:[%s34 + $0x74] sm:$0xf]
  %v65 = vld [vmem:[%s34 + $0x78] sm:$0xf]
  %v66 = vld [vmem:[%s34 + $0x7c] sm:$0xf]
  %v71 = vunpack.c.l.b16 %v27
  %v72 = vunpack.c.h.b16 %v27
  %v73 = vunpack.c.l.b16 %v28
  %v74 = vunpack.c.h.b16 %v28
  %v75 = vunpack.c.l.b16 %v29
  %v76 = vunpack.c.h.b16 %v29
  %v77 = vunpack.c.l.b16 %v30
  %v78 = vunpack.c.h.b16 %v30
  %v79 = vpack.c.b16 %v73, %v71
  %v80 = vpack.c.b16 %v74, %v72
  %v81 = vpack.c.b16 %v77, %v75
  %v82 = vpack.c.b16 %v78, %v76
  %v119 = vunpack.c.l.b16 %v35
  %v120 = vunpack.c.l.b16 %v36
  %v121 = vunpack.c.l.b16 %v37
  %v122 = vunpack.c.l.b16 %v38
  %v123 = vunpack.c.l.b16 %v39
  %v124 = vunpack.c.l.b16 %v40
  %v125 = vunpack.c.l.b16 %v41
  %v126 = vunpack.c.l.b16 %v42
  %v127 = vunpack.c.l.b16 %v43
  %v128 = vunpack.c.l.b16 %v44
  %v129 = vunpack.c.l.b16 %v45
  %v130 = vunpack.c.l.b16 %v46
  %v131 = vunpack.c.l.b16 %v47
  %v132 = vunpack.c.l.b16 %v48
  %v133 = vunpack.c.l.b16 %v49
  %v134 = vunpack.c.l.b16 %v50
  %v135 = vunpack.c.l.b16 %v51
  %v136 = vunpack.c.l.b16 %v52
  %v137 = vunpack.c.l.b16 %v53
  %v138 = vunpack.c.l.b16 %v54
  %v139 = vunpack.c.l.b16 %v55
  %v140 = vunpack.c.l.b16 %v56
  %v141 = vunpack.c.l.b16 %v57
  %v142 = vunpack.c.l.b16 %v58
  %v143 = vunpack.c.l.b16 %v59
  %v144 = vunpack.c.l.b16 %v60
  %v145 = vunpack.c.l.b16 %v61
  %v146 = vunpack.c.l.b16 %v62
  %v147 = vunpack.c.l.b16 %v63
  %v148 = vunpack.c.l.b16 %v64
  %v149 = vunpack.c.l.b16 %v65
  %v150 = vunpack.c.l.b16 %v66
  %v151 = vpack.c.b16 %v120, %v119
  %v152 = vpack.c.b16 %v122, %v121
  %v153 = vpack.c.b16 %v124, %v123
  %v154 = vpack.c.b16 %v126, %v125
  %v155 = vpack.c.b16 %v128, %v127
  %v156 = vpack.c.b16 %v130, %v129
  %v157 = vpack.c.b16 %v132, %v131
  %v158 = vpack.c.b16 %v134, %v133
  %v159 = vpack.c.b16 %v136, %v135
  %v160 = vpack.c.b16 %v138, %v137
  %v161 = vpack.c.b16 %v140, %v139
  %v162 = vpack.c.b16 %v142, %v141
  %v163 = vpack.c.b16 %v144, %v143
  %v164 = vpack.c.b16 %v146, %v145
  %v165 = vpack.c.b16 %v148, %v147
  %v166 = vpack.c.b16 %v150, %v149
  %183 = vmatpush.bf16.msra.mxu0 %v158
  %184 = vmatpush.bf16.msra.mxu0 %v157
  %185 = vmatpush.bf16.msra.mxu0 %v156
  %186 = vmatpush.bf16.msra.mxu0 %v155
  %187 = vmatpush.bf16.msra.mxu0 %v154
  %188 = vmatpush.bf16.msra.mxu0 %v153
  %189 = vmatpush.bf16.msra.mxu0 %v152
  %190 = vmatpush.bf16.msra.mxu0 %v151
  %191 = vmatmul.bf16.gmra.mxu0 %v79
  %v192 = vpop.f32.mrf.mxu0
  %v193 = vadd.f32 0.0, %v192
  %v194 = vpop.f32.mrf.mxu0
  %v195 = vadd.f32 0.0, %v194
  %196 = vmatmul.bf16.gmra.mxu0 %v81
  %v197 = vpop.f32.mrf.mxu0
  %v198 = vadd.f32 0.0, %v197
  %v199 = vpop.f32.mrf.mxu0
  %v200 = vadd.f32 0.0, %v199
  %201 = vdwg.mxu0
  %202 = vmatpush.bf16.msra.mxu0 %v166
  %203 = vmatpush.bf16.msra.mxu0 %v165
  %204 = vmatpush.bf16.msra.mxu0 %v164
  %205 = vmatpush.bf16.msra.mxu0 %v163
  %206 = vmatpush.bf16.msra.mxu0 %v162
  %207 = vmatpush.bf16.msra.mxu0 %v161
  %208 = vmatpush.bf16.msra.mxu0 %v160
  %209 = vmatpush.bf16.msra.mxu0 %v159
  %210 = vmatmul.bf16.gmra.mxu0 %v80
  %v211 = vpop.f32.mrf.mxu0
  %v212 = vadd.f32 %v193, %v211
  %v213 = vpop.f32.mrf.mxu0
  %v214 = vadd.f32 %v195, %v213
  %215 = vmatmul.bf16.gmra.mxu0 %v82
  %v216 = vpop.f32.mrf.mxu0
  %v217 = vadd.f32 %v198, %v216
  %v218 = vpop.f32.mrf.mxu0
  %v219 = vadd.f32 %v200, %v218
  %220 = vdwg.mxu0
  %v221 = vadd.f32 %v23, %v212
  %v222 = vadd.f32 %v24, %v214
  %v223 = vadd.f32 %v25, %v217
  %v224 = vadd.f32 %v26, %v219
  %225 = vst [vmem:[#allocation2] sm:$0xff] %v221
  %226 = vst [vmem:[#allocation2 + $0x8] sm:$0xff] %v222
  %227 = vst [vmem:[#allocation2 + $0x10] sm:$0xff] %v223
  %228 = vst [vmem:[#allocation2 + $0x18] sm:$0xff] %v224
  // Predicated region
  $region14: #{_lambda_.11} parent=0 // pred_check
    %p229 = pneg %p14
  $region15: #{_lambda_.11} parent=0 // pred_check_branch
    %231 = sbr.rel (%p229) target = $region17
  $region16: #{_lambda_.11} parent=0 // pred_region
    %v232 = vld [vmem:[#allocation2] sm:$0xff]
    %v233 = vld [vmem:[#allocation2 + $0x8] sm:$0xff]
    %v234 = vld [vmem:[#allocation2 + $0x10] sm:$0xff]
    %v235 = vld [vmem:[#allocation2 + $0x18] sm:$0xff]
    %v236 = vpack.c.bf16 %v232, %v232
    %v237 = vpack.c.bf16 %v233, %v233
    %v238 = vpack.c.bf16 %v234, %v234
    %v239 = vpack.c.bf16 %v235, %v235
    %240 = vst [vmem:[%s2] sm:$0xf] %v236
    %241 = vst [vmem:[%s2 + $0x4] sm:$0xf] %v237
    %242 = vst [vmem:[%s2 + $0x8] sm:$0xf] %v238
    %243 = vst [vmem:[%s2 + $0xc] sm:$0xf] %v239
    %v244 = vadd.f32 %v232, %v233
    %v245 = vadd.f32 %v244, %v234
    %v246 = vadd.f32 %v245, %v235
    %v247 = vrot.slane %v246, 4
    %v248 = vadd.f32 %v246, %v247
    %v249 = vrot.slane %v248, 2
    %v250 = vadd.f32 %v248, %v249
    %v251 = vrot.slane %v250, 1
    %v252 = vadd.f32 %v250, %v251
    %v253 = vmul.f32 %v232, %v232
    %v254 = vmul.f32 %v233, %v233
    %v255 = vmul.f32 %v234, %v234
    %v256 = vmul.f32 %v235, %v235
    %v257 = vadd.f32 %v253, %v254
    %v258 = vadd.f32 %v257, %v255
    %v259 = vadd.f32 %v258, %v256
    %v260 = vrot.slane %v259, 4
    %v261 = vadd.f32 %v259, %v260
    %v262 = vrot.slane %v261, 2
    %v263 = vadd.f32 %v261, %v262
    %v264 = vrot.slane %v263, 1
    %v265 = vadd.f32 %v263, %v264
    %266 = vst [vmem:[%s3] sm:$0xff] %v252
    %267 = vst [vmem:[%s4] sm:$0xff] %v265
  $region17: #{_lambda_.11} parent=0 // pred_fallthru
    _
  // Predicated region
  $region18: #{_lambda_.11} parent=0 // pred_check
    _
  $region19: #{_lambda_.11} parent=0 // pred_check_branch
    %269 = sbr.rel (0) target = $region21
  $region20: #{_lambda_.11} parent=0 // pred_region
    _
  $region21: #{_lambda_.11} parent=0 // pred_fallthru
    _
  // Predicated region
  $region22: #{_lambda_.11} parent=0 // pred_check
    _
  $region23: #{_lambda_.11} parent=0 // pred_check_branch
    %271 = sbr.rel (0) target = $region25
  $region24: #{_lambda_.11} parent=0 // pred_region
    _
  $region25: #{_lambda_.11} parent=0 // pred_fallthru
    _
  // Predicated region
  $region26: #{_lambda_.11} parent=0 // pred_check
    _
  $region27: #{_lambda_.11} parent=0 // pred_check_branch
    %273 = sbr.rel (0) target = $region29
  $region28: #{_lambda_.11} parent=0 // pred_region
    _
  $region29: #{_lambda_.11} parent=0 // pred_fallthru
    _
  // Predicated region
  $region30: #{_lambda_.11} parent=0 // pred_check
    _
  $region31: #{_lambda_.11} parent=0 // pred_check_branch
    %275 = sbr.rel (0) target = $region33
  $region32: #{_lambda_.11} parent=0 // pred_region
    _
  $region33: #{_lambda_.11} parent=0 // pred_fallthru
    _
  // Predicated region
  $region34: #{_lambda_.11} parent=0 // pred_check
    _
  $region35: #{_lambda_.11} parent=0 // pred_check_branch
    %277 = sbr.rel (0) target = $region37
  $region36: #{_lambda_.11} parent=0 // pred_region
    _
  $region37: #{_lambda_.11} parent=0 // pred_fallthru
    _
  // Predicated region
  $region38: #{_lambda_.11} parent=0 // pred_check
    _
  $region39: #{_lambda_.11} parent=0 // pred_check_branch
    %279 = sbr.rel (0) target = $region41
  $region40: #{_lambda_.11} parent=0 // pred_region
    _
  $region41: #{_lambda_.11} parent=0 // pred_fallthru
    _

// kernel: _lambda_.13
$region0: #{_lambda_.13}
  #allocation0 [shape = 'u32[]', space=smem, size = 0x4, offset = 0x4, fixed_abs, tag = 'smem constant byte address 0x4 - core index']
  #allocation1 [shape = 'u32[72,128]{1,0:T(1,128)}', space=vmem, size = 0x9000, scoped, tag = 'internal scratch']
  #allocation2 [shape = 'f32[24,128]{1,0:T(8,128)}', space=vmem, size = 0x3000, scoped, tag = 'scratch operand']
  %s0 = inlined_call_operand.vmem [shape: bf16[24,512], index: 0, kind: input, shape index: {}]
  %s1 = inlined_call_operand.vmem [shape: bf16[512,128], index: 1, kind: input, shape index: {}]
  %s2 = inlined_call_operand.vmem [shape: bf16[24,128], index: 2, kind: output, shape index: {0}]
  %s3 = inlined_call_operand.vmem [shape: f32[8,128], index: 3, kind: output, shape index: {1}]
  %s4 = inlined_call_operand.vmem [shape: f32[8,128], index: 4, kind: output, shape index: {2}]
  %5 = xla_tuple %s2, %s3, %s4
  %s6 = sld [smem:[#allocation0]]
  $region42: #{_lambda_.13} parent=0
    _
  %s8 = ssub.s32 1, %s6
  %s9 = scalar_select 0, %s8, %s6
  // Predicated region
  $region2: #{_lambda_.13} parent=0 // pred_check
    _
  $region3: #{_lambda_.13} parent=0 // pred_check_branch
    %11 = sbr.rel (0) target = $region5
  $region4: #{_lambda_.13} parent=0 // pred_region
    _
  $region5: #{_lambda_.13} parent=0 // pred_fallthru
    _
  // Predicated region
  $region6: #{_lambda_.13} parent=0 // pred_check
    _
  $region7: #{_lambda_.13} parent=0 // pred_check_branch
    %13 = sbr.rel (0) target = $region9
  $region8: #{_lambda_.13} parent=0 // pred_region
    _
  $region9: #{_lambda_.13} parent=0 // pred_fallthru
    _
  %p14 = scmp.eq.s32.totalorder 0, 0
  // Predicated region
  $region10: #{_lambda_.13} parent=0 // pred_check
    %p15 = pneg %p14
  $region11: #{_lambda_.13} parent=0 // pred_check_branch
    %17 = sbr.rel (%p15) target = $region13
  $region12: #{_lambda_.13} parent=0 // pred_region
    %18 = vst [vmem:[#allocation2] sm:$0xff] 0.0
    %19 = vst [vmem:[#allocation2 + $0x8] sm:$0xff] 0.0
    %20 = vst [vmem:[#allocation2 + $0x10] sm:$0xff] 0.0
  $region13: #{_lambda_.13} parent=0 // pred_fallthru
    _
  %s21 = smul.u32 0, 512
  %v22 = vld [vmem:[#allocation2] sm:$0xff]
  %v23 = vld [vmem:[#allocation2 + $0x8] sm:$0xff]
  %v24 = vld [vmem:[#allocation2 + $0x10] sm:$0xff]
  %v25 = vld [vmem:[%s0] sm:$0xff]
  %v26 = vld [vmem:[%s0 + $0x8] sm:$0xff]
  %v27 = vld [vmem:[%s0 + $0x10] sm:$0xff]
  %v28 = vld [vmem:[%s0 + $0x18] sm:$0xff]
  %v29 = vld [vmem:[%s0 + $0x20] sm:$0xff]
  %v30 = vld [vmem:[%s0 + $0x28] sm:$0xff]
  %s31 = sshra.s32 %s21, 3
  %s32 = sand.u32 %s21, 7
  %s33 = smul.addr %s31, 4
  %s34 = scalar_lea.vmem %s1, %s33
  %v35 = vld [vmem:[%s34] sm:$0xf]
  %v36 = vld [vmem:[%s34 + $0x4] sm:$0xf]
  %v37 = vld [vmem:[%s34 + $0x8] sm:$0xf]
  %v38 = vld [vmem:[%s34 + $0xc] sm:$0xf]
  %v39 = vld [vmem:[%s34 + $0x10] sm:$0xf]
  %v40 = vld [vmem:[%s34 + $0x14] sm:$0xf]
  %v41 = vld [vmem:[%s34 + $0x18] sm:$0xf]
  %v42 = vld [vmem:[%s34 + $0x1c] sm:$0xf]
  %v43 = vld [vmem:[%s34 + $0x20] sm:$0xf]
  %v44 = vld [vmem:[%s34 + $0x24] sm:$0xf]
  %v45 = vld [vmem:[%s34 + $0x28] sm:$0xf]
  %v46 = vld [vmem:[%s34 + $0x2c] sm:$0xf]
  %v47 = vld [vmem:[%s34 + $0x30] sm:$0xf]
  %v48 = vld [vmem:[%s34 + $0x34] sm:$0xf]
  %v49 = vld [vmem:[%s34 + $0x38] sm:$0xf]
  %v50 = vld [vmem:[%s34 + $0x3c] sm:$0xf]
  %v51 = vld [vmem:[%s34 + $0x40] sm:$0xf]
  %v52 = vld [vmem:[%s34 + $0x44] sm:$0xf]
  %v53 = vld [vmem:[%s34 + $0x48] sm:$0xf]
  %v54 = vld [vmem:[%s34 + $0x4c] sm:$0xf]
  %v55 = vld [vmem:[%s34 + $0x50] sm:$0xf]
  %v56 = vld [vmem:[%s34 + $0x54] sm:$0xf]
  %v57 = vld [vmem:[%s34 + $0x58] sm:$0xf]
  %v58 = vld [vmem:[%s34 + $0x5c] sm:$0xf]
  %v59 = vld [vmem:[%s34 + $0x60] sm:$0xf]
  %v60 = vld [vmem:[%s34 + $0x64] sm:$0xf]
  %v61 = vld [vmem:[%s34 + $0x68] sm:$0xf]
  %v62 = vld [vmem:[%s34 + $0x6c] sm:$0xf]
  %v63 = vld [vmem:[%s34 + $0x70] sm:$0xf]
  %v64 = vld [vmem:[%s34 + $0x74] sm:$0xf]
  %v65 = vld [vmem:[%s34 + $0x78] sm:$0xf]
  %v66 = vld [vmem:[%s34 + $0x7c] sm:$0xf]
  %v67 = vld [vmem:[%s34 + $0x80] sm:$0xf]
  %v68 = vld [vmem:[%s34 + $0x84] sm:$0xf]
  %v69 = vld [vmem:[%s34 + $0x88] sm:$0xf]
  %v70 = vld [vmem:[%s34 + $0x8c] sm:$0xf]
  %v71 = vld [vmem:[%s34 + $0x90] sm:$0xf]
  %v72 = vld [vmem:[%s34 + $0x94] sm:$0xf]
  %v73 = vld [vmem:[%s34 + $0x98] sm:$0xf]
  %v74 = vld [vmem:[%s34 + $0x9c] sm:$0xf]
  %v75 = vld [vmem:[%s34 + $0xa0] sm:$0xf]
  %v76 = vld [vmem:[%s34 + $0xa4] sm:$0xf]
  %v77 = vld [vmem:[%s34 + $0xa8] sm:$0xf]
  %v78 = vld [vmem:[%s34 + $0xac] sm:$0xf]
  %v79 = vld [vmem:[%s34 + $0xb0] sm:$0xf]
  %v80 = vld [vmem:[%s34 + $0xb4] sm:$0xf]
  %v81 = vld [vmem:[%s34 + $0xb8] sm:$0xf]
  %v82 = vld [vmem:[%s34 + $0xbc] sm:$0xf]
  %v83 = vld [vmem:[%s34 + $0xc0] sm:$0xf]
  %v84 = vld [vmem:[%s34 + $0xc4] sm:$0xf]
  %v85 = vld [vmem:[%s34 + $0xc8] sm:$0xf]
  %v86 = vld [vmem:[%s34 + $0xcc] sm:$0xf]
  %v87 = vld [vmem:[%s34 + $0xd0] sm:$0xf]
  %v88 = vld [vmem:[%s34 + $0xd4] sm:$0xf]
  %v89 = vld [vmem:[%s34 + $0xd8] sm:$0xf]
  %v90 = vld [vmem:[%s34 + $0xdc] sm:$0xf]
  %v91 = vld [vmem:[%s34 + $0xe0] sm:$0xf]
  %v92 = vld [vmem:[%s34 + $0xe4] sm:$0xf]
  %v93 = vld [vmem:[%s34 + $0xe8] sm:$0xf]
  %v94 = vld [vmem:[%s34 + $0xec] sm:$0xf]
  %v95 = vld [vmem:[%s34 + $0xf0] sm:$0xf]
  %v96 = vld [vmem:[%s34 + $0xf4] sm:$0xf]
  %v97 = vld [vmem:[%s34 + $0xf8] sm:$0xf]
  %v98 = vld [vmem:[%s34 + $0xfc] sm:$0xf]
  %v105 = vunpack.c.l.b16 %v25
  %v106 = vunpack.c.h.b16 %v25
  %v107 = vunpack.c.l.b16 %v26
  %v108 = vunpack.c.h.b16 %v26
  %v109 = vunpack.c.l.b16 %v27
  %v110 = vunpack.c.h.b16 %v27
  %v111 = vunpack.c.l.b16 %v28
  %v112 = vunpack.c.h.b16 %v28
  %v113 = vunpack.c.l.b16 %v29
  %v114 = vunpack.c.h.b16 %v29
  %v115 = vunpack.c.l.b16 %v30
  %v116 = vunpack.c.h.b16 %v30
  %v117 = vpack.c.b16 %v109, %v105
  %v118 = vpack.c.b16 %v110, %v106
  %v119 = vpack.c.b16 %v111, %v107
  %v120 = vpack.c.b16 %v112, %v108
  %v121 = vpack.c.b16 %v113, %v113
  %v122 = vpack.c.b16 %v114, %v114
  %v123 = vpack.c.b16 %v115, %v115
  %v124 = vpack.c.b16 %v116, %v116
  %v197 = vunpack.c.l.b16 %v35
  %v198 = vunpack.c.l.b16 %v36
  %v199 = vunpack.c.l.b16 %v37
  %v200 = vunpack.c.l.b16 %v38
  %v201 = vunpack.c.l.b16 %v39
  %v202 = vunpack.c.l.b16 %v40
  %v203 = vunpack.c.l.b16 %v41
  %v204 = vunpack.c.l.b16 %v42
  %v205 = vunpack.c.l.b16 %v43
  %v206 = vunpack.c.l.b16 %v44
  %v207 = vunpack.c.l.b16 %v45
  %v208 = vunpack.c.l.b16 %v46
  %v209 = vunpack.c.l.b16 %v47
  %v210 = vunpack.c.l.b16 %v48
  %v211 = vunpack.c.l.b16 %v49
  %v212 = vunpack.c.l.b16 %v50
  %v213 = vunpack.c.l.b16 %v51
  %v214 = vunpack.c.l.b16 %v52
  %v215 = vunpack.c.l.b16 %v53
  %v216 = vunpack.c.l.b16 %v54
  %v217 = vunpack.c.l.b16 %v55
  %v218 = vunpack.c.l.b16 %v56
  %v219 = vunpack.c.l.b16 %v57
  %v220 = vunpack.c.l.b16 %v58
  %v221 = vunpack.c.l.b16 %v59
  %v222 = vunpack.c.l.b16 %v60
  %v223 = vunpack.c.l.b16 %v61
  %v224 = vunpack.c.l.b16 %v62
  %v225 = vunpack.c.l.b16 %v63
  %v226 = vunpack.c.l.b16 %v64
  %v227 = vunpack.c.l.b16 %v65
  %v228 = vunpack.c.l.b16 %v66
  %v229 = vunpack.c.l.b16 %v67
  %v230 = vunpack.c.l.b16 %v68
  %v231 = vunpack.c.l.b16 %v69
  %v232 = vunpack.c.l.b16 %v70
  %v233 = vunpack.c.l.b16 %v71
  %v234 = vunpack.c.l.b16 %v72
  %v235 = vunpack.c.l.b16 %v73
  %v236 = vunpack.c.l.b16 %v74
  %v237 = vunpack.c.l.b16 %v75
  %v238 = vunpack.c.l.b16 %v76
  %v239 = vunpack.c.l.b16 %v77
  %v240 = vunpack.c.l.b16 %v78
  %v241 = vunpack.c.l.b16 %v79
  %v242 = vunpack.c.l.b16 %v80
  %v243 = vunpack.c.l.b16 %v81
  %v244 = vunpack.c.l.b16 %v82
  %v245 = vunpack.c.l.b16 %v83
  %v246 = vunpack.c.l.b16 %v84
  %v247 = vunpack.c.l.b16 %v85
  %v248 = vunpack.c.l.b16 %v86
  %v249 = vunpack.c.l.b16 %v87
  %v250 = vunpack.c.l.b16 %v88
  %v251 = vunpack.c.l.b16 %v89
  %v252 = vunpack.c.l.b16 %v90
  %v253 = vunpack.c.l.b16 %v91
  %v254 = vunpack.c.l.b16 %v92
  %v255 = vunpack.c.l.b16 %v93
  %v256 = vunpack.c.l.b16 %v94
  %v257 = vunpack.c.l.b16 %v95
  %v258 = vunpack.c.l.b16 %v96
  %v259 = vunpack.c.l.b16 %v97
  %v260 = vunpack.c.l.b16 %v98
  %v261 = vpack.c.b16 %v198, %v197
  %v262 = vpack.c.b16 %v200, %v199
  %v263 = vpack.c.b16 %v202, %v201
  %v264 = vpack.c.b16 %v204, %v203
  %v265 = vpack.c.b16 %v206, %v205
  %v266 = vpack.c.b16 %v208, %v207
  %v267 = vpack.c.b16 %v210, %v209
  %v268 = vpack.c.b16 %v212, %v211
  %v269 = vpack.c.b16 %v214, %v213
  %v270 = vpack.c.b16 %v216, %v215
  %v271 = vpack.c.b16 %v218, %v217
  %v272 = vpack.c.b16 %v220, %v219
  %v273 = vpack.c.b16 %v222, %v221
  %v274 = vpack.c.b16 %v224, %v223
  %v275 = vpack.c.b16 %v226, %v225
  %v276 = vpack.c.b16 %v228, %v227
  %v277 = vpack.c.b16 %v230, %v229
  %v278 = vpack.c.b16 %v232, %v231
  %v279 = vpack.c.b16 %v234, %v233
  %v280 = vpack.c.b16 %v236, %v235
  %v281 = vpack.c.b16 %v238, %v237
  %v282 = vpack.c.b16 %v240, %v239
  %v283 = vpack.c.b16 %v242, %v241
  %v284 = vpack.c.b16 %v244, %v243
  %v285 = vpack.c.b16 %v246, %v245
  %v286 = vpack.c.b16 %v248, %v247
  %v287 = vpack.c.b16 %v250, %v249
  %v288 = vpack.c.b16 %v252, %v251
  %v289 = vpack.c.b16 %v254, %v253
  %v290 = vpack.c.b16 %v256, %v255
  %v291 = vpack.c.b16 %v258, %v257
  %v292 = vpack.c.b16 %v260, %v259
  %325 = vmatpush.bf16.msra.mxu0 %v268
  %326 = vmatpush.bf16.msra.mxu0 %v267
  %327 = vmatpush.bf16.msra.mxu0 %v266
  %328 = vmatpush.bf16.msra.mxu0 %v265
  %329 = vmatpush.bf16.msra.mxu0 %v264
  %330 = vmatpush.bf16.msra.mxu0 %v263
  %331 = vmatpush.bf16.msra.mxu0 %v262
  %332 = vmatpush.bf16.msra.mxu0 %v261
  %333 = vmatmul.bf16.gmra.mxu0 %v117
  %v334 = vpop.f32.mrf.mxu0
  %v335 = vadd.f32 0.0, %v334
  %v336 = vpop.f32.mrf.mxu0
  %v337 = vadd.f32 0.0, %v336
  %338 = vmatmul.bf16.gmra.mxu0 %v121
  %v339 = vpop.f32.mrf.mxu0
  %v340 = vadd.f32 0.0, %v339
  %v341 = vpop.f32.mrf.mxu0
  %342 = vdwg.mxu0
  %343 = vmatpush.bf16.msra.mxu0 %v276
  %344 = vmatpush.bf16.msra.mxu0 %v275
  %345 = vmatpush.bf16.msra.mxu0 %v274
  %346 = vmatpush.bf16.msra.mxu0 %v273
  %347 = vmatpush.bf16.msra.mxu0 %v272
  %348 = vmatpush.bf16.msra.mxu0 %v271
  %349 = vmatpush.bf16.msra.mxu0 %v270
  %350 = vmatpush.bf16.msra.mxu0 %v269
  %351 = vmatmul.bf16.gmra.mxu0 %v118
  %v352 = vpop.f32.mrf.mxu0
  %v353 = vadd.f32 %v335, %v352
  %v354 = vpop.f32.mrf.mxu0
  %v355 = vadd.f32 %v337, %v354
  %356 = vmatmul.bf16.gmra.mxu0 %v122
  %v357 = vpop.f32.mrf.mxu0
  %v358 = vadd.f32 %v340, %v357
  %v359 = vpop.f32.mrf.mxu0
  %360 = vdwg.mxu0
  %361 = vmatpush.bf16.msra.mxu0 %v284
  %362 = vmatpush.bf16.msra.mxu0 %v283
  %363 = vmatpush.bf16.msra.mxu0 %v282
  %364 = vmatpush.bf16.msra.mxu0 %v281
  %365 = vmatpush.bf16.msra.mxu0 %v280
  %366 = vmatpush.bf16.msra.mxu0 %v279
  %367 = vmatpush.bf16.msra.mxu0 %v278
  %368 = vmatpush.bf16.msra.mxu0 %v277
  %369 = vmatmul.bf16.gmra.mxu0 %v119
  %v370 = vpop.f32.mrf.mxu0
  %v371 = vadd.f32 %v353, %v370
  %v372 = vpop.f32.mrf.mxu0
  %v373 = vadd.f32 %v355, %v372
  %374 = vmatmul.bf16.gmra.mxu0 %v123
  %v375 = vpop.f32.mrf.mxu0
  %v376 = vadd.f32 %v358, %v375
  %v377 = vpop.f32.mrf.mxu0
  %378 = vdwg.mxu0
  %379 = vmatpush.bf16.msra.mxu0 %v292
  %380 = vmatpush.bf16.msra.mxu0 %v291
  %381 = vmatpush.bf16.msra.mxu0 %v290
  %382 = vmatpush.bf16.msra.mxu0 %v289
  %383 = vmatpush.bf16.msra.mxu0 %v288
  %384 = vmatpush.bf16.msra.mxu0 %v287
  %385 = vmatpush.bf16.msra.mxu0 %v286
  %386 = vmatpush.bf16.msra.mxu0 %v285
  %387 = vmatmul.bf16.gmra.mxu0 %v120
  %v388 = vpop.f32.mrf.mxu0
  %v389 = vadd.f32 %v371, %v388
  %v390 = vpop.f32.mrf.mxu0
  %v391 = vadd.f32 %v373, %v390
  %392 = vmatmul.bf16.gmra.mxu0 %v124
  %v393 = vpop.f32.mrf.mxu0
  %v394 = vadd.f32 %v376, %v393
  %v395 = vpop.f32.mrf.mxu0
  %396 = vdwg.mxu0
  %v397 = vadd.f32 %v22, %v389
  %v398 = vadd.f32 %v23, %v391
  %v399 = vadd.f32 %v24, %v394
  %400 = vst [vmem:[#allocation2] sm:$0xff] %v397
  %401 = vst [vmem:[#allocation2 + $0x8] sm:$0xff] %v398
  %402 = vst [vmem:[#allocation2 + $0x10] sm:$0xff] %v399
  // Predicated region
  $region14: #{_lambda_.13} parent=0 // pred_check
    %p403 = pneg %p14
  $region15: #{_lambda_.13} parent=0 // pred_check_branch
    %405 = sbr.rel (%p403) target = $region17
  $region16: #{_lambda_.13} parent=0 // pred_region
    %v406 = vld [vmem:[#allocation2] sm:$0xff]
    %v407 = vld [vmem:[#allocation2 + $0x8] sm:$0xff]
    %v408 = vld [vmem:[#allocation2 + $0x10] sm:$0xff]
    %v409 = vpack.c.bf16 %v406, %v406
    %v410 = vpack.c.bf16 %v407, %v407
    %v411 = vpack.c.bf16 %v408, %v408
    %412 = vst [vmem:[%s2] sm:$0xf] %v409
    %413 = vst [vmem:[%s2 + $0x4] sm:$0xf] %v410
    %414 = vst [vmem:[%s2 + $0x8] sm:$0xf] %v411
    %v415 = vadd.f32 %v406, %v407
    %v416 = vadd.f32 %v415, %v408
    %v417 = vrot.slane %v416, 4
    %v418 = vadd.f32 %v416, %v417
    %v419 = vrot.slane %v418, 2
    %v420 = vadd.f32 %v418, %v419
    %v421 = vrot.slane %v420, 1
    %v422 = vadd.f32 %v420, %v421
    %v423 = vmul.f32 %v406, %v406
    %v424 = vmul.f32 %v407, %v407
    %v425 = vmul.f32 %v408, %v408
    %v426 = vadd.f32 %v423, %v424
    %v427 = vadd.f32 %v426, %v425
    %v428 = vrot.slane %v427, 4
    %v429 = vadd.f32 %v427, %v428
    %v430 = vrot.slane %v429, 2
    %v431 = vadd.f32 %v429, %v430
    %v432 = vrot.slane %v431, 1
    %v433 = vadd.f32 %v431, %v432
    %434 = vst [vmem:[%s3] sm:$0xff] %v422
    %435 = vst [vmem:[%s4] sm:$0xff] %v433
  $region17: #{_lambda_.13} parent=0 // pred_fallthru
    _
  // Predicated region
  $region18: #{_lambda_.13} parent=0 // pred_check
    _
  $region19: #{_lambda_.13} parent=0 // pred_check_branch
    %437 = sbr.rel (0) target = $region21
  $region20: #{_lambda_.13} parent=0 // pred_region
    _
  $region21: #{_lambda_.13} parent=0 // pred_fallthru
    _
  // Predicated region
  $region22: #{_lambda_.13} parent=0 // pred_check
    _
  $region23: #{_lambda_.13} parent=0 // pred_check_branch
    %439 = sbr.rel (0) target = $region25
  $region24: #{_lambda_.13} parent=0 // pred_region
    _
  $region25: #{_lambda_.13} parent=0 // pred_fallthru
    _
  // Predicated region
  $region26: #{_lambda_.13} parent=0 // pred_check
    _
  $region27: #{_lambda_.13} parent=0 // pred_check_branch
    %441 = sbr.rel (0) target = $region29
  $region28: #{_lambda_.13} parent=0 // pred_region
    _
  $region29: #{_lambda_.13} parent=0 // pred_fallthru
    _
  // Predicated region
  $region30: #{_lambda_.13} parent=0 // pred_check
    _
  $region31: #{_lambda_.13} parent=0 // pred_check_branch
    %443 = sbr.rel (0) target = $region33
  $region32: #{_lambda_.13} parent=0 // pred_region
    _
  $region33: #{_lambda_.13} parent=0 // pred_fallthru
    _
  // Predicated region
  $region34: #{_lambda_.13} parent=0 // pred_check
    _
  $region35: #{_lambda_.13} parent=0 // pred_check_branch
    %445 = sbr.rel (0) target = $region37
  $region36: #{_lambda_.13} parent=0 // pred_region
    _
  $region37: #{_lambda_.13} parent=0 // pred_fallthru
    _
  // Predicated region
  $region38: #{_lambda_.13} parent=0 // pred_check
    _
  $region39: #{_lambda_.13} parent=0 // pred_check_branch
    %447 = sbr.rel (0) target = $region41
  $region40: #{_lambda_.13} parent=0 // pred_region
    _
  $region41: #{_lambda_.13} parent=0 // pred_fallthru
    _

// kernel: _lambda_.14
$region0: #{_lambda_.14}
  #allocation0 [shape = 'u32[]', space=smem, size = 0x4, offset = 0x4, fixed_abs, tag = 'smem constant byte address 0x4 - core index']
  #allocation1 [shape = 'u32[72,128]{1,0:T(1,128)}', space=vmem, size = 0x9000, scoped, tag = 'internal scratch']
  %s0 = inlined_call_operand.vmem [shape: bf16[24,128], index: 0, kind: input, shape index: {}]
  %s1 = inlined_call_operand.vmem [shape: f32[1,128], index: 1, kind: input, shape index: {}]
  %s2 = inlined_call_operand.vmem [shape: f32[1,128], index: 2, kind: input, shape index: {}]
  %s3 = inlined_call_operand.vmem [shape: bf16[24,128], index: 3, kind: output, shape index: {}]
  %s4 = sld [smem:[#allocation0]]
  $region22: #{_lambda_.14} parent=0
    _
  %s6 = ssub.s32 1, %s4
  %s7 = scalar_select 0, %s6, %s4
  // Predicated region
  $region2: #{_lambda_.14} parent=0 // pred_check
    _
  $region3: #{_lambda_.14} parent=0 // pred_check_branch
    %9 = sbr.rel (0) target = $region5
  $region4: #{_lambda_.14} parent=0 // pred_region
    _
  $region5: #{_lambda_.14} parent=0 // pred_fallthru
    _
  // Predicated region
  $region6: #{_lambda_.14} parent=0 // pred_check
    _
  $region7: #{_lambda_.14} parent=0 // pred_check_branch
    %11 = sbr.rel (0) target = $region9
  $region8: #{_lambda_.14} parent=0 // pred_region
    _
  $region9: #{_lambda_.14} parent=0 // pred_fallthru
    _
  // Predicated region
  $region10: #{_lambda_.14} parent=0 // pred_check
    _
  $region11: #{_lambda_.14} parent=0 // pred_check_branch
    %13 = sbr.rel (0) target = $region13
  $region12: #{_lambda_.14} parent=0 // pred_region
    _
  $region13: #{_lambda_.14} parent=0 // pred_fallthru
    _
  %v14 = vld [vmem:[%s0] sm:$0xf]
  %v15 = vld [vmem:[%s0 + $0x4] sm:$0xf]
  %v16 = vld [vmem:[%s0 + $0x8] sm:$0xf]
  %v17 = vunpack.c.l.bf16 %v14
  %v18 = vunpack.c.l.bf16 %v15
  %v19 = vunpack.c.l.bf16 %v16
  %v20 = vld [vmem:[%s1] sm:$0x1]
  %v22 = vperm.slane %v20, 0
  %v24 = vmul.f32 %v17, %v22
  %v25 = vmul.f32 %v18, %v22
  %v26 = vmul.f32 %v19, %v22
  %v27 = vld [vmem:[%s2] sm:$0x1]
  %v29 = vperm.slane %v27, 0
  %v31 = vadd.f32 %v24, %v29
  %v32 = vadd.f32 %v25, %v29
  %v33 = vadd.f32 %v26, %v29
  %vm34 = vcmp.ge.f32.partialorder %v31, 0.0
  %vm35 = vcmp.ge.f32.partialorder %v32, 0.0
  %vm36 = vcmp.ge.f32.partialorder %v33, 0.0
  %v37 = vmul.f32 %v31, 0.2
  %v38 = vmul.f32 %v32, 0.2
  %v39 = vmul.f32 %v33, 0.2
  %v40 = vsel %vm34, %v31, %v37
  %v41 = vsel %vm35, %v32, %v38
  %v42 = vsel %vm36, %v33, %v39
  %v43 = vpack.c.bf16 %v40, %v40
  %v44 = vpack.c.bf16 %v41, %v41
  %v45 = vpack.c.bf16 %v42, %v42
  %46 = vst [vmem:[%s3] sm:$0xf] %v43
  %47 = vst [vmem:[%s3 + $0x4] sm:$0xf] %v44
  %48 = vst [vmem:[%s3 + $0x8] sm:$0xf] %v45
  // Predicated region
  $region14: #{_lambda_.14} parent=0 // pred_check
    _
  $region15: #{_lambda_.14} parent=0 // pred_check_branch
    %50 = sbr.rel (0) target = $region17
  $region16: #{_lambda_.14} parent=0 // pred_region
    _
  $region17: #{_lambda_.14} parent=0 // pred_fallthru
    _
  // Predicated region
  $region18: #{_lambda_.14} parent=0 // pred_check
    _
  $region19: #{_lambda_.14} parent=0 // pred_check_branch
    %52 = sbr.rel (0) target = $region21
  $region20: #{_lambda_.14} parent=0 // pred_region
    _
  $region21: #{_lambda_.14} parent=0 // pred_fallthru
    _

// kernel: _lambda_.15
$region0: #{_lambda_.15}
  #allocation0 [shape = 'u32[]', space=smem, size = 0x4, offset = 0x4, fixed_abs, tag = 'smem constant byte address 0x4 - core index']
  #allocation1 [shape = 'u32[72,128]{1,0:T(1,128)}', space=vmem, size = 0x9000, scoped, tag = 'internal scratch']
  #allocation2 [shape = 'f32[8,128]{1,0:T(8,128)}', space=vmem, size = 0x1000, scoped, tag = 'scratch operand']
  %s0 = inlined_call_operand.vmem [shape: bf16[8,1024], index: 0, kind: input, shape index: {}]
  %s1 = inlined_call_operand.vmem [shape: bf16[1024,128], index: 1, kind: input, shape index: {}]
  %s2 = inlined_call_operand.vmem [shape: f32[1,128], index: 2, kind: input, shape index: {}]
  %s3 = inlined_call_operand.vmem [shape: f32[8,128], index: 3, kind: output, shape index: {}]
  %s4 = sld [smem:[#allocation0]]
  $region53: #{_lambda_.15} parent=0
    _
  %s6 = ssub.s32 1, %s4
  %s7 = scalar_select 0, %s6, %s4
  loop: start=0, step=1, limit=4
  $region2: #{_lambda_.15} parent=0 // loop_pre_header
    _
  $region3: #{_lambda_.15} parent=0 // loop_header
    %s9 = sphi 0, %s13
    %p10 = scmp.ge.s32.totalorder %s9, 4
    %s16 = sphi 0, %s28
    %s17 = sphi 0, %s24
    %s18 = sphi 0, %s16
    %s19 = sphi 0, %s17
    %s20 = sphi 0, %s18
    %s21 = sphi 0, %s19
    %s33 = sphi 0, %s35
    %s36 = sphi 0, %s33
    %s37 = sphi 0, %s36
    %s53 = sphi 0, %s37
    %s57 = sphi 0, %s57
    %s59 = sphi 0, %s57
    %s60 = sphi 0, %s59
    %s74 = sphi 0, %s60
    %s78 = sphi 0, %s78
    %s80 = sphi 0, %s78
    %s81 = sphi 0, %s80
    %s95 = sphi 0, %s81
    %s101 = sphi 0, %s103
    %s104 = sphi 0, %s101
    %s105 = sphi 0, %s104
    %s121 = sphi 0, %s105
  $region4: #{_lambda_.15} parent=0 // loop_header_branch
    %12 = sbr.rel (%p10) target = $region8
  $region5: #{_lambda_.15} parent=0 // loop_body
    %s14 = ssub.s32 %s9, 1
    %s15 = ssub.s32 %s9, 2
    %s22 = sadd.s32 1, %s17
    %p23 = scmp.ge.s32.totalorder %s22, 2
    %s24 = scalar_select %p23, 0, %s22
    %s25 = sadd.s32 1, %s16
    %s26 = scalar_select %p23, %s25, %s16
    %p27 = scmp.ge.s32.totalorder %s26, 1
    %s28 = scalar_select %p27, 0, %s26
    %s29 = ssub.s32 %s16, %s28
    %s30 = ssub.s32 %s17, %s24
    %s31 = sor.u32 %s29, %s30
    %p32 = scmp.eq.s32.totalorder %s31, 0
    %s34 = sadd.s32 %s33, 1
    %s35 = scalar_select %p32, %s33, %s34
    %p38 = pneg %p32
    %p39 = scmp.eq.s32.totalorder %s9, 1
    %p40 = por %p38, %p39
    %p41 = scmp.ne.s32.totalorder %s33, %s36
    %p42 = scmp.eq.s32.totalorder %s9, 0
    %p43 = por %p41, %p42
    %p44 = scmp.ne.s32.totalorder %s33, %s36
    %p45 = scmp.eq.s32.totalorder %s14, 1
    %p46 = por %p44, %p45
    %p47 = scmp.ne.s32.totalorder %s36, %s37
    %p48 = scmp.eq.s32.totalorder %s14, 0
    %p49 = por %p47, %p48
    %p50 = scmp.ne.s32.totalorder %s36, %s37
    %p51 = scmp.eq.s32.totalorder %s15, 1
    %p52 = por %p50, %p51
    %p54 = scmp.ne.s32.totalorder %s37, %s53
    %p55 = scmp.eq.s32.totalorder %s15, 0
    %p56 = por %p54, %p55
    %s58 = sadd.s32 %s57, 1
    %p61 = scmp.eq.s32.totalorder %s9, 1
    %p62 = scmp.ne.s32.totalorder %s57, %s59
    %p63 = scmp.eq.s32.totalorder %s9, 0
    %p64 = por %p62, %p63
    %p65 = scmp.ne.s32.totalorder %s57, %s59
    %p66 = scmp.eq.s32.totalorder %s14, 1
    %p67 = por %p65, %p66
    %p68 = scmp.ne.s32.totalorder %s59, %s60
    %p69 = scmp.eq.s32.totalorder %s14, 0
    %p70 = por %p68, %p69
    %p71 = scmp.ne.s32.totalorder %s59, %s60
    %p72 = scmp.eq.s32.totalorder %s15, 1
    %p73 = por %p71, %p72
    %p75 = scmp.ne.s32.totalorder %s60, %s74
    %p76 = scmp.eq.s32.totalorder %s15, 0
    %p77 = por %p75, %p76
    %s79 = sadd.s32 %s78, 1
    %p82 = scmp.eq.s32.totalorder %s9, 1
    %p83 = scmp.ne.s32.totalorder %s78, %s80
    %p84 = scmp.eq.s32.totalorder %s9, 0
    %p85 = por %p83, %p84
    %p86 = scmp.ne.s32.totalorder %s78, %s80
    %p87 = scmp.eq.s32.totalorder %s14, 1
    %p88 = por %p86, %p87
    %p89 = scmp.ne.s32.totalorder %s80, %s81
    %p90 = scmp.eq.s32.totalorder %s14, 0
    %p91 = por %p89, %p90
    %p92 = scmp.ne.s32.totalorder %s80, %s81
    %p93 = scmp.eq.s32.totalorder %s15, 1
    %p94 = por %p92, %p93
    %p96 = scmp.ne.s32.totalorder %s81, %s95
    %p97 = scmp.eq.s32.totalorder %s15, 0
    %p98 = por %p96, %p97
    %s99 = ssub.s32 %s16, %s28
    %p100 = scmp.eq.s32.totalorder %s99, 0
    %s102 = sadd.s32 %s101, 1
    %s103 = scalar_select %p100, %s101, %s102
    %p106 = pneg %p100
    %p107 = scmp.eq.s32.totalorder %s9, 1
    %p108 = por %p106, %p107
    %p109 = scmp.ne.s32.totalorder %s101, %s104
    %p110 = scmp.eq.s32.totalorder %s9, 0
    %p111 = por %p109, %p110
    %p112 = scmp.ne.s32.totalorder %s101, %s104
    %p113 = scmp.eq.s32.totalorder %s14, 1
    %p114 = por %p112, %p113
    %p115 = scmp.ne.s32.totalorder %s104, %s105
    %p116 = scmp.eq.s32.totalorder %s14, 0
    %p117 = por %p115, %p116
    %p118 = scmp.ne.s32.totalorder %s104, %s105
    %p119 = scmp.eq.s32.totalorder %s15, 1
    %p120 = por %p118, %p119
    %p122 = scmp.ne.s32.totalorder %s105, %s121
    %p123 = scmp.eq.s32.totalorder %s15, 0
    %p124 = por %p122, %p123
    %p125 = scmp.le.s32.totalorder 1, %s9
    %p126 = scmp.lt.s32.totalorder %s9, 3
    %p127 = pnand %p125, %p126
    %p128 = pneg %p127
    // Predicated region
    $region9: #{_lambda_.15} parent=5 // pred_check
      _
    $region10: #{_lambda_.15} parent=5 // pred_check_branch
      %130 = sbr.rel (%p127) target = $region12
    $region11: #{_lambda_.15} parent=5 // pred_region
      %s131 = ssub.s32 %s9, 1
      // Predicated region
      $region13: #{_lambda_.15} parent=11 // pred_check
        %p132 = pneg %p70
      $region14: #{_lambda_.15} parent=11 // pred_check_branch
        %134 = sbr.rel (%p132) target = $region16
      $region15: #{_lambda_.15} parent=11 // pred_region
        _
      $region16: #{_lambda_.15} parent=11 // pred_fallthru
        _
      // Predicated region
      $region17: #{_lambda_.15} parent=11 // pred_check
        %p135 = pneg %p91
      $region18: #{_lambda_.15} parent=11 // pred_check_branch
        %137 = sbr.rel (%p135) target = $region20
      $region19: #{_lambda_.15} parent=11 // pred_region
        _
      $region20: #{_lambda_.15} parent=11 // pred_fallthru
        _
    $region12: #{_lambda_.15} parent=5 // pred_fallthru
      _
    %p138 = scmp.lt.s32.totalorder %s9, 2
    // Predicated region
    $region21: #{_lambda_.15} parent=5 // pred_check
      %p139 = pneg %p138
    $region22: #{_lambda_.15} parent=5 // pred_check_branch
      %141 = sbr.rel (%p139) target = $region24
    $region23: #{_lambda_.15} parent=5 // pred_region
      // Predicated region
      $region25: #{_lambda_.15} parent=23 // pred_check
        %p142 = pneg %p43
      $region26: #{_lambda_.15} parent=23 // pred_check_branch
        %144 = sbr.rel (%p142) target = $region28
      $region27: #{_lambda_.15} parent=23 // pred_region
        %s145 = smul.u32 4, %s17
        %p146 = scmp.lt.s32.totalorder %s16, 0
        %s147 = scalar_select %p146, %s16, 0
        %p148 = scmp.lt.s32.totalorder %s145, 7
        %s149 = scalar_select %p148, %s145, 7
        %s150 = smul.addr %s147, 8
        %s151 = sadd.s32 %s149, %s150
        %s152 = smul.addr %s151, 4
        %s153 = scalar_lea.vmem %s0, %s152
        %s154 = smul.u32 4, %s17
      $region28: #{_lambda_.15} parent=23 // pred_fallthru
        _
    $region24: #{_lambda_.15} parent=5 // pred_fallthru
      _
    %p155 = scmp.le.s32.totalorder 1, %s9
    %p156 = scmp.lt.s32.totalorder %s9, 3
    %p157 = pnand %p155, %p156
    %p158 = pneg %p157
    // Predicated region
    $region29: #{_lambda_.15} parent=5 // pred_check
      _
    $region30: #{_lambda_.15} parent=5 // pred_check_branch
      %160 = sbr.rel (%p157) target = $region32
    $region31: #{_lambda_.15} parent=5 // pred_region
      %s161 = ssub.s32 %s9, 1
      %s162 = smul.u32 4, %s19
      %p163 = scmp.lt.s32.totalorder %s18, 0
      %s164 = scalar_select %p163, %s18, 0
      %p165 = scmp.lt.s32.totalorder %s162, 7
      %s166 = scalar_select %p165, %s162, 7
      %s167 = smul.addr %s164, 8
      %s168 = sadd.s32 %s166, %s167
      %s169 = smul.addr %s168, 4
      %s170 = scalar_lea.vmem %s0, %s169
      %p171 = pneg %p49
      %p172 = pneg %p46
      %p173 = pneg %p70
      %p174 = pneg %p67
      %p175 = pneg %p91
      %p176 = pneg %p88
      %p177 = pneg %p117
      %p178 = pneg %p114
      %p179 = scmp.lt.s32.totalorder %s18, 0
      %s180 = scalar_select %p179, %s18, 0
      %s181 = smul.addr %s180, 8
      %s182 = scalar_lea.vmem %s3, %s181
      %s183 = smul.u32 4, %s19
      %p184 = scmp.lt.s32.totalorder %s18, 0
      %s185 = scalar_select %p184, %s18, 0
      %p186 = scmp.lt.s32.totalorder %s183, 7
      %s187 = scalar_select %p186, %s183, 7
      %s188 = smul.addr %s185, 8
      %s189 = sadd.s32 %s187, %s188
      %s190 = smul.addr %s189, 4
      %s191 = scalar_lea.vmem %s0, %s190
      %s192 = smul.u32 4, %s19
      %p193 = scmp.lt.s32.totalorder %s18, 0
      %s194 = scalar_select %p193, %s18, 0
      %s195 = smul.addr %s194, 8
      %s196 = scalar_lea.vmem %s3, %s195
      %p197 = scmp.eq.s32.totalorder %s19, 0
      // Predicated region
      $region33: #{_lambda_.15} parent=31 // pred_check
        %p198 = pneg %p197
      $region34: #{_lambda_.15} parent=31 // pred_check_branch
        %200 = sbr.rel (%p198) target = $region36
      $region35: #{_lambda_.15} parent=31 // pred_region
        %201 = vst [vmem:[#allocation2] sm:$0xff] 0.0
      $region36: #{_lambda_.15} parent=31 // pred_fallthru
        _
      %s202 = smul.u32 %s19, 512
      %v203 = vld [vmem:[#allocation2] sm:$0xff]
      %v204 = vld [vmem:[%s191] sm:$0xff]
      %v205 = vld [vmem:[%s191 + $0x8] sm:$0xff]
      %s206 = sshra.s32 %s202, 3
      %s207 = sand.u32 %s202, 7
      %s208 = smul.addr %s206, 4
      %s209 = scalar_lea.vmem %s1, %s208
      %v210 = vld [vmem:[%s209] sm:$0xf]
      %v211 = vld [vmem:[%s209 + $0x4] sm:$0xf]
      %v212 = vld [vmem:[%s209 + $0x8] sm:$0xf]
      %v213 = vld [vmem:[%s209 + $0xc] sm:$0xf]
      %v214 = vld [vmem:[%s209 + $0x10] sm:$0xf]
      %v215 = vld [vmem:[%s209 + $0x14] sm:$0xf]
      %v216 = vld [vmem:[%s209 + $0x18] sm:$0xf]
      %v217 = vld [vmem:[%s209 + $0x1c] sm:$0xf]
      %v218 = vld [vmem:[%s209 + $0x20] sm:$0xf]
      %v219 = vld [vmem:[%s209 + $0x24] sm:$0xf]
      %v220 = vld [vmem:[%s209 + $0x28] sm:$0xf]
      %v221 = vld [vmem:[%s209 + $0x2c] sm:$0xf]
      %v222 = vld [vmem:[%s209 + $0x30] sm:$0xf]
      %v223 = vld [vmem:[%s209 + $0x34] sm:$0xf]
      %v224 = vld [vmem:[%s209 + $0x38] sm:$0xf]
      %v225 = vld [vmem:[%s209 + $0x3c] sm:$0xf]
      %v226 = vld [vmem:[%s209 + $0x40] sm:$0xf]
      %v227 = vld [vmem:[%s209 + $0x44] sm:$0xf]
      %v228 = vld [vmem:[%s209 + $0x48] sm:$0xf]
      %v229 = vld [vmem:[%s209 + $0x4c] sm:$0xf]
      %v230 = vld [vmem:[%s209 + $0x50] sm:$0xf]
      %v231 = vld [vmem:[%s209 + $0x54] sm:$0xf]
      %v232 = vld [vmem:[%s209 + $0x58] sm:$0xf]
      %v233 = vld [vmem:[%s209 + $0x5c] sm:$0xf]
      %v234 = vld [vmem:[%s209 + $0x60] sm:$0xf]
      %v235 = vld [vmem:[%s209 + $0x64] sm:$0xf]
      %v236 = vld [vmem:[%s209 + $0x68] sm:$0xf]
      %v237 = vld [vmem:[%s209 + $0x6c] sm:$0xf]
      %v238 = vld [vmem:[%s209 + $0x70] sm:$0xf]
      %v239 = vld [vmem:[%s209 + $0x74] sm:$0xf]
      %v240 = vld [vmem:[%s209 + $0x78] sm:$0xf]
      %v241 = vld [vmem:[%s209 + $0x7c] sm:$0xf]
      %v242 = vld [vmem:[%s209 + $0x80] sm:$0xf]
      %v243 = vld [vmem:[%s209 + $0x84] sm:$0xf]
      %v244 = vld [vmem:[%s209 + $0x88] sm:$0xf]
      %v245 = vld [vmem:[%s209 + $0x8c] sm:$0xf]
      %v246 = vld [vmem:[%s209 + $0x90] sm:$0xf]
      %v247 = vld [vmem:[%s209 + $0x94] sm:$0xf]
      %v248 = vld [vmem:[%s209 + $0x98] sm:$0xf]
      %v249 = vld [vmem:[%s209 + $0x9c] sm:$0xf]
      %v250 = vld [vmem:[%s209 + $0xa0] sm:$0xf]
      %v251 = vld [vmem:[%s209 + $0xa4] sm:$0xf]
      %v252 = vld [vmem:[%s209 + $0xa8] sm:$0xf]
      %v253 = vld [vmem:[%s209 + $0xac] sm:$0xf]
      %v254 = vld [vmem:[%s209 + $0xb0] sm:$0xf]
      %v255 = vld [vmem:[%s209 + $0xb4] sm:$0xf]
      %v256 = vld [vmem:[%s209 + $0xb8] sm:$0xf]
      %v257 = vld [vmem:[%s209 + $0xbc] sm:$0xf]
      %v258 = vld [vmem:[%s209 + $0xc0] sm:$0xf]
      %v259 = vld [vmem:[%s209 + $0xc4] sm:$0xf]
      %v260 = vld [vmem:[%s209 + $0xc8] sm:$0xf]
      %v261 = vld [vmem:[%s209 + $0xcc] sm:$0xf]
      %v262 = vld [vmem:[%s209 + $0xd0] sm:$0xf]
      %v263 = vld [vmem:[%s209 + $0xd4] sm:$0xf]
      %v264 = vld [vmem:[%s209 + $0xd8] sm:$0xf]
      %v265 = vld [vmem:[%s209 + $0xdc] sm:$0xf]
      %v266 = vld [vmem:[%s209 + $0xe0] sm:$0xf]
      %v267 = vld [vmem:[%s209 + $0xe4] sm:$0xf]
      %v268 = vld [vmem:[%s209 + $0xe8] sm:$0xf]
      %v269 = vld [vmem:[%s209 + $0xec] sm:$0xf]
      %v270 = vld [vmem:[%s209 + $0xf0] sm:$0xf]
      %v271 = vld [vmem:[%s209 + $0xf4] sm:$0xf]
      %v272 = vld [vmem:[%s209 + $0xf8] sm:$0xf]
      %v273 = vld [vmem:[%s209 + $0xfc] sm:$0xf]
      %v276 = vunpack.c.l.b16 %v204
      %v277 = vunpack.c.h.b16 %v204
      %v278 = vunpack.c.l.b16 %v205
      %v279 = vunpack.c.h.b16 %v205
      %v280 = vpack.c.b16 %v276, %v276
      %v281 = vpack.c.b16 %v277, %v277
      %v282 = vpack.c.b16 %v278, %v278
      %v283 = vpack.c.b16 %v279, %v279
      %v352 = vunpack.c.l.b16 %v210
      %v353 = vunpack.c.l.b16 %v211
      %v354 = vunpack.c.l.b16 %v212
      %v355 = vunpack.c.l.b16 %v213
      %v356 = vunpack.c.l.b16 %v214
      %v357 = vunpack.c.l.b16 %v215
      %v358 = vunpack.c.l.b16 %v216
      %v359 = vunpack.c.l.b16 %v217
      %v360 = vunpack.c.l.b16 %v218
      %v361 = vunpack.c.l.b16 %v219
      %v362 = vunpack.c.l.b16 %v220
      %v363 = vunpack.c.l.b16 %v221
      %v364 = vunpack.c.l.b16 %v222
      %v365 = vunpack.c.l.b16 %v223
      %v366 = vunpack.c.l.b16 %v224
      %v367 = vunpack.c.l.b16 %v225
      %v368 = vunpack.c.l.b16 %v226
      %v369 = vunpack.c.l.b16 %v227
      %v370 = vunpack.c.l.b16 %v228
      %v371 = vunpack.c.l.b16 %v229
      %v372 = vunpack.c.l.b16 %v230
      %v373 = vunpack.c.l.b16 %v231
      %v374 = vunpack.c.l.b16 %v232
      %v375 = vunpack.c.l.b16 %v233
      %v376 = vunpack.c.l.b16 %v234
      %v377 = vunpack.c.l.b16 %v235
      %v378 = vunpack.c.l.b16 %v236
      %v379 = vunpack.c.l.b16 %v237
      %v380 = vunpack.c.l.b16 %v238
      %v381 = vunpack.c.l.b16 %v239
      %v382 = vunpack.c.l.b16 %v240
      %v383 = vunpack.c.l.b16 %v241
      %v384 = vunpack.c.l.b16 %v242
      %v385 = vunpack.c.l.b16 %v243
      %v386 = vunpack.c.l.b16 %v244
      %v387 = vunpack.c.l.b16 %v245
      %v388 = vunpack.c.l.b16 %v246
      %v389 = vunpack.c.l.b16 %v247
      %v390 = vunpack.c.l.b16 %v248
      %v391 = vunpack.c.l.b16 %v249
      %v392 = vunpack.c.l.b16 %v250
      %v393 = vunpack.c.l.b16 %v251
      %v394 = vunpack.c.l.b16 %v252
      %v395 = vunpack.c.l.b16 %v253
      %v396 = vunpack.c.l.b16 %v254
      %v397 = vunpack.c.l.b16 %v255
      %v398 = vunpack.c.l.b16 %v256
      %v399 = vunpack.c.l.b16 %v257
      %v400 = vunpack.c.l.b16 %v258
      %v401 = vunpack.c.l.b16 %v259
      %v402 = vunpack.c.l.b16 %v260
      %v403 = vunpack.c.l.b16 %v261
      %v404 = vunpack.c.l.b16 %v262
      %v405 = vunpack.c.l.b16 %v263
      %v406 = vunpack.c.l.b16 %v264
      %v407 = vunpack.c.l.b16 %v265
      %v408 = vunpack.c.l.b16 %v266
      %v409 = vunpack.c.l.b16 %v267
      %v410 = vunpack.c.l.b16 %v268
      %v411 = vunpack.c.l.b16 %v269
      %v412 = vunpack.c.l.b16 %v270
      %v413 = vunpack.c.l.b16 %v271
      %v414 = vunpack.c.l.b16 %v272
      %v415 = vunpack.c.l.b16 %v273
      %v416 = vpack.c.b16 %v353, %v352
      %v417 = vpack.c.b16 %v355, %v354
      %v418 = vpack.c.b16 %v357, %v356
      %v419 = vpack.c.b16 %v359, %v358
      %v420 = vpack.c.b16 %v361, %v360
      %v421 = vpack.c.b16 %v363, %v362
      %v422 = vpack.c.b16 %v365, %v364
      %v423 = vpack.c.b16 %v367, %v366
      %v424 = vpack.c.b16 %v369, %v368
      %v425 = vpack.c.b16 %v371, %v370
      %v426 = vpack.c.b16 %v373, %v372
      %v427 = vpack.c.b16 %v375, %v374
      %v428 = vpack.c.b16 %v377, %v376
      %v429 = vpack.c.b16 %v379, %v378
      %v430 = vpack.c.b16 %v381, %v380
      %v431 = vpack.c.b16 %v383, %v382
      %v432 = vpack.c.b16 %v385, %v384
      %v433 = vpack.c.b16 %v387, %v386
      %v434 = vpack.c.b16 %v389, %v388
      %v435 = vpack.c.b16 %v391, %v390
      %v436 = vpack.c.b16 %v393, %v392
      %v437 = vpack.c.b16 %v395, %v394
      %v438 = vpack.c.b16 %v397, %v396
      %v439 = vpack.c.b16 %v399, %v398
      %v440 = vpack.c.b16 %v401, %v400
      %v441 = vpack.c.b16 %v403, %v402
      %v442 = vpack.c.b16 %v405, %v404
      %v443 = vpack.c.b16 %v407, %v406
      %v444 = vpack.c.b16 %v409, %v408
      %v445 = vpack.c.b16 %v411, %v410
      %v446 = vpack.c.b16 %v413, %v412
      %v447 = vpack.c.b16 %v415, %v414
      %480 = vmatpush.bf16.msra.mxu0 %v423
      %481 = vmatpush.bf16.msra.mxu0 %v422
      %482 = vmatpush.bf16.msra.mxu0 %v421
      %483 = vmatpush.bf16.msra.mxu0 %v420
      %484 = vmatpush.bf16.msra.mxu0 %v419
      %485 = vmatpush.bf16.msra.mxu0 %v418
      %486 = vmatpush.bf16.msra.mxu0 %v417
      %487 = vmatpush.bf16.msra.mxu0 %v416
      %488 = vmatmul.bf16.gmra.mxu0 %v280
      %v489 = vpop.f32.mrf.mxu0
      %v490 = vadd.f32 0.0, %v489
      %v491 = vpop.f32.mrf.mxu0
      %492 = vdwg.mxu0
      %493 = vmatpush.bf16.msra.mxu0 %v431
      %494 = vmatpush.bf16.msra.mxu0 %v430
      %495 = vmatpush.bf16.msra.mxu0 %v429
      %496 = vmatpush.bf16.msra.mxu0 %v428
      %497 = vmatpush.bf16.msra.mxu0 %v427
      %498 = vmatpush.bf16.msra.mxu0 %v426
      %499 = vmatpush.bf16.msra.mxu0 %v425
      %500 = vmatpush.bf16.msra.mxu0 %v424
      %501 = vmatmul.bf16.gmra.mxu0 %v281
      %v502 = vpop.f32.mrf.mxu0
      %v503 = vadd.f32 %v490, %v502
      %v504 = vpop.f32.mrf.mxu0
      %505 = vdwg.mxu0
      %506 = vmatpush.bf16.msra.mxu0 %v439
      %507 = vmatpush.bf16.msra.mxu0 %v438
      %508 = vmatpush.bf16.msra.mxu0 %v437
      %509 = vmatpush.bf16.msra.mxu0 %v436
      %510 = vmatpush.bf16.msra.mxu0 %v435
      %511 = vmatpush.bf16.msra.mxu0 %v434
      %512 = vmatpush.bf16.msra.mxu0 %v433
      %513 = vmatpush.bf16.msra.mxu0 %v432
      %514 = vmatmul.bf16.gmra.mxu0 %v282
      %v515 = vpop.f32.mrf.mxu0
      %v516 = vadd.f32 %v503, %v515
      %v517 = vpop.f32.mrf.mxu0
      %518 = vdwg.mxu0
      %519 = vmatpush.bf16.msra.mxu0 %v447
      %520 = vmatpush.bf16.msra.mxu0 %v446
      %521 = vmatpush.bf16.msra.mxu0 %v445
      %522 = vmatpush.bf16.msra.mxu0 %v444
      %523 = vmatpush.bf16.msra.mxu0 %v443
      %524 = vmatpush.bf16.msra.mxu0 %v442
      %525 = vmatpush.bf16.msra.mxu0 %v441
      %526 = vmatpush.bf16.msra.mxu0 %v440
      %527 = vmatmul.bf16.gmra.mxu0 %v283
      %v528 = vpop.f32.mrf.mxu0
      %v529 = vadd.f32 %v516, %v528
      %v530 = vpop.f32.mrf.mxu0
      %531 = vdwg.mxu0
      %v532 = vadd.f32 %v203, %v529
      %533 = vst [vmem:[#allocation2] sm:$0xff] %v532
      %p534 = scmp.eq.s32.totalorder %s19, 1
      // Predicated region
      $region37: #{_lambda_.15} parent=31 // pred_check
        %p535 = pneg %p534
      $region38: #{_lambda_.15} parent=31 // pred_check_branch
        %537 = sbr.rel (%p535) target = $region40
      $region39: #{_lambda_.15} parent=31 // pred_region
        %v538 = vld [vmem:[#allocation2] sm:$0xff]
        %v539 = vld [vmem:[%s2] sm:$0x1]
        %v541 = vperm.slane %v539, 0
        %v543 = vadd.f32 %v538, %v541
        %544 = vst [vmem:[%s196] sm:$0xff] %v543
      $region40: #{_lambda_.15} parent=31 // pred_fallthru
        _
      %p545 = scmp.lt.s32.totalorder %s18, 0
      %s546 = scalar_select %p545, %s18, 0
      %s547 = smul.addr %s546, 8
      %s548 = scalar_lea.vmem %s3, %s547
      // Predicated region
      $region41: #{_lambda_.15} parent=31 // pred_check
        %p549 = pneg %p114
      $region42: #{_lambda_.15} parent=31 // pred_check_branch
        %551 = sbr.rel (%p549) target = $region44
      $region43: #{_lambda_.15} parent=31 // pred_region
        _
      $region44: #{_lambda_.15} parent=31 // pred_fallthru
        _
      // Predicated region
      $region45: #{_lambda_.15} parent=31 // pred_check
        %p552 = pneg %p114
      $region46: #{_lambda_.15} parent=31 // pred_check_branch
        %554 = sbr.rel (%p552) target = $region48
      $region47: #{_lambda_.15} parent=31 // pred_region
        %p555 = scmp.lt.s32.totalorder %s18, 0
        %s556 = scalar_select %p555, %s18, 0
        %s557 = smul.addr %s556, 8
        %s558 = scalar_lea.vmem %s3, %s557
      $region48: #{_lambda_.15} parent=31 // pred_fallthru
        _
    $region32: #{_lambda_.15} parent=5 // pred_fallthru
      _
    %p559 = scmp.le.s32.totalorder 2, %s9
    // Predicated region
    $region49: #{_lambda_.15} parent=5 // pred_check
      %p560 = pneg %p559
    $region50: #{_lambda_.15} parent=5 // pred_check_branch
      %562 = sbr.rel (%p560) target = $region52
    $region51: #{_lambda_.15} parent=5 // pred_region
      %s563 = ssub.s32 %s9, 2
    $region52: #{_lambda_.15} parent=5 // pred_fallthru
      _
  $region6: #{_lambda_.15} parent=0 // loop_footer
    %s13 = sadd.s32 1, %s9
  $region7: #{_lambda_.15} parent=0 // loop_footer_branch
    %8 = sbr.rel target = $region3
  $region8: #{_lambda_.15} parent=0 // loop_exit
    _

</llo_original>
